<compile_context>
chip_gen: v7x
topology: tpu7x:2x2x1
jax: 0.10.0
libtpu: 0.0.40
codegen_flags: <defaults>
</compile_context>

<pallas_src>
import functools

import jax
import jax.numpy as jnp
from jax.experimental import pallas as pl
from jax.experimental.pallas import tpu as pltpu


def deepfm_kernel(ids_ref, expand_ref, table_ref, b1_ref, w2t_ref, b2_ref,
                  w3_ref, bias_ref, out_ref):
    """Fused DeepFM forward for one batch tile (transposed / feature-major layout).

    ids_ref    : (F+1, TB) f32   rows 0..F-1 = feature ids, row F = const 1.0
    expand_ref : (F*V, F+1) f32  expand[f*V+v, f] = 1, expand[c, F] = -(c % V)
    table_ref  : (H1+E+1, F*V)   pre-folded [emb@W1_f | emb | lin-0.5*||emb||^2]
    b1_ref     : (H1, 1) f32     w2t_ref (H2, H1)   b2_ref (H2, 1) f32
    w3_ref     : (H2, 1) f32     bias_ref (1, 1) f32 SMEM scalar = lin_b + b3
    out_ref    : (1, TB) f32     lane-dense output row
    """
    C, _ = table_ref.shape
    H1 = b1_ref.shape[0]
    E = C - H1 - 1
    dt = table_ref.dtype

    # Block-diagonal multi-hot, built with ONE MXU matmul + ONE compare + ONE cast:
    #   target[c, b] = ids[b, c // V] - (c % V)   (exact small integers)
    target = jnp.dot(expand_ref[...], ids_ref[...],
                     preferred_element_type=jnp.float32)          # (F*V, TB)
    onehot = (target == 0.0).astype(dt)                           # (F*V, TB)

    # One fused matmul: embedding sum, FM sum-of-squares, linear term, mlp_in @ W1.
    g = jnp.dot(table_ref[...], onehot,
                preferred_element_type=jnp.float32)               # (C, TB)
    h1_pre = g[:H1, :]                 # mlp_in @ W1                  (H1, TB)
    sum_v = g[H1:H1 + E, :]            # sum_f v_f                    (E,  TB)
    extra = g[H1 + E:, :]              # lin_sum - 0.5*sum_of_square  (1,  TB)

    # FM second-order + first-order terms (scalar bias added at the end).
    fm_lin = 0.5 * jnp.sum(sum_v * sum_v, axis=0, keepdims=True) + extra  # (1, TB)

    # MLP (eval mode: dropout identity; bn/ln disabled).
    h = jnp.maximum(h1_pre + b1_ref[...], 0.0)                     # (H1, TB)
    h = jnp.dot(w2t_ref[...], h.astype(w2t_ref.dtype),
                preferred_element_type=jnp.float32) + b2_ref[...]  # (H2, TB)
    h = jnp.maximum(h, 0.0)
    mlp = jnp.sum(h * w3_ref[...], axis=0, keepdims=True)          # (1, TB)

    out_ref[...] = fm_lin + mlp + bias_ref[0, 0]


def prepare_params(params, compute_dtype=jnp.float32):
    """Fold the DeepFM weights into the fused tables (done once, off the hot path)."""
    emb_w = params["emb_w"].astype(jnp.float32)          # (V, E)
    lin_w = params["lin_w"].astype(jnp.float32)          # (V, 1)
    w1 = params["w1"].astype(jnp.float32)                # (F*E, H1)
    V, E = emb_w.shape
    FE, H1 = w1.shape
    F = FE // E
    H2 = params["w2"].shape[1]

    # Row order [W1-proj | emb | extra] so the in-kernel sublane slices start at
    # aligned offsets (0, H1, H1+E).
    w1_r = w1.reshape(F, E, H1)
    proj = jnp.einsum("ve,feh->hfv", emb_w, w1_r).reshape(H1, F * V)   # (H1, F*V)
    emb_rows = jnp.tile(emb_w.T, (1, F))                               # (E,  F*V)
    extra = lin_w[:, 0] - 0.5 * jnp.sum(emb_w * emb_w, axis=1)         # (V,)
    extra_row = jnp.tile(extra[None, :], (1, F))                       # (1,  F*V)
    table_t = jnp.concatenate([proj, emb_rows, extra_row], axis=0)     # (H1+E+1, F*V)

    # Expansion matrix for the single-compare one-hot:
    #   target[c, b] = ids[b, c // V] * 1 + 1 * (-(c % V))
    col = jnp.arange(F * V)
    expand_t = jnp.zeros((F * V, F + 1), jnp.float32)
    expand_t = expand_t.at[col, col // V].set(1.0)
    expand_t = expand_t.at[:, F].set(-(col % V).astype(jnp.float32))

    return {
        "expand_T": expand_t,                                           # (F*V, F+1) f32
        "table_T": table_t.astype(compute_dtype),                       # (C, F*V)
        "b1_T": params["b1"].astype(jnp.float32).reshape(H1, 1),        # (H1, 1)
        "w2_T": params["w2"].T.astype(compute_dtype),                   # (H2, H1)
        "b2_T": params["b2"].astype(jnp.float32).reshape(H2, 1),        # (H2, 1)
        "w3": params["w3"].astype(jnp.float32),                         # (H2, 1)
        "bias": (params["lin_b"] + params["b3"]).astype(jnp.float32),   # (1, 1)
    }


@functools.partial(jax.jit, static_argnames=("block_b",))
def deepfm_forward(feature_id, prep, *, block_b=512):
    B, F = feature_id.shape
    C, FV = prep["table_T"].shape
    H1 = prep["b1_T"].shape[0]
    H2 = prep["w2_T"].shape[0]

    # Batch tile: multiple of 128 lanes, as large as useful (amortizes the
    # ~0.35us per-grid-step overhead and fills the MXU N dimension).
    block_b = max(128, (block_b // 128) * 128)
    TB = min(block_b, pl.cdiv(B, 128) * 128)
    Bp = pl.cdiv(B, TB) * TB

    ids = feature_id
    if Bp != B:
        ids = jnp.pad(feature_id, ((0, Bp - B), (0, 0)))
    # (F+1, Bp): feature ids (as f32) plus a constant-ones row that folds the
    # "-(c % V)" compare target into the expansion matmul.
    ids_aug_t = jnp.concatenate(
        [ids.astype(jnp.float32), jnp.ones((Bp, 1), jnp.float32)], axis=1).T

    grid = (Bp // TB,)
    out = pl.pallas_call(
        deepfm_kernel,
        out_shape=jax.ShapeDtypeStruct((1, Bp), jnp.float32),
        grid=grid,
        in_specs=[
            pl.BlockSpec((F + 1, TB), lambda i: (0, i)),           # ids tile (pipelined)
            pl.BlockSpec((FV, F + 1), lambda i: (0, 0)),           # expansion matrix
            pl.BlockSpec((C, FV), lambda i: (0, 0)),               # fused table, resident
            pl.BlockSpec((H1, 1), lambda i: (0, 0)),               # b1
            pl.BlockSpec((H2, H1), lambda i: (0, 0)),              # W2^T
            pl.BlockSpec((H2, 1), lambda i: (0, 0)),               # b2
            pl.BlockSpec((H2, 1), lambda i: (0, 0)),               # w3
            pl.BlockSpec((1, 1), lambda i: (0, 0),
                         memory_space=pltpu.MemorySpace.SMEM),     # lin_b + b3 scalar
        ],
        out_specs=pl.BlockSpec((1, TB), lambda i: (0, i)),         # lane-dense row
        compiler_params=pltpu.CompilerParams(
            dimension_semantics=("parallel",),
            vmem_limit_bytes=32 * 1024 * 1024,
        ),
    )(ids_aug_t, prep["expand_T"], prep["table_T"], prep["b1_T"],
      prep["w2_T"], prep["b2_T"], prep["w3"], prep["bias"])
    return out[0, :B]   # matches PyTorch forward return shape (batch,)


def deepfm_reference(feature_id, params):
    """Pure-JAX reference of the PyTorch forward (eval mode)."""
    emb = params["emb_w"][feature_id]                        # (B, F, E)
    lin = params["lin_w"][feature_id][..., 0]                # (B, F)
    linear_score = lin.sum(axis=1) + params["lin_b"][0, 0]   # (B,)

    square_of_sum = emb.sum(axis=1) ** 2                     # (B, E)
    sum_of_square = (emb ** 2).sum(axis=1)                   # (B, E)
    fm_score = 0.5 * (square_of_sum - sum_of_square).sum(axis=1)

    B = feature_id.shape[0]
    x = emb.reshape(B, -1)
    h = jax.nn.relu(x @ params["w1"] + params["b1"][0])
    h = jax.nn.relu(h @ params["w2"] + params["b2"][0])
    mlp_score = (h @ params["w3"] + params["b3"][0])[:, 0]

    return linear_score + fm_score + mlp_score


if __name__ == "__main__":
    # net_desc: input_dim=64, input_dim4lookup=8, embed_dim=16,
    #           hidden_dims=[32, 32], dropout_prob=0.0,
    #           batch_norm=False, layer_norm=False
    B, F, V, E = 1024, 8, 64, 16     # B=1024 with TB=512 -> 2 grid steps (v7x megacore)
    H1, H2 = 32, 32

    key = jax.random.PRNGKey(0)
    ks = jax.random.split(key, 10)
    feature_id = jax.random.randint(ks[0], (B, F), 0, V, dtype=jnp.int32)

    params = {
        "lin_w": 0.1 * jax.random.normal(ks[1], (V, 1), jnp.float32),
        "lin_b": 0.1 * jax.random.normal(ks[2], (1, 1), jnp.float32),
        "emb_w": 0.1 * jax.random.normal(ks[3], (V, E), jnp.float32),
        "w1": 0.1 * jax.random.normal(ks[4], (F * E, H1), jnp.float32),
        "b1": 0.1 * jax.random.normal(ks[5], (1, H1), jnp.float32),
        "w2": 0.1 * jax.random.normal(ks[6], (H1, H2), jnp.float32),
        "b2": 0.1 * jax.random.normal(ks[7], (1, H2), jnp.float32),
        "w3": 0.1 * jax.random.normal(ks[8], (H2, 1), jnp.float32),
        "b3": 0.1 * jax.random.normal(ks[9], (1, 1), jnp.float32),
    }

    ref = deepfm_reference(feature_id, params)

    # f32 matmul operands: matches the reference to float32 tolerance.
    prep32 = prepare_params(params, compute_dtype=jnp.float32)
    out32 = jax.block_until_ready(deepfm_forward(feature_id, prep32))
    assert out32.shape == (B,), out32.shape
    assert jnp.allclose(out32, ref, atol=1e-5, rtol=1e-5), (out32, ref)

    # bf16 MXU operands (f32 accumulation): looser tolerance.
    prep16 = prepare_params(params, compute_dtype=jnp.bfloat16)
    out16 = jax.block_until_ready(deepfm_forward(feature_id, prep16))
    assert jnp.allclose(out16, ref, atol=5e-2, rtol=5e-2), (out16, ref)

    print("KERNEL_OK")
</pallas_src>

<mosaic_0001>
module attributes {stable_mosaic.version = 11 : i64} {
  func.func @deepfm_kernel(%arg0: i32, %arg1: memref<9x512xf32, #tpu.memory_space<vmem>>, %arg2: memref<512x9xf32, #tpu.memory_space<vmem>>, %arg3: memref<49x512xf32, #tpu.memory_space<vmem>>, %arg4: memref<32x1xf32, #tpu.memory_space<vmem>>, %arg5: memref<32x32xf32, #tpu.memory_space<vmem>>, %arg6: memref<32x1xf32, #tpu.memory_space<vmem>>, %arg7: memref<32x1xf32, #tpu.memory_space<vmem>>, %arg8: memref<1x1xf32, #tpu.memory_space<smem>>, %arg9: memref<1x512xf32, #tpu.memory_space<vmem>>) attributes {dimension_semantics = [#tpu.dimension_semantics<parallel>], iteration_bounds = array<i64: 2>, scalar_prefetch = 0 : i64, scratch_operands = 0 : i64, tpu.core_type = #tpu.core_type<tc>, window_params = [{transform_indices = @transform_0, window_bounds = array<i64: 9, 512>}, {pipeline_mode = #tpu.pipeline_mode<synchronous>, transform_indices = @transform_1, window_bounds = array<i64: 512, 9>}, {pipeline_mode = #tpu.pipeline_mode<synchronous>, transform_indices = @transform_2, window_bounds = array<i64: 49, 512>}, {pipeline_mode = #tpu.pipeline_mode<synchronous>, transform_indices = @transform_3, window_bounds = array<i64: 32, 1>}, {pipeline_mode = #tpu.pipeline_mode<synchronous>, transform_indices = @transform_4, window_bounds = array<i64: 32, 32>}, {pipeline_mode = #tpu.pipeline_mode<synchronous>, transform_indices = @transform_5, window_bounds = array<i64: 32, 1>}, {pipeline_mode = #tpu.pipeline_mode<synchronous>, transform_indices = @transform_6, window_bounds = array<i64: 32, 1>}, {transform_indices = @transform_7, window_bounds = array<i64: 1, 1>}, {transform_indices = @transform_8, window_bounds = array<i64: 1, 512>}]} {
    %c0 = arith.constant 0 : index
    %c0_0 = arith.constant 0 : index
    %0 = vector.load %arg2[%c0, %c0_0] : memref<512x9xf32, #tpu.memory_space<vmem>>, vector<512x9xf32>
    %c0_1 = arith.constant 0 : index
    %c0_2 = arith.constant 0 : index
    %1 = vector.load %arg1[%c0_1, %c0_2] : memref<9x512xf32, #tpu.memory_space<vmem>>, vector<9x512xf32>
    %cst = arith.constant dense<0.000000e+00> : vector<512x512xf32>
    %2 = tpu.matmul %0, %1, %cst {dimension_numbers = #tpu.dot_dimension_numbers<[1], [0], [0], [1], [0, 0, 1, 1], [], []>} : vector<512x9xf32>, vector<9x512xf32>, vector<512x512xf32> -> vector<512x512xf32>
    %cst_3 = arith.constant 0.000000e+00 : f32
    %3 = vector.broadcast %cst_3 : f32 to vector<512x512xf32>
    %4 = arith.cmpf oeq, %2, %3 : vector<512x512xf32>
    %5 = arith.extui %4 : vector<512x512xi1> to vector<512x512xi32>
    %6 = arith.sitofp %5 : vector<512x512xi32> to vector<512x512xf32>
    %c0_4 = arith.constant 0 : index
    %c0_5 = arith.constant 0 : index
    %7 = vector.load %arg3[%c0_4, %c0_5] : memref<49x512xf32, #tpu.memory_space<vmem>>, vector<49x512xf32>
    %cst_6 = arith.constant dense<0.000000e+00> : vector<49x512xf32>
    %8 = tpu.matmul %7, %6, %cst_6 {dimension_numbers = #tpu.dot_dimension_numbers<[1], [0], [0], [1], [0, 0, 1, 1], [], []>} : vector<49x512xf32>, vector<512x512xf32>, vector<49x512xf32> -> vector<49x512xf32>
    %9 = vector.extract_strided_slice %8 {offsets = [0, 0], sizes = [32, 512], strides = [1, 1]} : vector<49x512xf32> to vector<32x512xf32>
    %10 = vector.extract_strided_slice %8 {offsets = [32, 0], sizes = [16, 512], strides = [1, 1]} : vector<49x512xf32> to vector<16x512xf32>
    %11 = vector.extract_strided_slice %8 {offsets = [48, 0], sizes = [1, 512], strides = [1, 1]} : vector<49x512xf32> to vector<1x512xf32>
    %12 = arith.mulf %10, %10 : vector<16x512xf32>
    %cst_7 = arith.constant dense<0.000000e+00> : vector<512xf32>
    %13 = vector.multi_reduction <add>, %12, %cst_7 [0] : vector<16x512xf32> to vector<512xf32>
    %14 = vector.shape_cast %13 : vector<512xf32> to vector<1x512xf32>
    %cst_8 = arith.constant 5.000000e-01 : f32
    %15 = vector.broadcast %cst_8 : f32 to vector<1x512xf32>
    %16 = arith.mulf %15, %14 : vector<1x512xf32>
    %17 = arith.addf %16, %11 : vector<1x512xf32>
    %c0_9 = arith.constant 0 : index
    %c0_10 = arith.constant 0 : index
    %18 = vector.load %arg4[%c0_9, %c0_10] : memref<32x1xf32, #tpu.memory_space<vmem>>, vector<32x1xf32>
    %19 = vector.broadcast %18 : vector<32x1xf32> to vector<32x512xf32>
    %20 = arith.addf %9, %19 : vector<32x512xf32>
    %cst_11 = arith.constant 0.000000e+00 : f32
    %21 = vector.broadcast %cst_11 : f32 to vector<32x512xf32>
    %22 = arith.maximumf %20, %21 : vector<32x512xf32>
    %c0_12 = arith.constant 0 : index
    %c0_13 = arith.constant 0 : index
    %23 = vector.load %arg5[%c0_12, %c0_13] : memref<32x32xf32, #tpu.memory_space<vmem>>, vector<32x32xf32>
    %cst_14 = arith.constant dense<0.000000e+00> : vector<32x512xf32>
    %24 = tpu.matmul %23, %22, %cst_14 {dimension_numbers = #tpu.dot_dimension_numbers<[1], [0], [0], [1], [0, 0, 1, 1], [], []>} : vector<32x32xf32>, vector<32x512xf32>, vector<32x512xf32> -> vector<32x512xf32>
    %c0_15 = arith.constant 0 : index
    %c0_16 = arith.constant 0 : index
    %25 = vector.load %arg6[%c0_15, %c0_16] : memref<32x1xf32, #tpu.memory_space<vmem>>, vector<32x1xf32>
    %26 = vector.broadcast %25 : vector<32x1xf32> to vector<32x512xf32>
    %27 = arith.addf %24, %26 : vector<32x512xf32>
    %cst_17 = arith.constant 0.000000e+00 : f32
    %28 = vector.broadcast %cst_17 : f32 to vector<32x512xf32>
    %29 = arith.maximumf %27, %28 : vector<32x512xf32>
    %c0_18 = arith.constant 0 : index
    %c0_19 = arith.constant 0 : index
    %30 = vector.load %arg7[%c0_18, %c0_19] : memref<32x1xf32, #tpu.memory_space<vmem>>, vector<32x1xf32>
    %31 = vector.broadcast %30 : vector<32x1xf32> to vector<32x512xf32>
    %32 = arith.mulf %29, %31 : vector<32x512xf32>
    %cst_20 = arith.constant dense<0.000000e+00> : vector<512xf32>
    %33 = vector.multi_reduction <add>, %32, %cst_20 [0] : vector<32x512xf32> to vector<512xf32>
    %34 = vector.shape_cast %33 : vector<512xf32> to vector<1x512xf32>
    %35 = arith.addf %17, %34 : vector<1x512xf32>
    %c0_21 = arith.constant 0 : index
    %c0_22 = arith.constant 0 : index
    %36 = memref.load %arg8[%c0_21, %c0_22] : memref<1x1xf32, #tpu.memory_space<smem>>
    %37 = vector.broadcast %36 : f32 to vector<1x512xf32>
    %38 = arith.addf %35, %37 : vector<1x512xf32>
    %c0_23 = arith.constant 0 : index
    %c0_24 = arith.constant 0 : index
    %39 = vector.load %arg9[%c0_23, %c0_24] : memref<1x512xf32, #tpu.memory_space<vmem>>, vector<1x512xf32>
    tpu.vector_store %arg9[%c0_23, %c0_24], %38 {strides = array<i32>} : memref<1x512xf32, #tpu.memory_space<vmem>>, vector<1x512xf32>,
    return
  }
  func.func @transform_0(%arg0: i32) -> (i32, i32) {
    %c0_i32 = arith.constant 0 : i32
    %c0_i32_0 = arith.constant 0 : i32
    return %c0_i32, %arg0 : i32, i32
  }
  func.func @transform_1(%arg0: i32) -> (i32, i32) {
    %c0_i32 = arith.constant 0 : i32
    %c0_i32_0 = arith.constant 0 : i32
    %c0_i32_1 = arith.constant 0 : i32
    return %c0_i32, %c0_i32_0 : i32, i32
  }
  func.func @transform_2(%arg0: i32) -> (i32, i32) {
    %c0_i32 = arith.constant 0 : i32
    %c0_i32_0 = arith.constant 0 : i32
    %c0_i32_1 = arith.constant 0 : i32
    return %c0_i32, %c0_i32_0 : i32, i32
  }
  func.func @transform_3(%arg0: i32) -> (i32, i32) {
    %c0_i32 = arith.constant 0 : i32
    %c0_i32_0 = arith.constant 0 : i32
    %c0_i32_1 = arith.constant 0 : i32
    return %c0_i32, %c0_i32_0 : i32, i32
  }
  func.func @transform_4(%arg0: i32) -> (i32, i32) {
    %c0_i32 = arith.constant 0 : i32
    %c0_i32_0 = arith.constant 0 : i32
    %c0_i32_1 = arith.constant 0 : i32
    return %c0_i32, %c0_i32_0 : i32, i32
  }
  func.func @transform_5(%arg0: i32) -> (i32, i32) {
    %c0_i32 = arith.constant 0 : i32
    %c0_i32_0 = arith.constant 0 : i32
    %c0_i32_1 = arith.constant 0 : i32
    return %c0_i32, %c0_i32_0 : i32, i32
  }
  func.func @transform_6(%arg0: i32) -> (i32, i32) {
    %c0_i32 = arith.constant 0 : i32
    %c0_i32_0 = arith.constant 0 : i32
    %c0_i32_1 = arith.constant 0 : i32
    return %c0_i32, %c0_i32_0 : i32, i32
  }
  func.func @transform_7(%arg0: i32) -> (i32, i32) {
    %c0_i32 = arith.constant 0 : i32
    %c0_i32_0 = arith.constant 0 : i32
    %c0_i32_1 = arith.constant 0 : i32
    return %c0_i32, %c0_i32_0 : i32, i32
  }
  func.func @transform_8(%arg0: i32) -> (i32, i32) {
    %c0_i32 = arith.constant 0 : i32
    %c0_i32_0 = arith.constant 0 : i32
    return %c0_i32, %arg0 : i32, i32
  }
}

</mosaic_0001>

<llo_original>
// kernel: deepfm_forward.1
$region0: #{deepfm_forward.1}
  #allocation0 [shape = 'u32[]', space=smem, size = 0x4, offset = 0x4, fixed_abs, tag = 'smem constant byte address 0x4 - core index']
  #allocation1 [shape = 'u32[144,128]{1,0:T(1,128)}', space=vmem, size = 0x12000, scoped, tag = 'internal scratch']
  #allocation2 [shape = 'f32[1,1]{1,0:T(1,128)S(6)}', space=smem, size = 0x200, scoped, tag = 'scoped memory for deepfm_forward.1']
  %s0 = inlined_call_operand.vmem [shape: f32[9,1024], index: 0, kind: input, shape index: {}]
  %s1 = inlined_call_operand.vmem [shape: f32[512,9], index: 1, kind: input, shape index: {}]
  %s2 = inlined_call_operand.vmem [shape: f32[49,512], index: 2, kind: input, shape index: {}]
  %s3 = inlined_call_operand.vmem [shape: f32[32,1], index: 3, kind: input, shape index: {}]
  %s4 = inlined_call_operand.vmem [shape: f32[32,32], index: 4, kind: input, shape index: {}]
  %s5 = inlined_call_operand.vmem [shape: f32[32,1], index: 5, kind: input, shape index: {}]
  %s6 = inlined_call_operand.vmem [shape: f32[32,1], index: 6, kind: input, shape index: {}]
  %s7 = inlined_call_operand.<no memory space> [shape: f32[1,1], index: 7, kind: input, shape index: {}]
  %s8 = inlined_call_operand.hbm [shape: f32[1,1024], index: 8, kind: output, shape index: {}]
  %s9 = sld [smem:[#allocation0]]
  $region88: #{deepfm_forward.1} parent=0
    _
  %s11 = ssub.s32 1, %s9
  %s12 = scalar_select 0, %s11, %s9
  %13 = sst [smem:[#allocation2]] %s7
  $region1: #{deepfm_forward.1} parent=0
    #allocation3 [shape = 'u8[65536]{0}', space=vmem, size = 0x10000, scoped, tag = 'input window, operand 0']
    #allocation4 [shape = 'u8[4096]{0}', space=vmem, size = 0x1000, scoped, tag = 'output window, operand 0']
    #allocation5 [shape = 's32[2]{0}', space=sflag, size = 0x8, scoped, tag = 'scoped memory for deepfm_forward.1']
    %14 = vsyncpa [#allocation5], 0
    %s15 = scalar_lea.sflag [#allocation5], 1
    %16 = vsyncpa %s15, 0
    loop: start=0, step=1, limit=4
    $region2: #{deepfm_forward.1} parent=1 // loop_pre_header
      _
    $region3: #{deepfm_forward.1} parent=1 // loop_header
      %s18 = sphi 0, %s22
      %p19 = scmp.ge.s32.totalorder %s18, 4
      %s28 = sphi 0, %s30
      %s31 = sphi 0, %s28
      %s32 = sphi 0, %s31
      %s48 = sphi 0, %s32
      %s52 = sphi 0, %s52
      %s54 = sphi 0, %s52
      %s55 = sphi 0, %s54
      %s69 = sphi 0, %s55
      %s73 = sphi 0, %s73
      %s75 = sphi 0, %s73
      %s76 = sphi 0, %s75
      %s90 = sphi 0, %s76
      %s94 = sphi 0, %s94
      %s96 = sphi 0, %s94
      %s97 = sphi 0, %s96
      %s111 = sphi 0, %s97
      %s115 = sphi 0, %s115
      %s117 = sphi 0, %s115
      %s118 = sphi 0, %s117
      %s132 = sphi 0, %s118
      %s136 = sphi 0, %s136
      %s138 = sphi 0, %s136
      %s139 = sphi 0, %s138
      %s153 = sphi 0, %s139
      %s157 = sphi 0, %s157
      %s159 = sphi 0, %s157
      %s160 = sphi 0, %s159
      %s174 = sphi 0, %s160
      %s178 = sphi 0, %s178
      %s180 = sphi 0, %s178
      %s181 = sphi 0, %s180
      %s195 = sphi 0, %s181
      %s201 = sphi 0, %s203
      %s204 = sphi 0, %s201
      %s205 = sphi 0, %s204
      %s221 = sphi 0, %s205
    $region4: #{deepfm_forward.1} parent=1 // loop_header_branch
      %21 = sbr.rel (%p19) target = $region8
    $region5: #{deepfm_forward.1} parent=1 // loop_body
      %s23 = ssub.s32 %s18, 1
      %s24 = ssub.s32 %s18, 2
      %s25 = sadd.s32 %s18, 1
      %s26 = ssub.s32 %s18, %s25
      %p27 = scmp.eq.s32.totalorder %s26, 0
      %s29 = sadd.s32 %s28, 1
      %s30 = scalar_select %p27, %s28, %s29
      %p33 = pneg %p27
      %p34 = scmp.eq.s32.totalorder %s18, 1
      %p35 = por %p33, %p34
      %p36 = scmp.ne.s32.totalorder %s28, %s31
      %p37 = scmp.eq.s32.totalorder %s18, 0
      %p38 = por %p36, %p37
      %p39 = scmp.ne.s32.totalorder %s28, %s31
      %p40 = scmp.eq.s32.totalorder %s23, 1
      %p41 = por %p39, %p40
      %p42 = scmp.ne.s32.totalorder %s31, %s32
      %p43 = scmp.eq.s32.totalorder %s23, 0
      %p44 = por %p42, %p43
      %p45 = scmp.ne.s32.totalorder %s31, %s32
      %p46 = scmp.eq.s32.totalorder %s24, 1
      %p47 = por %p45, %p46
      %p49 = scmp.ne.s32.totalorder %s32, %s48
      %p50 = scmp.eq.s32.totalorder %s24, 0
      %p51 = por %p49, %p50
      %s53 = sadd.s32 %s52, 1
      %p56 = scmp.eq.s32.totalorder %s18, 1
      %p57 = scmp.ne.s32.totalorder %s52, %s54
      %p58 = scmp.eq.s32.totalorder %s18, 0
      %p59 = por %p57, %p58
      %p60 = scmp.ne.s32.totalorder %s52, %s54
      %p61 = scmp.eq.s32.totalorder %s23, 1
      %p62 = por %p60, %p61
      %p63 = scmp.ne.s32.totalorder %s54, %s55
      %p64 = scmp.eq.s32.totalorder %s23, 0
      %p65 = por %p63, %p64
      %p66 = scmp.ne.s32.totalorder %s54, %s55
      %p67 = scmp.eq.s32.totalorder %s24, 1
      %p68 = por %p66, %p67
      %p70 = scmp.ne.s32.totalorder %s55, %s69
      %p71 = scmp.eq.s32.totalorder %s24, 0
      %p72 = por %p70, %p71
      %s74 = sadd.s32 %s73, 1
      %p77 = scmp.eq.s32.totalorder %s18, 1
      %p78 = scmp.ne.s32.totalorder %s73, %s75
      %p79 = scmp.eq.s32.totalorder %s18, 0
      %p80 = por %p78, %p79
      %p81 = scmp.ne.s32.totalorder %s73, %s75
      %p82 = scmp.eq.s32.totalorder %s23, 1
      %p83 = por %p81, %p82
      %p84 = scmp.ne.s32.totalorder %s75, %s76
      %p85 = scmp.eq.s32.totalorder %s23, 0
      %p86 = por %p84, %p85
      %p87 = scmp.ne.s32.totalorder %s75, %s76
      %p88 = scmp.eq.s32.totalorder %s24, 1
      %p89 = por %p87, %p88
      %p91 = scmp.ne.s32.totalorder %s76, %s90
      %p92 = scmp.eq.s32.totalorder %s24, 0
      %p93 = por %p91, %p92
      %s95 = sadd.s32 %s94, 1
      %p98 = scmp.eq.s32.totalorder %s18, 1
      %p99 = scmp.ne.s32.totalorder %s94, %s96
      %p100 = scmp.eq.s32.totalorder %s18, 0
      %p101 = por %p99, %p100
      %p102 = scmp.ne.s32.totalorder %s94, %s96
      %p103 = scmp.eq.s32.totalorder %s23, 1
      %p104 = por %p102, %p103
      %p105 = scmp.ne.s32.totalorder %s96, %s97
      %p106 = scmp.eq.s32.totalorder %s23, 0
      %p107 = por %p105, %p106
      %p108 = scmp.ne.s32.totalorder %s96, %s97
      %p109 = scmp.eq.s32.totalorder %s24, 1
      %p110 = por %p108, %p109
      %p112 = scmp.ne.s32.totalorder %s97, %s111
      %p113 = scmp.eq.s32.totalorder %s24, 0
      %p114 = por %p112, %p113
      %s116 = sadd.s32 %s115, 1
      %p119 = scmp.eq.s32.totalorder %s18, 1
      %p120 = scmp.ne.s32.totalorder %s115, %s117
      %p121 = scmp.eq.s32.totalorder %s18, 0
      %p122 = por %p120, %p121
      %p123 = scmp.ne.s32.totalorder %s115, %s117
      %p124 = scmp.eq.s32.totalorder %s23, 1
      %p125 = por %p123, %p124
      %p126 = scmp.ne.s32.totalorder %s117, %s118
      %p127 = scmp.eq.s32.totalorder %s23, 0
      %p128 = por %p126, %p127
      %p129 = scmp.ne.s32.totalorder %s117, %s118
      %p130 = scmp.eq.s32.totalorder %s24, 1
      %p131 = por %p129, %p130
      %p133 = scmp.ne.s32.totalorder %s118, %s132
      %p134 = scmp.eq.s32.totalorder %s24, 0
      %p135 = por %p133, %p134
      %s137 = sadd.s32 %s136, 1
      %p140 = scmp.eq.s32.totalorder %s18, 1
      %p141 = scmp.ne.s32.totalorder %s136, %s138
      %p142 = scmp.eq.s32.totalorder %s18, 0
      %p143 = por %p141, %p142
      %p144 = scmp.ne.s32.totalorder %s136, %s138
      %p145 = scmp.eq.s32.totalorder %s23, 1
      %p146 = por %p144, %p145
      %p147 = scmp.ne.s32.totalorder %s138, %s139
      %p148 = scmp.eq.s32.totalorder %s23, 0
      %p149 = por %p147, %p148
      %p150 = scmp.ne.s32.totalorder %s138, %s139
      %p151 = scmp.eq.s32.totalorder %s24, 1
      %p152 = por %p150, %p151
      %p154 = scmp.ne.s32.totalorder %s139, %s153
      %p155 = scmp.eq.s32.totalorder %s24, 0
      %p156 = por %p154, %p155
      %s158 = sadd.s32 %s157, 1
      %p161 = scmp.eq.s32.totalorder %s18, 1
      %p162 = scmp.ne.s32.totalorder %s157, %s159
      %p163 = scmp.eq.s32.totalorder %s18, 0
      %p164 = por %p162, %p163
      %p165 = scmp.ne.s32.totalorder %s157, %s159
      %p166 = scmp.eq.s32.totalorder %s23, 1
      %p167 = por %p165, %p166
      %p168 = scmp.ne.s32.totalorder %s159, %s160
      %p169 = scmp.eq.s32.totalorder %s23, 0
      %p170 = por %p168, %p169
      %p171 = scmp.ne.s32.totalorder %s159, %s160
      %p172 = scmp.eq.s32.totalorder %s24, 1
      %p173 = por %p171, %p172
      %p175 = scmp.ne.s32.totalorder %s160, %s174
      %p176 = scmp.eq.s32.totalorder %s24, 0
      %p177 = por %p175, %p176
      %s179 = sadd.s32 %s178, 1
      %p182 = scmp.eq.s32.totalorder %s18, 1
      %p183 = scmp.ne.s32.totalorder %s178, %s180
      %p184 = scmp.eq.s32.totalorder %s18, 0
      %p185 = por %p183, %p184
      %p186 = scmp.ne.s32.totalorder %s178, %s180
      %p187 = scmp.eq.s32.totalorder %s23, 1
      %p188 = por %p186, %p187
      %p189 = scmp.ne.s32.totalorder %s180, %s181
      %p190 = scmp.eq.s32.totalorder %s23, 0
      %p191 = por %p189, %p190
      %p192 = scmp.ne.s32.totalorder %s180, %s181
      %p193 = scmp.eq.s32.totalorder %s24, 1
      %p194 = por %p192, %p193
      %p196 = scmp.ne.s32.totalorder %s181, %s195
      %p197 = scmp.eq.s32.totalorder %s24, 0
      %p198 = por %p196, %p197
      %s199 = ssub.s32 %s18, %s25
      %p200 = scmp.eq.s32.totalorder %s199, 0
      %s202 = sadd.s32 %s201, 1
      %s203 = scalar_select %p200, %s201, %s202
      %p206 = pneg %p200
      %p207 = scmp.eq.s32.totalorder %s18, 1
      %p208 = por %p206, %p207
      %p209 = scmp.ne.s32.totalorder %s201, %s204
      %p210 = scmp.eq.s32.totalorder %s18, 0
      %p211 = por %p209, %p210
      %p212 = scmp.ne.s32.totalorder %s201, %s204
      %p213 = scmp.eq.s32.totalorder %s23, 1
      %p214 = por %p212, %p213
      %p215 = scmp.ne.s32.totalorder %s204, %s205
      %p216 = scmp.eq.s32.totalorder %s23, 0
      %p217 = por %p215, %p216
      %p218 = scmp.ne.s32.totalorder %s204, %s205
      %p219 = scmp.eq.s32.totalorder %s24, 1
      %p220 = por %p218, %p219
      %p222 = scmp.ne.s32.totalorder %s205, %s221
      %p223 = scmp.eq.s32.totalorder %s24, 0
      %p224 = por %p222, %p223
      %p225 = scmp.le.s32.totalorder 1, %s18
      %p226 = scmp.lt.s32.totalorder %s18, 3
      %p227 = pnand %p225, %p226
      %p228 = pneg %p227
      // Predicated region
      $region9: #{deepfm_forward.1} parent=5 // pred_check
        _
      $region10: #{deepfm_forward.1} parent=5 // pred_check_branch
        %230 = sbr.rel (%p227) target = $region12
      $region11: #{deepfm_forward.1} parent=5 // pred_region
        %s231 = ssub.s32 %s18, 1
        // Predicated region
        $region13: #{deepfm_forward.1} parent=11 // pred_check
          %p232 = pneg %p65
        $region14: #{deepfm_forward.1} parent=11 // pred_check_branch
          %234 = sbr.rel (%p232) target = $region16
        $region15: #{deepfm_forward.1} parent=11 // pred_region
          _
        $region16: #{deepfm_forward.1} parent=11 // pred_fallthru
          _
        // Predicated region
        $region17: #{deepfm_forward.1} parent=11 // pred_check
          %p235 = pneg %p86
        $region18: #{deepfm_forward.1} parent=11 // pred_check_branch
          %237 = sbr.rel (%p235) target = $region20
        $region19: #{deepfm_forward.1} parent=11 // pred_region
          _
        $region20: #{deepfm_forward.1} parent=11 // pred_fallthru
          _
        // Predicated region
        $region21: #{deepfm_forward.1} parent=11 // pred_check
          %p238 = pneg %p107
        $region22: #{deepfm_forward.1} parent=11 // pred_check_branch
          %240 = sbr.rel (%p238) target = $region24
        $region23: #{deepfm_forward.1} parent=11 // pred_region
          _
        $region24: #{deepfm_forward.1} parent=11 // pred_fallthru
          _
        // Predicated region
        $region25: #{deepfm_forward.1} parent=11 // pred_check
          %p241 = pneg %p128
        $region26: #{deepfm_forward.1} parent=11 // pred_check_branch
          %243 = sbr.rel (%p241) target = $region28
        $region27: #{deepfm_forward.1} parent=11 // pred_region
          _
        $region28: #{deepfm_forward.1} parent=11 // pred_fallthru
          _
        // Predicated region
        $region29: #{deepfm_forward.1} parent=11 // pred_check
          %p244 = pneg %p149
        $region30: #{deepfm_forward.1} parent=11 // pred_check_branch
          %246 = sbr.rel (%p244) target = $region32
        $region31: #{deepfm_forward.1} parent=11 // pred_region
          _
        $region32: #{deepfm_forward.1} parent=11 // pred_fallthru
          _
        // Predicated region
        $region33: #{deepfm_forward.1} parent=11 // pred_check
          %p247 = pneg %p170
        $region34: #{deepfm_forward.1} parent=11 // pred_check_branch
          %249 = sbr.rel (%p247) target = $region36
        $region35: #{deepfm_forward.1} parent=11 // pred_region
          _
        $region36: #{deepfm_forward.1} parent=11 // pred_fallthru
          _
        // Predicated region
        $region37: #{deepfm_forward.1} parent=11 // pred_check
          %p250 = pneg %p191
        $region38: #{deepfm_forward.1} parent=11 // pred_check_branch
          %252 = sbr.rel (%p250) target = $region40
        $region39: #{deepfm_forward.1} parent=11 // pred_region
          _
        $region40: #{deepfm_forward.1} parent=11 // pred_fallthru
          _
      $region12: #{deepfm_forward.1} parent=5 // pred_fallthru
        _
      %p253 = scmp.lt.s32.totalorder %s18, 2
      // Predicated region
      $region41: #{deepfm_forward.1} parent=5 // pred_check
        %p254 = pneg %p253
      $region42: #{deepfm_forward.1} parent=5 // pred_check_branch
        %256 = sbr.rel (%p254) target = $region44
      $region43: #{deepfm_forward.1} parent=5 // pred_region
        // Predicated region
        $region45: #{deepfm_forward.1} parent=43 // pred_check
          %p257 = pneg %p38
        $region46: #{deepfm_forward.1} parent=43 // pred_check_branch
          %259 = sbr.rel (%p257) target = $region48
        $region47: #{deepfm_forward.1} parent=43 // pred_region
          %s260 = sand.u32 %s28, 1
          %s261 = sand.u32 %s28, 1
          %s262 = smul.addr %s261, 64
          %s263 = scalar_lea.vmem [#allocation3], %s262
          %s264 = smul.u32 4, %s18
          %s265 = smul.addr %s264, 8
          %s266 = scalar_lea.vmem %s0, %s265
          // Predicated region
          $region49: #{deepfm_forward.1} parent=47 // pred_check
            _
          $region50: #{deepfm_forward.1} parent=47 // pred_check_branch
            %268 = sbr.rel (0) target = $region52
          $region51: #{deepfm_forward.1} parent=47 // pred_region
            // Predicated region
            $region53: #{deepfm_forward.1} parent=51 // pred_check
              _
            $region54: #{deepfm_forward.1} parent=51 // pred_check_branch
              %270 = sbr.rel (0) target = $region56
            $region55: #{deepfm_forward.1} parent=51 // pred_region
              loop: start=0, step=1, limit=1
              $region57: #{deepfm_forward.1} parent=55 // loop_pre_header
                _
              $region58: #{deepfm_forward.1} parent=55 // loop_header
                %s272 = sphi 0, %s276
                %p273 = scmp.ge.s32.totalorder %s272, 1
                %s277 = sphi %s266, %s266
                %s278 = sphi %s263, %s263
              $region59: #{deepfm_forward.1} parent=55 // loop_header_branch
                %275 = sbr.rel (%p273) target = $region63
              $region60: #{deepfm_forward.1} parent=55 // loop_body
                %v279 = vld [vmem:[%s277] sm:$0xff]
                %280 = vst [vmem:[%s278] sm:$0xff] %v279
                %v281 = vld [vmem:[%s277 + $0x8] sm:$0xff]
                %282 = vst [vmem:[%s278 + $0x8] sm:$0xff] %v281
                %v283 = vld [vmem:[%s277 + $0x10] sm:$0xff]
                %284 = vst [vmem:[%s278 + $0x10] sm:$0xff] %v283
                %v285 = vld [vmem:[%s277 + $0x18] sm:$0xff]
                %286 = vst [vmem:[%s278 + $0x18] sm:$0xff] %v285
                %v287 = vld [vmem:[%s277 + $0x40] sm:$0xff]
                %288 = vst [vmem:[%s278 + $0x20] sm:$0xff] %v287
                %v289 = vld [vmem:[%s277 + $0x48] sm:$0xff]
                %290 = vst [vmem:[%s278 + $0x28] sm:$0xff] %v289
                %v291 = vld [vmem:[%s277 + $0x50] sm:$0xff]
                %292 = vst [vmem:[%s278 + $0x30] sm:$0xff] %v291
                %v293 = vld [vmem:[%s277 + $0x58] sm:$0xff]
                %294 = vst [vmem:[%s278 + $0x38] sm:$0xff] %v293
              $region61: #{deepfm_forward.1} parent=55 // loop_footer
                %s276 = sadd.s32 1, %s272
              $region62: #{deepfm_forward.1} parent=55 // loop_footer_branch
                %271 = sbr.rel target = $region58
              $region63: #{deepfm_forward.1} parent=55 // loop_exit
                _
            $region56: #{deepfm_forward.1} parent=51 // pred_fallthru
              _
            // Predicated region
            $region64: #{deepfm_forward.1} parent=51 // pred_check
              _
            $region65: #{deepfm_forward.1} parent=51 // pred_check_branch
              %296 = sbr.rel target = $region67
            $region66: #{deepfm_forward.1} parent=51 // pred_region
              _
            $region67: #{deepfm_forward.1} parent=51 // pred_fallthru
              _
          $region52: #{deepfm_forward.1} parent=47 // pred_fallthru
            _
          %297 = vnop
        $region48: #{deepfm_forward.1} parent=43 // pred_fallthru
          _
      $region44: #{deepfm_forward.1} parent=5 // pred_fallthru
        _
      %p298 = scmp.le.s32.totalorder 1, %s18
      %p299 = scmp.lt.s32.totalorder %s18, 3
      %p300 = pnand %p298, %p299
      %p301 = pneg %p300
      // Predicated region
      $region68: #{deepfm_forward.1} parent=5 // pred_check
        _
      $region69: #{deepfm_forward.1} parent=5 // pred_check_branch
        %303 = sbr.rel (%p300) target = $region71
      $region70: #{deepfm_forward.1} parent=5 // pred_region
        %s304 = ssub.s32 %s18, 1
        %s305 = sand.u32 %s31, 1
        %s306 = sand.u32 %s31, 1
        %s307 = smul.addr %s306, 64
        %s308 = scalar_lea.vmem [#allocation3], %s307
        // Predicated region
        $region72: #{deepfm_forward.1} parent=70 // pred_check
          %p309 = pneg %p44
        $region73: #{deepfm_forward.1} parent=70 // pred_check_branch
          %311 = sbr.rel (%p309) target = $region75
        $region74: #{deepfm_forward.1} parent=70 // pred_region
          _
        $region75: #{deepfm_forward.1} parent=70 // pred_fallthru
          _
        %s312 = sand.u32 %s31, 1
        %s313 = sand.u32 %s31, 1
        %s314 = smul.addr %s313, 64
        %s315 = scalar_lea.vmem [#allocation3], %s314
        %p316 = pneg %p44
        %p317 = pneg %p41
        %p318 = pneg %p65
        %p319 = pneg %p62
        %p320 = pneg %p86
        %p321 = pneg %p83
        %p322 = pneg %p107
        %p323 = pneg %p104
        %p324 = pneg %p128
        %p325 = pneg %p125
        %p326 = pneg %p149
        %p327 = pneg %p146
        %p328 = pneg %p170
        %p329 = pneg %p167
        %p330 = pneg %p191
        %p331 = pneg %p188
        %p332 = pneg %p217
        %p333 = pneg %p214
        %s334 = sand.u32 %s204, 1
        %s335 = scalar_lea.sflag [#allocation5], %s334
        %s336 = sand.u32 %s204, 1
        %s337 = smul.addr %s336, 4
        %s338 = scalar_lea.vmem [#allocation4], %s337
        %s339 = smul.u32 4, %s23
        %s340 = smul.u32 4, %s23
        %v341 = vld [vmem:[%s1] sm:$0xff]
        %v342 = vld [vmem:[%s1 + $0x8] sm:$0xff]
        %v343 = vld [vmem:[%s1 + $0x10] sm:$0xff]
        %v344 = vld [vmem:[%s1 + $0x18] sm:$0xff]
        %v345 = vld [vmem:[%s1 + $0x20] sm:$0xff]
        %v346 = vld [vmem:[%s1 + $0x28] sm:$0xff]
        %v347 = vld [vmem:[%s1 + $0x30] sm:$0xff]
        %v348 = vld [vmem:[%s1 + $0x38] sm:$0xff]
        %v349 = vld [vmem:[%s1 + $0x40] sm:$0xff]
        %v350 = vld [vmem:[%s1 + $0x48] sm:$0xff]
        %v351 = vld [vmem:[%s1 + $0x50] sm:$0xff]
        %v352 = vld [vmem:[%s1 + $0x58] sm:$0xff]
        %v353 = vld [vmem:[%s1 + $0x60] sm:$0xff]
        %v354 = vld [vmem:[%s1 + $0x68] sm:$0xff]
        %v355 = vld [vmem:[%s1 + $0x70] sm:$0xff]
        %v356 = vld [vmem:[%s1 + $0x78] sm:$0xff]
        %v357 = vld [vmem:[%s1 + $0x80] sm:$0xff]
        %v358 = vld [vmem:[%s1 + $0x88] sm:$0xff]
        %v359 = vld [vmem:[%s1 + $0x90] sm:$0xff]
        %v360 = vld [vmem:[%s1 + $0x98] sm:$0xff]
        %v361 = vld [vmem:[%s1 + $0xa0] sm:$0xff]
        %v362 = vld [vmem:[%s1 + $0xa8] sm:$0xff]
        %v363 = vld [vmem:[%s1 + $0xb0] sm:$0xff]
        %v364 = vld [vmem:[%s1 + $0xb8] sm:$0xff]
        %v365 = vld [vmem:[%s1 + $0xc0] sm:$0xff]
        %v366 = vld [vmem:[%s1 + $0xc8] sm:$0xff]
        %v367 = vld [vmem:[%s1 + $0xd0] sm:$0xff]
        %v368 = vld [vmem:[%s1 + $0xd8] sm:$0xff]
        %v369 = vld [vmem:[%s1 + $0xe0] sm:$0xff]
        %v370 = vld [vmem:[%s1 + $0xe8] sm:$0xff]
        %v371 = vld [vmem:[%s1 + $0xf0] sm:$0xff]
        %v372 = vld [vmem:[%s1 + $0xf8] sm:$0xff]
        %v373 = vld [vmem:[%s1 + $0x100] sm:$0xff]
        %v374 = vld [vmem:[%s1 + $0x108] sm:$0xff]
        %v375 = vld [vmem:[%s1 + $0x110] sm:$0xff]
        %v376 = vld [vmem:[%s1 + $0x118] sm:$0xff]
        %v377 = vld [vmem:[%s1 + $0x120] sm:$0xff]
        %v378 = vld [vmem:[%s1 + $0x128] sm:$0xff]
        %v379 = vld [vmem:[%s1 + $0x130] sm:$0xff]
        %v380 = vld [vmem:[%s1 + $0x138] sm:$0xff]
        %v381 = vld [vmem:[%s1 + $0x140] sm:$0xff]
        %v382 = vld [vmem:[%s1 + $0x148] sm:$0xff]
        %v383 = vld [vmem:[%s1 + $0x150] sm:$0xff]
        %v384 = vld [vmem:[%s1 + $0x158] sm:$0xff]
        %v385 = vld [vmem:[%s1 + $0x160] sm:$0xff]
        %v386 = vld [vmem:[%s1 + $0x168] sm:$0xff]
        %v387 = vld [vmem:[%s1 + $0x170] sm:$0xff]
        %v388 = vld [vmem:[%s1 + $0x178] sm:$0xff]
        %v389 = vld [vmem:[%s1 + $0x180] sm:$0xff]
        %v390 = vld [vmem:[%s1 + $0x188] sm:$0xff]
        %v391 = vld [vmem:[%s1 + $0x190] sm:$0xff]
        %v392 = vld [vmem:[%s1 + $0x198] sm:$0xff]
        %v393 = vld [vmem:[%s1 + $0x1a0] sm:$0xff]
        %v394 = vld [vmem:[%s1 + $0x1a8] sm:$0xff]
        %v395 = vld [vmem:[%s1 + $0x1b0] sm:$0xff]
        %v396 = vld [vmem:[%s1 + $0x1b8] sm:$0xff]
        %v397 = vld [vmem:[%s1 + $0x1c0] sm:$0xff]
        %v398 = vld [vmem:[%s1 + $0x1c8] sm:$0xff]
        %v399 = vld [vmem:[%s1 + $0x1d0] sm:$0xff]
        %v400 = vld [vmem:[%s1 + $0x1d8] sm:$0xff]
        %v401 = vld [vmem:[%s1 + $0x1e0] sm:$0xff]
        %v402 = vld [vmem:[%s1 + $0x1e8] sm:$0xff]
        %v403 = vld [vmem:[%s1 + $0x1f0] sm:$0xff]
        %v404 = vld [vmem:[%s1 + $0x1f8] sm:$0xff]
        %v405 = vld [vmem:[%s308] sm:$0xff]
        %v406 = vld [vmem:[%s308 + $0x8] sm:$0xff]
        %v407 = vld [vmem:[%s308 + $0x10] sm:$0xff]
        %v408 = vld [vmem:[%s308 + $0x18] sm:$0xff]
        %v409 = vld [vmem:[%s308 + $0x20] sm:$0x1]
        %v410 = vld [vmem:[%s308 + $0x28] sm:$0x1]
        %v411 = vld [vmem:[%s308 + $0x30] sm:$0x1]
        %v412 = vld [vmem:[%s308 + $0x38] sm:$0x1]
        %vm413 = vcmask 72704
        %v415 = vsel %vm413, %v341, 0
        %v418 = vsel %vm413, %v342, 0
        %v421 = vsel %vm413, %v343, 0
        %v424 = vsel %vm413, %v344, 0
        %v427 = vsel %vm413, %v345, 0
        %v430 = vsel %vm413, %v346, 0
        %v433 = vsel %vm413, %v347, 0
        %v436 = vsel %vm413, %v348, 0
        %v439 = vsel %vm413, %v349, 0
        %v442 = vsel %vm413, %v350, 0
        %v445 = vsel %vm413, %v351, 0
        %v448 = vsel %vm413, %v352, 0
        %v451 = vsel %vm413, %v353, 0
        %v454 = vsel %vm413, %v354, 0
        %v457 = vsel %vm413, %v355, 0
        %v460 = vsel %vm413, %v356, 0
        %v463 = vsel %vm413, %v357, 0
        %v466 = vsel %vm413, %v358, 0
        %v469 = vsel %vm413, %v359, 0
        %v472 = vsel %vm413, %v360, 0
        %v475 = vsel %vm413, %v361, 0
        %v478 = vsel %vm413, %v362, 0
        %v481 = vsel %vm413, %v363, 0
        %v484 = vsel %vm413, %v364, 0
        %v487 = vsel %vm413, %v365, 0
        %v490 = vsel %vm413, %v366, 0
        %v493 = vsel %vm413, %v367, 0
        %v496 = vsel %vm413, %v368, 0
        %v499 = vsel %vm413, %v369, 0
        %v502 = vsel %vm413, %v370, 0
        %v505 = vsel %vm413, %v371, 0
        %v508 = vsel %vm413, %v372, 0
        %v511 = vsel %vm413, %v373, 0
        %v514 = vsel %vm413, %v374, 0
        %v517 = vsel %vm413, %v375, 0
        %v520 = vsel %vm413, %v376, 0
        %v523 = vsel %vm413, %v377, 0
        %v526 = vsel %vm413, %v378, 0
        %v529 = vsel %vm413, %v379, 0
        %v532 = vsel %vm413, %v380, 0
        %v535 = vsel %vm413, %v381, 0
        %v538 = vsel %vm413, %v382, 0
        %v541 = vsel %vm413, %v383, 0
        %v544 = vsel %vm413, %v384, 0
        %v547 = vsel %vm413, %v385, 0
        %v550 = vsel %vm413, %v386, 0
        %v553 = vsel %vm413, %v387, 0
        %v556 = vsel %vm413, %v388, 0
        %v559 = vsel %vm413, %v389, 0
        %v562 = vsel %vm413, %v390, 0
        %v565 = vsel %vm413, %v391, 0
        %v568 = vsel %vm413, %v392, 0
        %v571 = vsel %vm413, %v393, 0
        %v574 = vsel %vm413, %v394, 0
        %v577 = vsel %vm413, %v395, 0
        %v580 = vsel %vm413, %v396, 0
        %v583 = vsel %vm413, %v397, 0
        %v586 = vsel %vm413, %v398, 0
        %v589 = vsel %vm413, %v399, 0
        %v592 = vsel %vm413, %v400, 0
        %v595 = vsel %vm413, %v401, 0
        %v598 = vsel %vm413, %v402, 0
        %v601 = vsel %vm413, %v403, 0
        %v604 = vsel %vm413, %v404, 0
        %vm606 = vcmask 1040384
        %v608 = vsel %vm606, %v409, 0
        %v611 = vsel %vm606, %v410, 0
        %v614 = vsel %vm606, %v411, 0
        %v617 = vsel %vm606, %v412, 0
        %619 = vmatprep.subr.mxu0 %v406
        %620 = vmatpush1.msra.mxu0 %v405
        %621 = vmatprep.subr.mxu0 %v611
        %622 = vmatpush1.msra.mxu0 %v608
        %623 = vmatprep.subr.mxu0 0.0
        %624 = vmatpush1.msra.mxu0 0.0
        %625 = vmatprep.subr.mxu0 0.0
        %626 = vmatpush1.msra.mxu0 0.0
        %627 = vmatprep.subr.mxu0 0.0
        %628 = vmatpush1.msra.mxu0 0.0
        %629 = vmatprep.subr.mxu0 0.0
        %630 = vmatpush1.msra.mxu0 0.0
        %631 = vmatprep.subr.mxu0 0.0
        %632 = vmatpush1.msra.mxu0 0.0
        %633 = vmatprep.subr.mxu0 0.0
        %634 = vmatpush1.msra.mxu0 0.0
        %635 = vmatprep.subr.mxu0 0.0
        %636 = vmatpush1.msra.mxu0 0.0
        %637 = vmatprep.subr.mxu0 0.0
        %638 = vmatpush1.msra.mxu0 0.0
        %639 = vmatprep.subr.mxu0 0.0
        %640 = vmatpush1.msra.mxu0 0.0
        %641 = vmatprep.subr.mxu0 0.0
        %642 = vmatpush1.msra.mxu0 0.0
        %643 = vmatprep.subr.mxu0 0.0
        %644 = vmatpush1.msra.mxu0 0.0
        %645 = vmatprep.subr.mxu0 0.0
        %646 = vmatpush1.msra.mxu0 0.0
        %647 = vmatprep.subr.mxu0 0.0
        %648 = vmatpush1.msra.mxu0 0.0
        %649 = vmatprep.subr.mxu0 0.0
        %650 = vmatpush1.msra.mxu0 0.0
        %651 = vmatprep.subr.mxu0 0.0
        %652 = vmatpush1.msra.mxu0 0.0
        %653 = vmatprep.subr.mxu0 0.0
        %654 = vmatpush1.msra.mxu0 0.0
        %655 = vmatprep.subr.mxu0 0.0
        %656 = vmatpush1.msra.mxu0 0.0
        %657 = vmatprep.subr.mxu0 0.0
        %658 = vmatpush1.msra.mxu0 0.0
        %659 = vmatprep.subr.mxu0 0.0
        %660 = vmatpush1.msra.mxu0 0.0
        %661 = vmatprep.subr.mxu0 0.0
        %662 = vmatpush1.msra.mxu0 0.0
        %663 = vmatprep.subr.mxu0 0.0
        %664 = vmatpush1.msra.mxu0 0.0
        %665 = vmatprep.subr.mxu0 0.0
        %666 = vmatpush1.msra.mxu0 0.0
        %667 = vmatprep.subr.mxu0 0.0
        %668 = vmatpush1.msra.mxu0 0.0
        %669 = vmatprep.subr.mxu0 0.0
        %670 = vmatpush1.msra.mxu0 0.0
        %671 = vmatprep.subr.mxu0 0.0
        %672 = vmatpush1.msra.mxu0 0.0
        %673 = vmatprep.subr.mxu0 0.0
        %674 = vmatpush1.msra.mxu0 0.0
        %675 = vmatprep.subr.mxu0 0.0
        %676 = vmatpush1.msra.mxu0 0.0
        %677 = vmatprep.subr.mxu0 0.0
        %678 = vmatpush1.msra.mxu0 0.0
        %679 = vmatprep.subr.mxu0 0.0
        %680 = vmatpush1.msra.mxu0 0.0
        %681 = vmatprep.subr.mxu0 0.0
        %682 = vmatpush1.msra.mxu0 0.0
        %683 = vmatprep.mubr.f32.mxu0 0.0
        %684 = vmatmul.mubr.f32.gmra.mrb[0].mxu0 %v415
        %v685 = vpop.f32.mrb[0].mxu0
        %v686 = vadd.f32 0.0, %v685
        %v687 = vpop.f32.mrb[0].mxu0
        %v688 = vadd.f32 0.0, %v687
        %689 = vmatprep.mubr.f32.mxu0 0.0
        %690 = vmatmul.mubr.f32.gmra.mrb[0].mxu0 %v418
        %v691 = vpop.f32.mrb[0].mxu0
        %v692 = vadd.f32 0.0, %v691
        %v693 = vpop.f32.mrb[0].mxu0
        %v694 = vadd.f32 0.0, %v693
        %695 = vmatprep.mubr.f32.mxu0 0.0
        %696 = vmatmul.mubr.f32.gmra.mrb[0].mxu0 %v421
        %v697 = vpop.f32.mrb[0].mxu0
        %v698 = vadd.f32 0.0, %v697
        %v699 = vpop.f32.mrb[0].mxu0
        %v700 = vadd.f32 0.0, %v699
        %701 = vmatprep.mubr.f32.mxu0 0.0
        %702 = vmatmul.mubr.f32.gmra.mrb[0].mxu0 %v424
        %v703 = vpop.f32.mrb[0].mxu0
        %v704 = vadd.f32 0.0, %v703
        %v705 = vpop.f32.mrb[0].mxu0
        %v706 = vadd.f32 0.0, %v705
        %707 = vmatprep.mubr.f32.mxu0 0.0
        %708 = vmatmul.mubr.f32.gmra.mrb[0].mxu0 %v427
        %v709 = vpop.f32.mrb[0].mxu0
        %v710 = vadd.f32 0.0, %v709
        %v711 = vpop.f32.mrb[0].mxu0
        %v712 = vadd.f32 0.0, %v711
        %713 = vmatprep.mubr.f32.mxu0 0.0
        %714 = vmatmul.mubr.f32.gmra.mrb[0].mxu0 %v430
        %v715 = vpop.f32.mrb[0].mxu0
        %v716 = vadd.f32 0.0, %v715
        %v717 = vpop.f32.mrb[0].mxu0
        %v718 = vadd.f32 0.0, %v717
        %719 = vmatprep.mubr.f32.mxu0 0.0
        %720 = vmatmul.mubr.f32.gmra.mrb[0].mxu0 %v433
        %v721 = vpop.f32.mrb[0].mxu0
        %v722 = vadd.f32 0.0, %v721
        %v723 = vpop.f32.mrb[0].mxu0
        %v724 = vadd.f32 0.0, %v723
        %725 = vmatprep.mubr.f32.mxu0 0.0
        %726 = vmatmul.mubr.f32.gmra.mrb[0].mxu0 %v436
        %v727 = vpop.f32.mrb[0].mxu0
        %v728 = vadd.f32 0.0, %v727
        %v729 = vpop.f32.mrb[0].mxu0
        %v730 = vadd.f32 0.0, %v729
        %731 = vmatprep.mubr.f32.mxu0 0.0
        %732 = vmatmul.mubr.f32.gmra.mrb[0].mxu0 %v439
        %v733 = vpop.f32.mrb[0].mxu0
        %v734 = vadd.f32 0.0, %v733
        %v735 = vpop.f32.mrb[0].mxu0
        %v736 = vadd.f32 0.0, %v735
        %737 = vmatprep.mubr.f32.mxu0 0.0
        %738 = vmatmul.mubr.f32.gmra.mrb[0].mxu0 %v442
        %v739 = vpop.f32.mrb[0].mxu0
        %v740 = vadd.f32 0.0, %v739
        %v741 = vpop.f32.mrb[0].mxu0
        %v742 = vadd.f32 0.0, %v741
        %743 = vmatprep.mubr.f32.mxu0 0.0
        %744 = vmatmul.mubr.f32.gmra.mrb[0].mxu0 %v445
        %v745 = vpop.f32.mrb[0].mxu0
        %v746 = vadd.f32 0.0, %v745
        %v747 = vpop.f32.mrb[0].mxu0
        %v748 = vadd.f32 0.0, %v747
        %749 = vmatprep.mubr.f32.mxu0 0.0
        %750 = vmatmul.mubr.f32.gmra.mrb[0].mxu0 %v448
        %v751 = vpop.f32.mrb[0].mxu0
        %v752 = vadd.f32 0.0, %v751
        %v753 = vpop.f32.mrb[0].mxu0
        %v754 = vadd.f32 0.0, %v753
        %755 = vmatprep.mubr.f32.mxu0 0.0
        %756 = vmatmul.mubr.f32.gmra.mrb[0].mxu0 %v451
        %v757 = vpop.f32.mrb[0].mxu0
        %v758 = vadd.f32 0.0, %v757
        %v759 = vpop.f32.mrb[0].mxu0
        %v760 = vadd.f32 0.0, %v759
        %761 = vmatprep.mubr.f32.mxu0 0.0
        %762 = vmatmul.mubr.f32.gmra.mrb[0].mxu0 %v454
        %v763 = vpop.f32.mrb[0].mxu0
        %v764 = vadd.f32 0.0, %v763
        %v765 = vpop.f32.mrb[0].mxu0
        %v766 = vadd.f32 0.0, %v765
        %767 = vmatprep.mubr.f32.mxu0 0.0
        %768 = vmatmul.mubr.f32.gmra.mrb[0].mxu0 %v457
        %v769 = vpop.f32.mrb[0].mxu0
        %v770 = vadd.f32 0.0, %v769
        %v771 = vpop.f32.mrb[0].mxu0
        %v772 = vadd.f32 0.0, %v771
        %773 = vmatprep.mubr.f32.mxu0 0.0
        %774 = vmatmul.mubr.f32.gmra.mrb[0].mxu0 %v460
        %v775 = vpop.f32.mrb[0].mxu0
        %v776 = vadd.f32 0.0, %v775
        %v777 = vpop.f32.mrb[0].mxu0
        %v778 = vadd.f32 0.0, %v777
        %779 = vmatprep.mubr.f32.mxu0 0.0
        %780 = vmatmul.mubr.f32.gmra.mrb[0].mxu0 %v463
        %v781 = vpop.f32.mrb[0].mxu0
        %v782 = vadd.f32 0.0, %v781
        %v783 = vpop.f32.mrb[0].mxu0
        %v784 = vadd.f32 0.0, %v783
        %785 = vmatprep.mubr.f32.mxu0 0.0
        %786 = vmatmul.mubr.f32.gmra.mrb[0].mxu0 %v466
        %v787 = vpop.f32.mrb[0].mxu0
        %v788 = vadd.f32 0.0, %v787
        %v789 = vpop.f32.mrb[0].mxu0
        %v790 = vadd.f32 0.0, %v789
        %791 = vmatprep.mubr.f32.mxu0 0.0
        %792 = vmatmul.mubr.f32.gmra.mrb[0].mxu0 %v469
        %v793 = vpop.f32.mrb[0].mxu0
        %v794 = vadd.f32 0.0, %v793
        %v795 = vpop.f32.mrb[0].mxu0
        %v796 = vadd.f32 0.0, %v795
        %797 = vmatprep.mubr.f32.mxu0 0.0
        %798 = vmatmul.mubr.f32.gmra.mrb[0].mxu0 %v472
        %v799 = vpop.f32.mrb[0].mxu0
        %v800 = vadd.f32 0.0, %v799
        %v801 = vpop.f32.mrb[0].mxu0
        %v802 = vadd.f32 0.0, %v801
        %803 = vmatprep.mubr.f32.mxu0 0.0
        %804 = vmatmul.mubr.f32.gmra.mrb[0].mxu0 %v475
        %v805 = vpop.f32.mrb[0].mxu0
        %v806 = vadd.f32 0.0, %v805
        %v807 = vpop.f32.mrb[0].mxu0
        %v808 = vadd.f32 0.0, %v807
        %809 = vmatprep.mubr.f32.mxu0 0.0
        %810 = vmatmul.mubr.f32.gmra.mrb[0].mxu0 %v478
        %v811 = vpop.f32.mrb[0].mxu0
        %v812 = vadd.f32 0.0, %v811
        %v813 = vpop.f32.mrb[0].mxu0
        %v814 = vadd.f32 0.0, %v813
        %815 = vmatprep.mubr.f32.mxu0 0.0
        %816 = vmatmul.mubr.f32.gmra.mrb[0].mxu0 %v481
        %v817 = vpop.f32.mrb[0].mxu0
        %v818 = vadd.f32 0.0, %v817
        %v819 = vpop.f32.mrb[0].mxu0
        %v820 = vadd.f32 0.0, %v819
        %821 = vmatprep.mubr.f32.mxu0 0.0
        %822 = vmatmul.mubr.f32.gmra.mrb[0].mxu0 %v484
        %v823 = vpop.f32.mrb[0].mxu0
        %v824 = vadd.f32 0.0, %v823
        %v825 = vpop.f32.mrb[0].mxu0
        %v826 = vadd.f32 0.0, %v825
        %827 = vmatprep.mubr.f32.mxu0 0.0
        %828 = vmatmul.mubr.f32.gmra.mrb[0].mxu0 %v487
        %v829 = vpop.f32.mrb[0].mxu0
        %v830 = vadd.f32 0.0, %v829
        %v831 = vpop.f32.mrb[0].mxu0
        %v832 = vadd.f32 0.0, %v831
        %833 = vmatprep.mubr.f32.mxu0 0.0
        %834 = vmatmul.mubr.f32.gmra.mrb[0].mxu0 %v490
        %v835 = vpop.f32.mrb[0].mxu0
        %v836 = vadd.f32 0.0, %v835
        %v837 = vpop.f32.mrb[0].mxu0
        %v838 = vadd.f32 0.0, %v837
        %839 = vmatprep.mubr.f32.mxu0 0.0
        %840 = vmatmul.mubr.f32.gmra.mrb[0].mxu0 %v493
        %v841 = vpop.f32.mrb[0].mxu0
        %v842 = vadd.f32 0.0, %v841
        %v843 = vpop.f32.mrb[0].mxu0
        %v844 = vadd.f32 0.0, %v843
        %845 = vmatprep.mubr.f32.mxu0 0.0
        %846 = vmatmul.mubr.f32.gmra.mrb[0].mxu0 %v496
        %v847 = vpop.f32.mrb[0].mxu0
        %v848 = vadd.f32 0.0, %v847
        %v849 = vpop.f32.mrb[0].mxu0
        %v850 = vadd.f32 0.0, %v849
        %851 = vmatprep.mubr.f32.mxu0 0.0
        %852 = vmatmul.mubr.f32.gmra.mrb[0].mxu0 %v499
        %v853 = vpop.f32.mrb[0].mxu0
        %v854 = vadd.f32 0.0, %v853
        %v855 = vpop.f32.mrb[0].mxu0
        %v856 = vadd.f32 0.0, %v855
        %857 = vmatprep.mubr.f32.mxu0 0.0
        %858 = vmatmul.mubr.f32.gmra.mrb[0].mxu0 %v502
        %v859 = vpop.f32.mrb[0].mxu0
        %v860 = vadd.f32 0.0, %v859
        %v861 = vpop.f32.mrb[0].mxu0
        %v862 = vadd.f32 0.0, %v861
        %863 = vmatprep.mubr.f32.mxu0 0.0
        %864 = vmatmul.mubr.f32.gmra.mrb[0].mxu0 %v505
        %v865 = vpop.f32.mrb[0].mxu0
        %v866 = vadd.f32 0.0, %v865
        %v867 = vpop.f32.mrb[0].mxu0
        %v868 = vadd.f32 0.0, %v867
        %869 = vmatprep.mubr.f32.mxu0 0.0
        %870 = vmatmul.mubr.f32.gmra.mrb[0].mxu0 %v508
        %v871 = vpop.f32.mrb[0].mxu0
        %v872 = vadd.f32 0.0, %v871
        %v873 = vpop.f32.mrb[0].mxu0
        %v874 = vadd.f32 0.0, %v873
        %875 = vmatprep.mubr.f32.mxu0 0.0
        %876 = vmatmul.mubr.f32.gmra.mrb[0].mxu0 %v511
        %v877 = vpop.f32.mrb[0].mxu0
        %v878 = vadd.f32 0.0, %v877
        %v879 = vpop.f32.mrb[0].mxu0
        %v880 = vadd.f32 0.0, %v879
        %881 = vmatprep.mubr.f32.mxu0 0.0
        %882 = vmatmul.mubr.f32.gmra.mrb[0].mxu0 %v514
        %v883 = vpop.f32.mrb[0].mxu0
        %v884 = vadd.f32 0.0, %v883
        %v885 = vpop.f32.mrb[0].mxu0
        %v886 = vadd.f32 0.0, %v885
        %887 = vmatprep.mubr.f32.mxu0 0.0
        %888 = vmatmul.mubr.f32.gmra.mrb[0].mxu0 %v517
        %v889 = vpop.f32.mrb[0].mxu0
        %v890 = vadd.f32 0.0, %v889
        %v891 = vpop.f32.mrb[0].mxu0
        %v892 = vadd.f32 0.0, %v891
        %893 = vmatprep.mubr.f32.mxu0 0.0
        %894 = vmatmul.mubr.f32.gmra.mrb[0].mxu0 %v520
        %v895 = vpop.f32.mrb[0].mxu0
        %v896 = vadd.f32 0.0, %v895
        %v897 = vpop.f32.mrb[0].mxu0
        %v898 = vadd.f32 0.0, %v897
        %899 = vmatprep.mubr.f32.mxu0 0.0
        %900 = vmatmul.mubr.f32.gmra.mrb[0].mxu0 %v523
        %v901 = vpop.f32.mrb[0].mxu0
        %v902 = vadd.f32 0.0, %v901
        %v903 = vpop.f32.mrb[0].mxu0
        %v904 = vadd.f32 0.0, %v903
        %905 = vmatprep.mubr.f32.mxu0 0.0
        %906 = vmatmul.mubr.f32.gmra.mrb[0].mxu0 %v526
        %v907 = vpop.f32.mrb[0].mxu0
        %v908 = vadd.f32 0.0, %v907
        %v909 = vpop.f32.mrb[0].mxu0
        %v910 = vadd.f32 0.0, %v909
        %911 = vmatprep.mubr.f32.mxu0 0.0
        %912 = vmatmul.mubr.f32.gmra.mrb[0].mxu0 %v529
        %v913 = vpop.f32.mrb[0].mxu0
        %v914 = vadd.f32 0.0, %v913
        %v915 = vpop.f32.mrb[0].mxu0
        %v916 = vadd.f32 0.0, %v915
        %917 = vmatprep.mubr.f32.mxu0 0.0
        %918 = vmatmul.mubr.f32.gmra.mrb[0].mxu0 %v532
        %v919 = vpop.f32.mrb[0].mxu0
        %v920 = vadd.f32 0.0, %v919
        %v921 = vpop.f32.mrb[0].mxu0
        %v922 = vadd.f32 0.0, %v921
        %923 = vmatprep.mubr.f32.mxu0 0.0
        %924 = vmatmul.mubr.f32.gmra.mrb[0].mxu0 %v535
        %v925 = vpop.f32.mrb[0].mxu0
        %v926 = vadd.f32 0.0, %v925
        %v927 = vpop.f32.mrb[0].mxu0
        %v928 = vadd.f32 0.0, %v927
        %929 = vmatprep.mubr.f32.mxu0 0.0
        %930 = vmatmul.mubr.f32.gmra.mrb[0].mxu0 %v538
        %v931 = vpop.f32.mrb[0].mxu0
        %v932 = vadd.f32 0.0, %v931
        %v933 = vpop.f32.mrb[0].mxu0
        %v934 = vadd.f32 0.0, %v933
        %935 = vmatprep.mubr.f32.mxu0 0.0
        %936 = vmatmul.mubr.f32.gmra.mrb[0].mxu0 %v541
        %v937 = vpop.f32.mrb[0].mxu0
        %v938 = vadd.f32 0.0, %v937
        %v939 = vpop.f32.mrb[0].mxu0
        %v940 = vadd.f32 0.0, %v939
        %941 = vmatprep.mubr.f32.mxu0 0.0
        %942 = vmatmul.mubr.f32.gmra.mrb[0].mxu0 %v544
        %v943 = vpop.f32.mrb[0].mxu0
        %v944 = vadd.f32 0.0, %v943
        %v945 = vpop.f32.mrb[0].mxu0
        %v946 = vadd.f32 0.0, %v945
        %947 = vmatprep.mubr.f32.mxu0 0.0
        %948 = vmatmul.mubr.f32.gmra.mrb[0].mxu0 %v547
        %v949 = vpop.f32.mrb[0].mxu0
        %v950 = vadd.f32 0.0, %v949
        %v951 = vpop.f32.mrb[0].mxu0
        %v952 = vadd.f32 0.0, %v951
        %953 = vmatprep.mubr.f32.mxu0 0.0
        %954 = vmatmul.mubr.f32.gmra.mrb[0].mxu0 %v550
        %v955 = vpop.f32.mrb[0].mxu0
        %v956 = vadd.f32 0.0, %v955
        %v957 = vpop.f32.mrb[0].mxu0
        %v958 = vadd.f32 0.0, %v957
        %959 = vmatprep.mubr.f32.mxu0 0.0
        %960 = vmatmul.mubr.f32.gmra.mrb[0].mxu0 %v553
        %v961 = vpop.f32.mrb[0].mxu0
        %v962 = vadd.f32 0.0, %v961
        %v963 = vpop.f32.mrb[0].mxu0
        %v964 = vadd.f32 0.0, %v963
        %965 = vmatprep.mubr.f32.mxu0 0.0
        %966 = vmatmul.mubr.f32.gmra.mrb[0].mxu0 %v556
        %v967 = vpop.f32.mrb[0].mxu0
        %v968 = vadd.f32 0.0, %v967
        %v969 = vpop.f32.mrb[0].mxu0
        %v970 = vadd.f32 0.0, %v969
        %971 = vmatprep.mubr.f32.mxu0 0.0
        %972 = vmatmul.mubr.f32.gmra.mrb[0].mxu0 %v559
        %v973 = vpop.f32.mrb[0].mxu0
        %v974 = vadd.f32 0.0, %v973
        %v975 = vpop.f32.mrb[0].mxu0
        %v976 = vadd.f32 0.0, %v975
        %977 = vmatprep.mubr.f32.mxu0 0.0
        %978 = vmatmul.mubr.f32.gmra.mrb[0].mxu0 %v562
        %v979 = vpop.f32.mrb[0].mxu0
        %v980 = vadd.f32 0.0, %v979
        %v981 = vpop.f32.mrb[0].mxu0
        %v982 = vadd.f32 0.0, %v981
        %983 = vmatprep.mubr.f32.mxu0 0.0
        %984 = vmatmul.mubr.f32.gmra.mrb[0].mxu0 %v565
        %v985 = vpop.f32.mrb[0].mxu0
        %v986 = vadd.f32 0.0, %v985
        %v987 = vpop.f32.mrb[0].mxu0
        %v988 = vadd.f32 0.0, %v987
        %989 = vmatprep.mubr.f32.mxu0 0.0
        %990 = vmatmul.mubr.f32.gmra.mrb[0].mxu0 %v568
        %v991 = vpop.f32.mrb[0].mxu0
        %v992 = vadd.f32 0.0, %v991
        %v993 = vpop.f32.mrb[0].mxu0
        %v994 = vadd.f32 0.0, %v993
        %995 = vmatprep.mubr.f32.mxu0 0.0
        %996 = vmatmul.mubr.f32.gmra.mrb[0].mxu0 %v571
        %v997 = vpop.f32.mrb[0].mxu0
        %v998 = vadd.f32 0.0, %v997
        %v999 = vpop.f32.mrb[0].mxu0
        %v1000 = vadd.f32 0.0, %v999
        %1001 = vmatprep.mubr.f32.mxu0 0.0
        %1002 = vmatmul.mubr.f32.gmra.mrb[0].mxu0 %v574
        %v1003 = vpop.f32.mrb[0].mxu0
        %v1004 = vadd.f32 0.0, %v1003
        %v1005 = vpop.f32.mrb[0].mxu0
        %v1006 = vadd.f32 0.0, %v1005
        %1007 = vmatprep.mubr.f32.mxu0 0.0
        %1008 = vmatmul.mubr.f32.gmra.mrb[0].mxu0 %v577
        %v1009 = vpop.f32.mrb[0].mxu0
        %v1010 = vadd.f32 0.0, %v1009
        %v1011 = vpop.f32.mrb[0].mxu0
        %v1012 = vadd.f32 0.0, %v1011
        %1013 = vmatprep.mubr.f32.mxu0 0.0
        %1014 = vmatmul.mubr.f32.gmra.mrb[0].mxu0 %v580
        %v1015 = vpop.f32.mrb[0].mxu0
        %v1016 = vadd.f32 0.0, %v1015
        %v1017 = vpop.f32.mrb[0].mxu0
        %v1018 = vadd.f32 0.0, %v1017
        %1019 = vmatprep.mubr.f32.mxu0 0.0
        %1020 = vmatmul.mubr.f32.gmra.mrb[0].mxu0 %v583
        %v1021 = vpop.f32.mrb[0].mxu0
        %v1022 = vadd.f32 0.0, %v1021
        %v1023 = vpop.f32.mrb[0].mxu0
        %v1024 = vadd.f32 0.0, %v1023
        %1025 = vmatprep.mubr.f32.mxu0 0.0
        %1026 = vmatmul.mubr.f32.gmra.mrb[0].mxu0 %v586
        %v1027 = vpop.f32.mrb[0].mxu0
        %v1028 = vadd.f32 0.0, %v1027
        %v1029 = vpop.f32.mrb[0].mxu0
        %v1030 = vadd.f32 0.0, %v1029
        %1031 = vmatprep.mubr.f32.mxu0 0.0
        %1032 = vmatmul.mubr.f32.gmra.mrb[0].mxu0 %v589
        %v1033 = vpop.f32.mrb[0].mxu0
        %v1034 = vadd.f32 0.0, %v1033
        %v1035 = vpop.f32.mrb[0].mxu0
        %v1036 = vadd.f32 0.0, %v1035
        %1037 = vmatprep.mubr.f32.mxu0 0.0
        %1038 = vmatmul.mubr.f32.gmra.mrb[0].mxu0 %v592
        %v1039 = vpop.f32.mrb[0].mxu0
        %v1040 = vadd.f32 0.0, %v1039
        %v1041 = vpop.f32.mrb[0].mxu0
        %v1042 = vadd.f32 0.0, %v1041
        %1043 = vmatprep.mubr.f32.mxu0 0.0
        %1044 = vmatmul.mubr.f32.gmra.mrb[0].mxu0 %v595
        %v1045 = vpop.f32.mrb[0].mxu0
        %v1046 = vadd.f32 0.0, %v1045
        %v1047 = vpop.f32.mrb[0].mxu0
        %v1048 = vadd.f32 0.0, %v1047
        %1049 = vmatprep.mubr.f32.mxu0 0.0
        %1050 = vmatmul.mubr.f32.gmra.mrb[0].mxu0 %v598
        %v1051 = vpop.f32.mrb[0].mxu0
        %v1052 = vadd.f32 0.0, %v1051
        %v1053 = vpop.f32.mrb[0].mxu0
        %v1054 = vadd.f32 0.0, %v1053
        %1055 = vmatprep.mubr.f32.mxu0 0.0
        %1056 = vmatmul.mubr.f32.gmra.mrb[0].mxu0 %v601
        %v1057 = vpop.f32.mrb[0].mxu0
        %v1058 = vadd.f32 0.0, %v1057
        %v1059 = vpop.f32.mrb[0].mxu0
        %v1060 = vadd.f32 0.0, %v1059
        %1061 = vmatprep.mubr.f32.mxu0 0.0
        %1062 = vmatmul.mubr.f32.gmra.mrb[0].mxu0 %v604
        %v1063 = vpop.f32.mrb[0].mxu0
        %v1064 = vadd.f32 0.0, %v1063
        %v1065 = vpop.f32.mrb[0].mxu0
        %v1066 = vadd.f32 0.0, %v1065
        %1067 = vdwg.mxu0
        %1068 = vmatprep.subr.mxu0 %v408
        %1069 = vmatpush1.msra.mxu0 %v407
        %1070 = vmatprep.subr.mxu0 %v617
        %1071 = vmatpush1.msra.mxu0 %v614
        %1072 = vmatprep.subr.mxu0 0.0
        %1073 = vmatpush1.msra.mxu0 0.0
        %1074 = vmatprep.subr.mxu0 0.0
        %1075 = vmatpush1.msra.mxu0 0.0
        %1076 = vmatprep.subr.mxu0 0.0
        %1077 = vmatpush1.msra.mxu0 0.0
        %1078 = vmatprep.subr.mxu0 0.0
        %1079 = vmatpush1.msra.mxu0 0.0
        %1080 = vmatprep.subr.mxu0 0.0
        %1081 = vmatpush1.msra.mxu0 0.0
        %1082 = vmatprep.subr.mxu0 0.0
        %1083 = vmatpush1.msra.mxu0 0.0
        %1084 = vmatprep.subr.mxu0 0.0
        %1085 = vmatpush1.msra.mxu0 0.0
        %1086 = vmatprep.subr.mxu0 0.0
        %1087 = vmatpush1.msra.mxu0 0.0
        %1088 = vmatprep.subr.mxu0 0.0
        %1089 = vmatpush1.msra.mxu0 0.0
        %1090 = vmatprep.subr.mxu0 0.0
        %1091 = vmatpush1.msra.mxu0 0.0
        %1092 = vmatprep.subr.mxu0 0.0
        %1093 = vmatpush1.msra.mxu0 0.0
        %1094 = vmatprep.subr.mxu0 0.0
        %1095 = vmatpush1.msra.mxu0 0.0
        %1096 = vmatprep.subr.mxu0 0.0
        %1097 = vmatpush1.msra.mxu0 0.0
        %1098 = vmatprep.subr.mxu0 0.0
        %1099 = vmatpush1.msra.mxu0 0.0
        %1100 = vmatprep.subr.mxu0 0.0
        %1101 = vmatpush1.msra.mxu0 0.0
        %1102 = vmatprep.subr.mxu0 0.0
        %1103 = vmatpush1.msra.mxu0 0.0
        %1104 = vmatprep.subr.mxu0 0.0
        %1105 = vmatpush1.msra.mxu0 0.0
        %1106 = vmatprep.subr.mxu0 0.0
        %1107 = vmatpush1.msra.mxu0 0.0
        %1108 = vmatprep.subr.mxu0 0.0
        %1109 = vmatpush1.msra.mxu0 0.0
        %1110 = vmatprep.subr.mxu0 0.0
        %1111 = vmatpush1.msra.mxu0 0.0
        %1112 = vmatprep.subr.mxu0 0.0
        %1113 = vmatpush1.msra.mxu0 0.0
        %1114 = vmatprep.subr.mxu0 0.0
        %1115 = vmatpush1.msra.mxu0 0.0
        %1116 = vmatprep.subr.mxu0 0.0
        %1117 = vmatpush1.msra.mxu0 0.0
        %1118 = vmatprep.subr.mxu0 0.0
        %1119 = vmatpush1.msra.mxu0 0.0
        %1120 = vmatprep.subr.mxu0 0.0
        %1121 = vmatpush1.msra.mxu0 0.0
        %1122 = vmatprep.subr.mxu0 0.0
        %1123 = vmatpush1.msra.mxu0 0.0
        %1124 = vmatprep.subr.mxu0 0.0
        %1125 = vmatpush1.msra.mxu0 0.0
        %1126 = vmatprep.subr.mxu0 0.0
        %1127 = vmatpush1.msra.mxu0 0.0
        %1128 = vmatprep.subr.mxu0 0.0
        %1129 = vmatpush1.msra.mxu0 0.0
        %1130 = vmatprep.subr.mxu0 0.0
        %1131 = vmatpush1.msra.mxu0 0.0
        %1132 = vmatprep.mubr.f32.mxu0 0.0
        %1133 = vmatmul.mubr.f32.gmra.mrb[0].mxu0 %v415
        %v1134 = vpop.f32.mrb[0].mxu0
        %v1135 = vadd.f32 0.0, %v1134
        %v1136 = vpop.f32.mrb[0].mxu0
        %v1137 = vadd.f32 0.0, %v1136
        %1138 = vmatprep.mubr.f32.mxu0 0.0
        %1139 = vmatmul.mubr.f32.gmra.mrb[0].mxu0 %v418
        %v1140 = vpop.f32.mrb[0].mxu0
        %v1141 = vadd.f32 0.0, %v1140
        %v1142 = vpop.f32.mrb[0].mxu0
        %v1143 = vadd.f32 0.0, %v1142
        %1144 = vmatprep.mubr.f32.mxu0 0.0
        %1145 = vmatmul.mubr.f32.gmra.mrb[0].mxu0 %v421
        %v1146 = vpop.f32.mrb[0].mxu0
        %v1147 = vadd.f32 0.0, %v1146
        %v1148 = vpop.f32.mrb[0].mxu0
        %v1149 = vadd.f32 0.0, %v1148
        %1150 = vmatprep.mubr.f32.mxu0 0.0
        %1151 = vmatmul.mubr.f32.gmra.mrb[0].mxu0 %v424
        %v1152 = vpop.f32.mrb[0].mxu0
        %v1153 = vadd.f32 0.0, %v1152
        %v1154 = vpop.f32.mrb[0].mxu0
        %v1155 = vadd.f32 0.0, %v1154
        %1156 = vmatprep.mubr.f32.mxu0 0.0
        %1157 = vmatmul.mubr.f32.gmra.mrb[0].mxu0 %v427
        %v1158 = vpop.f32.mrb[0].mxu0
        %v1159 = vadd.f32 0.0, %v1158
        %v1160 = vpop.f32.mrb[0].mxu0
        %v1161 = vadd.f32 0.0, %v1160
        %1162 = vmatprep.mubr.f32.mxu0 0.0
        %1163 = vmatmul.mubr.f32.gmra.mrb[0].mxu0 %v430
        %v1164 = vpop.f32.mrb[0].mxu0
        %v1165 = vadd.f32 0.0, %v1164
        %v1166 = vpop.f32.mrb[0].mxu0
        %v1167 = vadd.f32 0.0, %v1166
        %1168 = vmatprep.mubr.f32.mxu0 0.0
        %1169 = vmatmul.mubr.f32.gmra.mrb[0].mxu0 %v433
        %v1170 = vpop.f32.mrb[0].mxu0
        %v1171 = vadd.f32 0.0, %v1170
        %v1172 = vpop.f32.mrb[0].mxu0
        %v1173 = vadd.f32 0.0, %v1172
        %1174 = vmatprep.mubr.f32.mxu0 0.0
        %1175 = vmatmul.mubr.f32.gmra.mrb[0].mxu0 %v436
        %v1176 = vpop.f32.mrb[0].mxu0
        %v1177 = vadd.f32 0.0, %v1176
        %v1178 = vpop.f32.mrb[0].mxu0
        %v1179 = vadd.f32 0.0, %v1178
        %1180 = vmatprep.mubr.f32.mxu0 0.0
        %1181 = vmatmul.mubr.f32.gmra.mrb[0].mxu0 %v439
        %v1182 = vpop.f32.mrb[0].mxu0
        %v1183 = vadd.f32 0.0, %v1182
        %v1184 = vpop.f32.mrb[0].mxu0
        %v1185 = vadd.f32 0.0, %v1184
        %1186 = vmatprep.mubr.f32.mxu0 0.0
        %1187 = vmatmul.mubr.f32.gmra.mrb[0].mxu0 %v442
        %v1188 = vpop.f32.mrb[0].mxu0
        %v1189 = vadd.f32 0.0, %v1188
        %v1190 = vpop.f32.mrb[0].mxu0
        %v1191 = vadd.f32 0.0, %v1190
        %1192 = vmatprep.mubr.f32.mxu0 0.0
        %1193 = vmatmul.mubr.f32.gmra.mrb[0].mxu0 %v445
        %v1194 = vpop.f32.mrb[0].mxu0
        %v1195 = vadd.f32 0.0, %v1194
        %v1196 = vpop.f32.mrb[0].mxu0
        %v1197 = vadd.f32 0.0, %v1196
        %1198 = vmatprep.mubr.f32.mxu0 0.0
        %1199 = vmatmul.mubr.f32.gmra.mrb[0].mxu0 %v448
        %v1200 = vpop.f32.mrb[0].mxu0
        %v1201 = vadd.f32 0.0, %v1200
        %v1202 = vpop.f32.mrb[0].mxu0
        %v1203 = vadd.f32 0.0, %v1202
        %1204 = vmatprep.mubr.f32.mxu0 0.0
        %1205 = vmatmul.mubr.f32.gmra.mrb[0].mxu0 %v451
        %v1206 = vpop.f32.mrb[0].mxu0
        %v1207 = vadd.f32 0.0, %v1206
        %v1208 = vpop.f32.mrb[0].mxu0
        %v1209 = vadd.f32 0.0, %v1208
        %1210 = vmatprep.mubr.f32.mxu0 0.0
        %1211 = vmatmul.mubr.f32.gmra.mrb[0].mxu0 %v454
        %v1212 = vpop.f32.mrb[0].mxu0
        %v1213 = vadd.f32 0.0, %v1212
        %v1214 = vpop.f32.mrb[0].mxu0
        %v1215 = vadd.f32 0.0, %v1214
        %1216 = vmatprep.mubr.f32.mxu0 0.0
        %1217 = vmatmul.mubr.f32.gmra.mrb[0].mxu0 %v457
        %v1218 = vpop.f32.mrb[0].mxu0
        %v1219 = vadd.f32 0.0, %v1218
        %v1220 = vpop.f32.mrb[0].mxu0
        %v1221 = vadd.f32 0.0, %v1220
        %1222 = vmatprep.mubr.f32.mxu0 0.0
        %1223 = vmatmul.mubr.f32.gmra.mrb[0].mxu0 %v460
        %v1224 = vpop.f32.mrb[0].mxu0
        %v1225 = vadd.f32 0.0, %v1224
        %v1226 = vpop.f32.mrb[0].mxu0
        %v1227 = vadd.f32 0.0, %v1226
        %1228 = vmatprep.mubr.f32.mxu0 0.0
        %1229 = vmatmul.mubr.f32.gmra.mrb[0].mxu0 %v463
        %v1230 = vpop.f32.mrb[0].mxu0
        %v1231 = vadd.f32 0.0, %v1230
        %v1232 = vpop.f32.mrb[0].mxu0
        %v1233 = vadd.f32 0.0, %v1232
        %1234 = vmatprep.mubr.f32.mxu0 0.0
        %1235 = vmatmul.mubr.f32.gmra.mrb[0].mxu0 %v466
        %v1236 = vpop.f32.mrb[0].mxu0
        %v1237 = vadd.f32 0.0, %v1236
        %v1238 = vpop.f32.mrb[0].mxu0
        %v1239 = vadd.f32 0.0, %v1238
        %1240 = vmatprep.mubr.f32.mxu0 0.0
        %1241 = vmatmul.mubr.f32.gmra.mrb[0].mxu0 %v469
        %v1242 = vpop.f32.mrb[0].mxu0
        %v1243 = vadd.f32 0.0, %v1242
        %v1244 = vpop.f32.mrb[0].mxu0
        %v1245 = vadd.f32 0.0, %v1244
        %1246 = vmatprep.mubr.f32.mxu0 0.0
        %1247 = vmatmul.mubr.f32.gmra.mrb[0].mxu0 %v472
        %v1248 = vpop.f32.mrb[0].mxu0
        %v1249 = vadd.f32 0.0, %v1248
        %v1250 = vpop.f32.mrb[0].mxu0
        %v1251 = vadd.f32 0.0, %v1250
        %1252 = vmatprep.mubr.f32.mxu0 0.0
        %1253 = vmatmul.mubr.f32.gmra.mrb[0].mxu0 %v475
        %v1254 = vpop.f32.mrb[0].mxu0
        %v1255 = vadd.f32 0.0, %v1254
        %v1256 = vpop.f32.mrb[0].mxu0
        %v1257 = vadd.f32 0.0, %v1256
        %1258 = vmatprep.mubr.f32.mxu0 0.0
        %1259 = vmatmul.mubr.f32.gmra.mrb[0].mxu0 %v478
        %v1260 = vpop.f32.mrb[0].mxu0
        %v1261 = vadd.f32 0.0, %v1260
        %v1262 = vpop.f32.mrb[0].mxu0
        %v1263 = vadd.f32 0.0, %v1262
        %1264 = vmatprep.mubr.f32.mxu0 0.0
        %1265 = vmatmul.mubr.f32.gmra.mrb[0].mxu0 %v481
        %v1266 = vpop.f32.mrb[0].mxu0
        %v1267 = vadd.f32 0.0, %v1266
        %v1268 = vpop.f32.mrb[0].mxu0
        %v1269 = vadd.f32 0.0, %v1268
        %1270 = vmatprep.mubr.f32.mxu0 0.0
        %1271 = vmatmul.mubr.f32.gmra.mrb[0].mxu0 %v484
        %v1272 = vpop.f32.mrb[0].mxu0
        %v1273 = vadd.f32 0.0, %v1272
        %v1274 = vpop.f32.mrb[0].mxu0
        %v1275 = vadd.f32 0.0, %v1274
        %1276 = vmatprep.mubr.f32.mxu0 0.0
        %1277 = vmatmul.mubr.f32.gmra.mrb[0].mxu0 %v487
        %v1278 = vpop.f32.mrb[0].mxu0
        %v1279 = vadd.f32 0.0, %v1278
        %v1280 = vpop.f32.mrb[0].mxu0
        %v1281 = vadd.f32 0.0, %v1280
        %1282 = vmatprep.mubr.f32.mxu0 0.0
        %1283 = vmatmul.mubr.f32.gmra.mrb[0].mxu0 %v490
        %v1284 = vpop.f32.mrb[0].mxu0
        %v1285 = vadd.f32 0.0, %v1284
        %v1286 = vpop.f32.mrb[0].mxu0
        %v1287 = vadd.f32 0.0, %v1286
        %1288 = vmatprep.mubr.f32.mxu0 0.0
        %1289 = vmatmul.mubr.f32.gmra.mrb[0].mxu0 %v493
        %v1290 = vpop.f32.mrb[0].mxu0
        %v1291 = vadd.f32 0.0, %v1290
        %v1292 = vpop.f32.mrb[0].mxu0
        %v1293 = vadd.f32 0.0, %v1292
        %1294 = vmatprep.mubr.f32.mxu0 0.0
        %1295 = vmatmul.mubr.f32.gmra.mrb[0].mxu0 %v496
        %v1296 = vpop.f32.mrb[0].mxu0
        %v1297 = vadd.f32 0.0, %v1296
        %v1298 = vpop.f32.mrb[0].mxu0
        %v1299 = vadd.f32 0.0, %v1298
        %1300 = vmatprep.mubr.f32.mxu0 0.0
        %1301 = vmatmul.mubr.f32.gmra.mrb[0].mxu0 %v499
        %v1302 = vpop.f32.mrb[0].mxu0
        %v1303 = vadd.f32 0.0, %v1302
        %v1304 = vpop.f32.mrb[0].mxu0
        %v1305 = vadd.f32 0.0, %v1304
        %1306 = vmatprep.mubr.f32.mxu0 0.0
        %1307 = vmatmul.mubr.f32.gmra.mrb[0].mxu0 %v502
        %v1308 = vpop.f32.mrb[0].mxu0
        %v1309 = vadd.f32 0.0, %v1308
        %v1310 = vpop.f32.mrb[0].mxu0
        %v1311 = vadd.f32 0.0, %v1310
        %1312 = vmatprep.mubr.f32.mxu0 0.0
        %1313 = vmatmul.mubr.f32.gmra.mrb[0].mxu0 %v505
        %v1314 = vpop.f32.mrb[0].mxu0
        %v1315 = vadd.f32 0.0, %v1314
        %v1316 = vpop.f32.mrb[0].mxu0
        %v1317 = vadd.f32 0.0, %v1316
        %1318 = vmatprep.mubr.f32.mxu0 0.0
        %1319 = vmatmul.mubr.f32.gmra.mrb[0].mxu0 %v508
        %v1320 = vpop.f32.mrb[0].mxu0
        %v1321 = vadd.f32 0.0, %v1320
        %v1322 = vpop.f32.mrb[0].mxu0
        %v1323 = vadd.f32 0.0, %v1322
        %1324 = vmatprep.mubr.f32.mxu0 0.0
        %1325 = vmatmul.mubr.f32.gmra.mrb[0].mxu0 %v511
        %v1326 = vpop.f32.mrb[0].mxu0
        %v1327 = vadd.f32 0.0, %v1326
        %v1328 = vpop.f32.mrb[0].mxu0
        %v1329 = vadd.f32 0.0, %v1328
        %1330 = vmatprep.mubr.f32.mxu0 0.0
        %1331 = vmatmul.mubr.f32.gmra.mrb[0].mxu0 %v514
        %v1332 = vpop.f32.mrb[0].mxu0
        %v1333 = vadd.f32 0.0, %v1332
        %v1334 = vpop.f32.mrb[0].mxu0
        %v1335 = vadd.f32 0.0, %v1334
        %1336 = vmatprep.mubr.f32.mxu0 0.0
        %1337 = vmatmul.mubr.f32.gmra.mrb[0].mxu0 %v517
        %v1338 = vpop.f32.mrb[0].mxu0
        %v1339 = vadd.f32 0.0, %v1338
        %v1340 = vpop.f32.mrb[0].mxu0
        %v1341 = vadd.f32 0.0, %v1340
        %1342 = vmatprep.mubr.f32.mxu0 0.0
        %1343 = vmatmul.mubr.f32.gmra.mrb[0].mxu0 %v520
        %v1344 = vpop.f32.mrb[0].mxu0
        %v1345 = vadd.f32 0.0, %v1344
        %v1346 = vpop.f32.mrb[0].mxu0
        %v1347 = vadd.f32 0.0, %v1346
        %1348 = vmatprep.mubr.f32.mxu0 0.0
        %1349 = vmatmul.mubr.f32.gmra.mrb[0].mxu0 %v523
        %v1350 = vpop.f32.mrb[0].mxu0
        %v1351 = vadd.f32 0.0, %v1350
        %v1352 = vpop.f32.mrb[0].mxu0
        %v1353 = vadd.f32 0.0, %v1352
        %1354 = vmatprep.mubr.f32.mxu0 0.0
        %1355 = vmatmul.mubr.f32.gmra.mrb[0].mxu0 %v526
        %v1356 = vpop.f32.mrb[0].mxu0
        %v1357 = vadd.f32 0.0, %v1356
        %v1358 = vpop.f32.mrb[0].mxu0
        %v1359 = vadd.f32 0.0, %v1358
        %1360 = vmatprep.mubr.f32.mxu0 0.0
        %1361 = vmatmul.mubr.f32.gmra.mrb[0].mxu0 %v529
        %v1362 = vpop.f32.mrb[0].mxu0
        %v1363 = vadd.f32 0.0, %v1362
        %v1364 = vpop.f32.mrb[0].mxu0
        %v1365 = vadd.f32 0.0, %v1364
        %1366 = vmatprep.mubr.f32.mxu0 0.0
        %1367 = vmatmul.mubr.f32.gmra.mrb[0].mxu0 %v532
        %v1368 = vpop.f32.mrb[0].mxu0
        %v1369 = vadd.f32 0.0, %v1368
        %v1370 = vpop.f32.mrb[0].mxu0
        %v1371 = vadd.f32 0.0, %v1370
        %1372 = vmatprep.mubr.f32.mxu0 0.0
        %1373 = vmatmul.mubr.f32.gmra.mrb[0].mxu0 %v535
        %v1374 = vpop.f32.mrb[0].mxu0
        %v1375 = vadd.f32 0.0, %v1374
        %v1376 = vpop.f32.mrb[0].mxu0
        %v1377 = vadd.f32 0.0, %v1376
        %1378 = vmatprep.mubr.f32.mxu0 0.0
        %1379 = vmatmul.mubr.f32.gmra.mrb[0].mxu0 %v538
        %v1380 = vpop.f32.mrb[0].mxu0
        %v1381 = vadd.f32 0.0, %v1380
        %v1382 = vpop.f32.mrb[0].mxu0
        %v1383 = vadd.f32 0.0, %v1382
        %1384 = vmatprep.mubr.f32.mxu0 0.0
        %1385 = vmatmul.mubr.f32.gmra.mrb[0].mxu0 %v541
        %v1386 = vpop.f32.mrb[0].mxu0
        %v1387 = vadd.f32 0.0, %v1386
        %v1388 = vpop.f32.mrb[0].mxu0
        %v1389 = vadd.f32 0.0, %v1388
        %1390 = vmatprep.mubr.f32.mxu0 0.0
        %1391 = vmatmul.mubr.f32.gmra.mrb[0].mxu0 %v544
        %v1392 = vpop.f32.mrb[0].mxu0
        %v1393 = vadd.f32 0.0, %v1392
        %v1394 = vpop.f32.mrb[0].mxu0
        %v1395 = vadd.f32 0.0, %v1394
        %1396 = vmatprep.mubr.f32.mxu0 0.0
        %1397 = vmatmul.mubr.f32.gmra.mrb[0].mxu0 %v547
        %v1398 = vpop.f32.mrb[0].mxu0
        %v1399 = vadd.f32 0.0, %v1398
        %v1400 = vpop.f32.mrb[0].mxu0
        %v1401 = vadd.f32 0.0, %v1400
        %1402 = vmatprep.mubr.f32.mxu0 0.0
        %1403 = vmatmul.mubr.f32.gmra.mrb[0].mxu0 %v550
        %v1404 = vpop.f32.mrb[0].mxu0
        %v1405 = vadd.f32 0.0, %v1404
        %v1406 = vpop.f32.mrb[0].mxu0
        %v1407 = vadd.f32 0.0, %v1406
        %1408 = vmatprep.mubr.f32.mxu0 0.0
        %1409 = vmatmul.mubr.f32.gmra.mrb[0].mxu0 %v553
        %v1410 = vpop.f32.mrb[0].mxu0
        %v1411 = vadd.f32 0.0, %v1410
        %v1412 = vpop.f32.mrb[0].mxu0
        %v1413 = vadd.f32 0.0, %v1412
        %1414 = vmatprep.mubr.f32.mxu0 0.0
        %1415 = vmatmul.mubr.f32.gmra.mrb[0].mxu0 %v556
        %v1416 = vpop.f32.mrb[0].mxu0
        %v1417 = vadd.f32 0.0, %v1416
        %v1418 = vpop.f32.mrb[0].mxu0
        %v1419 = vadd.f32 0.0, %v1418
        %1420 = vmatprep.mubr.f32.mxu0 0.0
        %1421 = vmatmul.mubr.f32.gmra.mrb[0].mxu0 %v559
        %v1422 = vpop.f32.mrb[0].mxu0
        %v1423 = vadd.f32 0.0, %v1422
        %v1424 = vpop.f32.mrb[0].mxu0
        %v1425 = vadd.f32 0.0, %v1424
        %1426 = vmatprep.mubr.f32.mxu0 0.0
        %1427 = vmatmul.mubr.f32.gmra.mrb[0].mxu0 %v562
        %v1428 = vpop.f32.mrb[0].mxu0
        %v1429 = vadd.f32 0.0, %v1428
        %v1430 = vpop.f32.mrb[0].mxu0
        %v1431 = vadd.f32 0.0, %v1430
        %1432 = vmatprep.mubr.f32.mxu0 0.0
        %1433 = vmatmul.mubr.f32.gmra.mrb[0].mxu0 %v565
        %v1434 = vpop.f32.mrb[0].mxu0
        %v1435 = vadd.f32 0.0, %v1434
        %v1436 = vpop.f32.mrb[0].mxu0
        %v1437 = vadd.f32 0.0, %v1436
        %1438 = vmatprep.mubr.f32.mxu0 0.0
        %1439 = vmatmul.mubr.f32.gmra.mrb[0].mxu0 %v568
        %v1440 = vpop.f32.mrb[0].mxu0
        %v1441 = vadd.f32 0.0, %v1440
        %v1442 = vpop.f32.mrb[0].mxu0
        %v1443 = vadd.f32 0.0, %v1442
        %1444 = vmatprep.mubr.f32.mxu0 0.0
        %1445 = vmatmul.mubr.f32.gmra.mrb[0].mxu0 %v571
        %v1446 = vpop.f32.mrb[0].mxu0
        %v1447 = vadd.f32 0.0, %v1446
        %v1448 = vpop.f32.mrb[0].mxu0
        %v1449 = vadd.f32 0.0, %v1448
        %1450 = vmatprep.mubr.f32.mxu0 0.0
        %1451 = vmatmul.mubr.f32.gmra.mrb[0].mxu0 %v574
        %v1452 = vpop.f32.mrb[0].mxu0
        %v1453 = vadd.f32 0.0, %v1452
        %v1454 = vpop.f32.mrb[0].mxu0
        %v1455 = vadd.f32 0.0, %v1454
        %1456 = vmatprep.mubr.f32.mxu0 0.0
        %1457 = vmatmul.mubr.f32.gmra.mrb[0].mxu0 %v577
        %v1458 = vpop.f32.mrb[0].mxu0
        %v1459 = vadd.f32 0.0, %v1458
        %v1460 = vpop.f32.mrb[0].mxu0
        %v1461 = vadd.f32 0.0, %v1460
        %1462 = vmatprep.mubr.f32.mxu0 0.0
        %1463 = vmatmul.mubr.f32.gmra.mrb[0].mxu0 %v580
        %v1464 = vpop.f32.mrb[0].mxu0
        %v1465 = vadd.f32 0.0, %v1464
        %v1466 = vpop.f32.mrb[0].mxu0
        %v1467 = vadd.f32 0.0, %v1466
        %1468 = vmatprep.mubr.f32.mxu0 0.0
        %1469 = vmatmul.mubr.f32.gmra.mrb[0].mxu0 %v583
        %v1470 = vpop.f32.mrb[0].mxu0
        %v1471 = vadd.f32 0.0, %v1470
        %v1472 = vpop.f32.mrb[0].mxu0
        %v1473 = vadd.f32 0.0, %v1472
        %1474 = vmatprep.mubr.f32.mxu0 0.0
        %1475 = vmatmul.mubr.f32.gmra.mrb[0].mxu0 %v586
        %v1476 = vpop.f32.mrb[0].mxu0
        %v1477 = vadd.f32 0.0, %v1476
        %v1478 = vpop.f32.mrb[0].mxu0
        %v1479 = vadd.f32 0.0, %v1478
        %1480 = vmatprep.mubr.f32.mxu0 0.0
        %1481 = vmatmul.mubr.f32.gmra.mrb[0].mxu0 %v589
        %v1482 = vpop.f32.mrb[0].mxu0
        %v1483 = vadd.f32 0.0, %v1482
        %v1484 = vpop.f32.mrb[0].mxu0
        %v1485 = vadd.f32 0.0, %v1484
        %1486 = vmatprep.mubr.f32.mxu0 0.0
        %1487 = vmatmul.mubr.f32.gmra.mrb[0].mxu0 %v592
        %v1488 = vpop.f32.mrb[0].mxu0
        %v1489 = vadd.f32 0.0, %v1488
        %v1490 = vpop.f32.mrb[0].mxu0
        %v1491 = vadd.f32 0.0, %v1490
        %1492 = vmatprep.mubr.f32.mxu0 0.0
        %1493 = vmatmul.mubr.f32.gmra.mrb[0].mxu0 %v595
        %v1494 = vpop.f32.mrb[0].mxu0
        %v1495 = vadd.f32 0.0, %v1494
        %v1496 = vpop.f32.mrb[0].mxu0
        %v1497 = vadd.f32 0.0, %v1496
        %1498 = vmatprep.mubr.f32.mxu0 0.0
        %1499 = vmatmul.mubr.f32.gmra.mrb[0].mxu0 %v598
        %v1500 = vpop.f32.mrb[0].mxu0
        %v1501 = vadd.f32 0.0, %v1500
        %v1502 = vpop.f32.mrb[0].mxu0
        %v1503 = vadd.f32 0.0, %v1502
        %1504 = vmatprep.mubr.f32.mxu0 0.0
        %1505 = vmatmul.mubr.f32.gmra.mrb[0].mxu0 %v601
        %v1506 = vpop.f32.mrb[0].mxu0
        %v1507 = vadd.f32 0.0, %v1506
        %v1508 = vpop.f32.mrb[0].mxu0
        %v1509 = vadd.f32 0.0, %v1508
        %1510 = vmatprep.mubr.f32.mxu0 0.0
        %1511 = vmatmul.mubr.f32.gmra.mrb[0].mxu0 %v604
        %v1512 = vpop.f32.mrb[0].mxu0
        %v1513 = vadd.f32 0.0, %v1512
        %v1514 = vpop.f32.mrb[0].mxu0
        %v1515 = vadd.f32 0.0, %v1514
        %1516 = vdwg.mxu0
        %vm1517 = vcmp.eq.f32.partialorder %v686, 0.0
        %vm1518 = vcmp.eq.f32.partialorder %v688, 0.0
        %vm1519 = vcmp.eq.f32.partialorder %v1135, 0.0
        %vm1520 = vcmp.eq.f32.partialorder %v1137, 0.0
        %vm1521 = vcmp.eq.f32.partialorder %v692, 0.0
        %vm1522 = vcmp.eq.f32.partialorder %v694, 0.0
        %vm1523 = vcmp.eq.f32.partialorder %v1141, 0.0
        %vm1524 = vcmp.eq.f32.partialorder %v1143, 0.0
        %vm1525 = vcmp.eq.f32.partialorder %v698, 0.0
        %vm1526 = vcmp.eq.f32.partialorder %v700, 0.0
        %vm1527 = vcmp.eq.f32.partialorder %v1147, 0.0
        %vm1528 = vcmp.eq.f32.partialorder %v1149, 0.0
        %vm1529 = vcmp.eq.f32.partialorder %v704, 0.0
        %vm1530 = vcmp.eq.f32.partialorder %v706, 0.0
        %vm1531 = vcmp.eq.f32.partialorder %v1153, 0.0
        %vm1532 = vcmp.eq.f32.partialorder %v1155, 0.0
        %vm1533 = vcmp.eq.f32.partialorder %v710, 0.0
        %vm1534 = vcmp.eq.f32.partialorder %v712, 0.0
        %vm1535 = vcmp.eq.f32.partialorder %v1159, 0.0
        %vm1536 = vcmp.eq.f32.partialorder %v1161, 0.0
        %vm1537 = vcmp.eq.f32.partialorder %v716, 0.0
        %vm1538 = vcmp.eq.f32.partialorder %v718, 0.0
        %vm1539 = vcmp.eq.f32.partialorder %v1165, 0.0
        %vm1540 = vcmp.eq.f32.partialorder %v1167, 0.0
        %vm1541 = vcmp.eq.f32.partialorder %v722, 0.0
        %vm1542 = vcmp.eq.f32.partialorder %v724, 0.0
        %vm1543 = vcmp.eq.f32.partialorder %v1171, 0.0
        %vm1544 = vcmp.eq.f32.partialorder %v1173, 0.0
        %vm1545 = vcmp.eq.f32.partialorder %v728, 0.0
        %vm1546 = vcmp.eq.f32.partialorder %v730, 0.0
        %vm1547 = vcmp.eq.f32.partialorder %v1177, 0.0
        %vm1548 = vcmp.eq.f32.partialorder %v1179, 0.0
        %vm1549 = vcmp.eq.f32.partialorder %v734, 0.0
        %vm1550 = vcmp.eq.f32.partialorder %v736, 0.0
        %vm1551 = vcmp.eq.f32.partialorder %v1183, 0.0
        %vm1552 = vcmp.eq.f32.partialorder %v1185, 0.0
        %vm1553 = vcmp.eq.f32.partialorder %v740, 0.0
        %vm1554 = vcmp.eq.f32.partialorder %v742, 0.0
        %vm1555 = vcmp.eq.f32.partialorder %v1189, 0.0
        %vm1556 = vcmp.eq.f32.partialorder %v1191, 0.0
        %vm1557 = vcmp.eq.f32.partialorder %v746, 0.0
        %vm1558 = vcmp.eq.f32.partialorder %v748, 0.0
        %vm1559 = vcmp.eq.f32.partialorder %v1195, 0.0
        %vm1560 = vcmp.eq.f32.partialorder %v1197, 0.0
        %vm1561 = vcmp.eq.f32.partialorder %v752, 0.0
        %vm1562 = vcmp.eq.f32.partialorder %v754, 0.0
        %vm1563 = vcmp.eq.f32.partialorder %v1201, 0.0
        %vm1564 = vcmp.eq.f32.partialorder %v1203, 0.0
        %vm1565 = vcmp.eq.f32.partialorder %v758, 0.0
        %vm1566 = vcmp.eq.f32.partialorder %v760, 0.0
        %vm1567 = vcmp.eq.f32.partialorder %v1207, 0.0
        %vm1568 = vcmp.eq.f32.partialorder %v1209, 0.0
        %vm1569 = vcmp.eq.f32.partialorder %v764, 0.0
        %vm1570 = vcmp.eq.f32.partialorder %v766, 0.0
        %vm1571 = vcmp.eq.f32.partialorder %v1213, 0.0
        %vm1572 = vcmp.eq.f32.partialorder %v1215, 0.0
        %vm1573 = vcmp.eq.f32.partialorder %v770, 0.0
        %vm1574 = vcmp.eq.f32.partialorder %v772, 0.0
        %vm1575 = vcmp.eq.f32.partialorder %v1219, 0.0
        %vm1576 = vcmp.eq.f32.partialorder %v1221, 0.0
        %vm1577 = vcmp.eq.f32.partialorder %v776, 0.0
        %vm1578 = vcmp.eq.f32.partialorder %v778, 0.0
        %vm1579 = vcmp.eq.f32.partialorder %v1225, 0.0
        %vm1580 = vcmp.eq.f32.partialorder %v1227, 0.0
        %vm1581 = vcmp.eq.f32.partialorder %v782, 0.0
        %vm1582 = vcmp.eq.f32.partialorder %v784, 0.0
        %vm1583 = vcmp.eq.f32.partialorder %v1231, 0.0
        %vm1584 = vcmp.eq.f32.partialorder %v1233, 0.0
        %vm1585 = vcmp.eq.f32.partialorder %v788, 0.0
        %vm1586 = vcmp.eq.f32.partialorder %v790, 0.0
        %vm1587 = vcmp.eq.f32.partialorder %v1237, 0.0
        %vm1588 = vcmp.eq.f32.partialorder %v1239, 0.0
        %vm1589 = vcmp.eq.f32.partialorder %v794, 0.0
        %vm1590 = vcmp.eq.f32.partialorder %v796, 0.0
        %vm1591 = vcmp.eq.f32.partialorder %v1243, 0.0
        %vm1592 = vcmp.eq.f32.partialorder %v1245, 0.0
        %vm1593 = vcmp.eq.f32.partialorder %v800, 0.0
        %vm1594 = vcmp.eq.f32.partialorder %v802, 0.0
        %vm1595 = vcmp.eq.f32.partialorder %v1249, 0.0
        %vm1596 = vcmp.eq.f32.partialorder %v1251, 0.0
        %vm1597 = vcmp.eq.f32.partialorder %v806, 0.0
        %vm1598 = vcmp.eq.f32.partialorder %v808, 0.0
        %vm1599 = vcmp.eq.f32.partialorder %v1255, 0.0
        %vm1600 = vcmp.eq.f32.partialorder %v1257, 0.0
        %vm1601 = vcmp.eq.f32.partialorder %v812, 0.0
        %vm1602 = vcmp.eq.f32.partialorder %v814, 0.0
        %vm1603 = vcmp.eq.f32.partialorder %v1261, 0.0
        %vm1604 = vcmp.eq.f32.partialorder %v1263, 0.0
        %vm1605 = vcmp.eq.f32.partialorder %v818, 0.0
        %vm1606 = vcmp.eq.f32.partialorder %v820, 0.0
        %vm1607 = vcmp.eq.f32.partialorder %v1267, 0.0
        %vm1608 = vcmp.eq.f32.partialorder %v1269, 0.0
        %vm1609 = vcmp.eq.f32.partialorder %v824, 0.0
        %vm1610 = vcmp.eq.f32.partialorder %v826, 0.0
        %vm1611 = vcmp.eq.f32.partialorder %v1273, 0.0
        %vm1612 = vcmp.eq.f32.partialorder %v1275, 0.0
        %vm1613 = vcmp.eq.f32.partialorder %v830, 0.0
        %vm1614 = vcmp.eq.f32.partialorder %v832, 0.0
        %vm1615 = vcmp.eq.f32.partialorder %v1279, 0.0
        %vm1616 = vcmp.eq.f32.partialorder %v1281, 0.0
        %vm1617 = vcmp.eq.f32.partialorder %v836, 0.0
        %vm1618 = vcmp.eq.f32.partialorder %v838, 0.0
        %vm1619 = vcmp.eq.f32.partialorder %v1285, 0.0
        %vm1620 = vcmp.eq.f32.partialorder %v1287, 0.0
        %vm1621 = vcmp.eq.f32.partialorder %v842, 0.0
        %vm1622 = vcmp.eq.f32.partialorder %v844, 0.0
        %vm1623 = vcmp.eq.f32.partialorder %v1291, 0.0
        %vm1624 = vcmp.eq.f32.partialorder %v1293, 0.0
        %vm1625 = vcmp.eq.f32.partialorder %v848, 0.0
        %vm1626 = vcmp.eq.f32.partialorder %v850, 0.0
        %vm1627 = vcmp.eq.f32.partialorder %v1297, 0.0
        %vm1628 = vcmp.eq.f32.partialorder %v1299, 0.0
        %vm1629 = vcmp.eq.f32.partialorder %v854, 0.0
        %vm1630 = vcmp.eq.f32.partialorder %v856, 0.0
        %vm1631 = vcmp.eq.f32.partialorder %v1303, 0.0
        %vm1632 = vcmp.eq.f32.partialorder %v1305, 0.0
        %vm1633 = vcmp.eq.f32.partialorder %v860, 0.0
        %vm1634 = vcmp.eq.f32.partialorder %v862, 0.0
        %vm1635 = vcmp.eq.f32.partialorder %v1309, 0.0
        %vm1636 = vcmp.eq.f32.partialorder %v1311, 0.0
        %vm1637 = vcmp.eq.f32.partialorder %v866, 0.0
        %vm1638 = vcmp.eq.f32.partialorder %v868, 0.0
        %vm1639 = vcmp.eq.f32.partialorder %v1315, 0.0
        %vm1640 = vcmp.eq.f32.partialorder %v1317, 0.0
        %vm1641 = vcmp.eq.f32.partialorder %v872, 0.0
        %vm1642 = vcmp.eq.f32.partialorder %v874, 0.0
        %vm1643 = vcmp.eq.f32.partialorder %v1321, 0.0
        %vm1644 = vcmp.eq.f32.partialorder %v1323, 0.0
        %vm1645 = vcmp.eq.f32.partialorder %v878, 0.0
        %vm1646 = vcmp.eq.f32.partialorder %v880, 0.0
        %vm1647 = vcmp.eq.f32.partialorder %v1327, 0.0
        %vm1648 = vcmp.eq.f32.partialorder %v1329, 0.0
        %vm1649 = vcmp.eq.f32.partialorder %v884, 0.0
        %vm1650 = vcmp.eq.f32.partialorder %v886, 0.0
        %vm1651 = vcmp.eq.f32.partialorder %v1333, 0.0
        %vm1652 = vcmp.eq.f32.partialorder %v1335, 0.0
        %vm1653 = vcmp.eq.f32.partialorder %v890, 0.0
        %vm1654 = vcmp.eq.f32.partialorder %v892, 0.0
        %vm1655 = vcmp.eq.f32.partialorder %v1339, 0.0
        %vm1656 = vcmp.eq.f32.partialorder %v1341, 0.0
        %vm1657 = vcmp.eq.f32.partialorder %v896, 0.0
        %vm1658 = vcmp.eq.f32.partialorder %v898, 0.0
        %vm1659 = vcmp.eq.f32.partialorder %v1345, 0.0
        %vm1660 = vcmp.eq.f32.partialorder %v1347, 0.0
        %vm1661 = vcmp.eq.f32.partialorder %v902, 0.0
        %vm1662 = vcmp.eq.f32.partialorder %v904, 0.0
        %vm1663 = vcmp.eq.f32.partialorder %v1351, 0.0
        %vm1664 = vcmp.eq.f32.partialorder %v1353, 0.0
        %vm1665 = vcmp.eq.f32.partialorder %v908, 0.0
        %vm1666 = vcmp.eq.f32.partialorder %v910, 0.0
        %vm1667 = vcmp.eq.f32.partialorder %v1357, 0.0
        %vm1668 = vcmp.eq.f32.partialorder %v1359, 0.0
        %vm1669 = vcmp.eq.f32.partialorder %v914, 0.0
        %vm1670 = vcmp.eq.f32.partialorder %v916, 0.0
        %vm1671 = vcmp.eq.f32.partialorder %v1363, 0.0
        %vm1672 = vcmp.eq.f32.partialorder %v1365, 0.0
        %vm1673 = vcmp.eq.f32.partialorder %v920, 0.0
        %vm1674 = vcmp.eq.f32.partialorder %v922, 0.0
        %vm1675 = vcmp.eq.f32.partialorder %v1369, 0.0
        %vm1676 = vcmp.eq.f32.partialorder %v1371, 0.0
        %vm1677 = vcmp.eq.f32.partialorder %v926, 0.0
        %vm1678 = vcmp.eq.f32.partialorder %v928, 0.0
        %vm1679 = vcmp.eq.f32.partialorder %v1375, 0.0
        %vm1680 = vcmp.eq.f32.partialorder %v1377, 0.0
        %vm1681 = vcmp.eq.f32.partialorder %v932, 0.0
        %vm1682 = vcmp.eq.f32.partialorder %v934, 0.0
        %vm1683 = vcmp.eq.f32.partialorder %v1381, 0.0
        %vm1684 = vcmp.eq.f32.partialorder %v1383, 0.0
        %vm1685 = vcmp.eq.f32.partialorder %v938, 0.0
        %vm1686 = vcmp.eq.f32.partialorder %v940, 0.0
        %vm1687 = vcmp.eq.f32.partialorder %v1387, 0.0
        %vm1688 = vcmp.eq.f32.partialorder %v1389, 0.0
        %vm1689 = vcmp.eq.f32.partialorder %v944, 0.0
        %vm1690 = vcmp.eq.f32.partialorder %v946, 0.0
        %vm1691 = vcmp.eq.f32.partialorder %v1393, 0.0
        %vm1692 = vcmp.eq.f32.partialorder %v1395, 0.0
        %vm1693 = vcmp.eq.f32.partialorder %v950, 0.0
        %vm1694 = vcmp.eq.f32.partialorder %v952, 0.0
        %vm1695 = vcmp.eq.f32.partialorder %v1399, 0.0
        %vm1696 = vcmp.eq.f32.partialorder %v1401, 0.0
        %vm1697 = vcmp.eq.f32.partialorder %v956, 0.0
        %vm1698 = vcmp.eq.f32.partialorder %v958, 0.0
        %vm1699 = vcmp.eq.f32.partialorder %v1405, 0.0
        %vm1700 = vcmp.eq.f32.partialorder %v1407, 0.0
        %vm1701 = vcmp.eq.f32.partialorder %v962, 0.0
        %vm1702 = vcmp.eq.f32.partialorder %v964, 0.0
        %vm1703 = vcmp.eq.f32.partialorder %v1411, 0.0
        %vm1704 = vcmp.eq.f32.partialorder %v1413, 0.0
        %vm1705 = vcmp.eq.f32.partialorder %v968, 0.0
        %vm1706 = vcmp.eq.f32.partialorder %v970, 0.0
        %vm1707 = vcmp.eq.f32.partialorder %v1417, 0.0
        %vm1708 = vcmp.eq.f32.partialorder %v1419, 0.0
        %vm1709 = vcmp.eq.f32.partialorder %v974, 0.0
        %vm1710 = vcmp.eq.f32.partialorder %v976, 0.0
        %vm1711 = vcmp.eq.f32.partialorder %v1423, 0.0
        %vm1712 = vcmp.eq.f32.partialorder %v1425, 0.0
        %vm1713 = vcmp.eq.f32.partialorder %v980, 0.0
        %vm1714 = vcmp.eq.f32.partialorder %v982, 0.0
        %vm1715 = vcmp.eq.f32.partialorder %v1429, 0.0
        %vm1716 = vcmp.eq.f32.partialorder %v1431, 0.0
        %vm1717 = vcmp.eq.f32.partialorder %v986, 0.0
        %vm1718 = vcmp.eq.f32.partialorder %v988, 0.0
        %vm1719 = vcmp.eq.f32.partialorder %v1435, 0.0
        %vm1720 = vcmp.eq.f32.partialorder %v1437, 0.0
        %vm1721 = vcmp.eq.f32.partialorder %v992, 0.0
        %vm1722 = vcmp.eq.f32.partialorder %v994, 0.0
        %vm1723 = vcmp.eq.f32.partialorder %v1441, 0.0
        %vm1724 = vcmp.eq.f32.partialorder %v1443, 0.0
        %vm1725 = vcmp.eq.f32.partialorder %v998, 0.0
        %vm1726 = vcmp.eq.f32.partialorder %v1000, 0.0
        %vm1727 = vcmp.eq.f32.partialorder %v1447, 0.0
        %vm1728 = vcmp.eq.f32.partialorder %v1449, 0.0
        %vm1729 = vcmp.eq.f32.partialorder %v1004, 0.0
        %vm1730 = vcmp.eq.f32.partialorder %v1006, 0.0
        %vm1731 = vcmp.eq.f32.partialorder %v1453, 0.0
        %vm1732 = vcmp.eq.f32.partialorder %v1455, 0.0
        %vm1733 = vcmp.eq.f32.partialorder %v1010, 0.0
        %vm1734 = vcmp.eq.f32.partialorder %v1012, 0.0
        %vm1735 = vcmp.eq.f32.partialorder %v1459, 0.0
        %vm1736 = vcmp.eq.f32.partialorder %v1461, 0.0
        %vm1737 = vcmp.eq.f32.partialorder %v1016, 0.0
        %vm1738 = vcmp.eq.f32.partialorder %v1018, 0.0
        %vm1739 = vcmp.eq.f32.partialorder %v1465, 0.0
        %vm1740 = vcmp.eq.f32.partialorder %v1467, 0.0
        %vm1741 = vcmp.eq.f32.partialorder %v1022, 0.0
        %vm1742 = vcmp.eq.f32.partialorder %v1024, 0.0
        %vm1743 = vcmp.eq.f32.partialorder %v1471, 0.0
        %vm1744 = vcmp.eq.f32.partialorder %v1473, 0.0
        %vm1745 = vcmp.eq.f32.partialorder %v1028, 0.0
        %vm1746 = vcmp.eq.f32.partialorder %v1030, 0.0
        %vm1747 = vcmp.eq.f32.partialorder %v1477, 0.0
        %vm1748 = vcmp.eq.f32.partialorder %v1479, 0.0
        %vm1749 = vcmp.eq.f32.partialorder %v1034, 0.0
        %vm1750 = vcmp.eq.f32.partialorder %v1036, 0.0
        %vm1751 = vcmp.eq.f32.partialorder %v1483, 0.0
        %vm1752 = vcmp.eq.f32.partialorder %v1485, 0.0
        %vm1753 = vcmp.eq.f32.partialorder %v1040, 0.0
        %vm1754 = vcmp.eq.f32.partialorder %v1042, 0.0
        %vm1755 = vcmp.eq.f32.partialorder %v1489, 0.0
        %vm1756 = vcmp.eq.f32.partialorder %v1491, 0.0
        %vm1757 = vcmp.eq.f32.partialorder %v1046, 0.0
        %vm1758 = vcmp.eq.f32.partialorder %v1048, 0.0
        %vm1759 = vcmp.eq.f32.partialorder %v1495, 0.0
        %vm1760 = vcmp.eq.f32.partialorder %v1497, 0.0
        %vm1761 = vcmp.eq.f32.partialorder %v1052, 0.0
        %vm1762 = vcmp.eq.f32.partialorder %v1054, 0.0
        %vm1763 = vcmp.eq.f32.partialorder %v1501, 0.0
        %vm1764 = vcmp.eq.f32.partialorder %v1503, 0.0
        %vm1765 = vcmp.eq.f32.partialorder %v1058, 0.0
        %vm1766 = vcmp.eq.f32.partialorder %v1060, 0.0
        %vm1767 = vcmp.eq.f32.partialorder %v1507, 0.0
        %vm1768 = vcmp.eq.f32.partialorder %v1509, 0.0
        %vm1769 = vcmp.eq.f32.partialorder %v1064, 0.0
        %vm1770 = vcmp.eq.f32.partialorder %v1066, 0.0
        %vm1771 = vcmp.eq.f32.partialorder %v1513, 0.0
        %vm1772 = vcmp.eq.f32.partialorder %v1515, 0.0
        %v1773 = vsel %vm1517, 1, 0
        %v1774 = vsel %vm1518, 1, 0
        %v1775 = vsel %vm1519, 1, 0
        %v1776 = vsel %vm1520, 1, 0
        %v1777 = vsel %vm1521, 1, 0
        %v1778 = vsel %vm1522, 1, 0
        %v1779 = vsel %vm1523, 1, 0
        %v1780 = vsel %vm1524, 1, 0
        %v1781 = vsel %vm1525, 1, 0
        %v1782 = vsel %vm1526, 1, 0
        %v1783 = vsel %vm1527, 1, 0
        %v1784 = vsel %vm1528, 1, 0
        %v1785 = vsel %vm1529, 1, 0
        %v1786 = vsel %vm1530, 1, 0
        %v1787 = vsel %vm1531, 1, 0
        %v1788 = vsel %vm1532, 1, 0
        %v1789 = vsel %vm1533, 1, 0
        %v1790 = vsel %vm1534, 1, 0
        %v1791 = vsel %vm1535, 1, 0
        %v1792 = vsel %vm1536, 1, 0
        %v1793 = vsel %vm1537, 1, 0
        %v1794 = vsel %vm1538, 1, 0
        %v1795 = vsel %vm1539, 1, 0
        %v1796 = vsel %vm1540, 1, 0
        %v1797 = vsel %vm1541, 1, 0
        %v1798 = vsel %vm1542, 1, 0
        %v1799 = vsel %vm1543, 1, 0
        %v1800 = vsel %vm1544, 1, 0
        %v1801 = vsel %vm1545, 1, 0
        %v1802 = vsel %vm1546, 1, 0
        %v1803 = vsel %vm1547, 1, 0
        %v1804 = vsel %vm1548, 1, 0
        %v1805 = vsel %vm1549, 1, 0
        %v1806 = vsel %vm1550, 1, 0
        %v1807 = vsel %vm1551, 1, 0
        %v1808 = vsel %vm1552, 1, 0
        %v1809 = vsel %vm1553, 1, 0
        %v1810 = vsel %vm1554, 1, 0
        %v1811 = vsel %vm1555, 1, 0
        %v1812 = vsel %vm1556, 1, 0
        %v1813 = vsel %vm1557, 1, 0
        %v1814 = vsel %vm1558, 1, 0
        %v1815 = vsel %vm1559, 1, 0
        %v1816 = vsel %vm1560, 1, 0
        %v1817 = vsel %vm1561, 1, 0
        %v1818 = vsel %vm1562, 1, 0
        %v1819 = vsel %vm1563, 1, 0
        %v1820 = vsel %vm1564, 1, 0
        %v1821 = vsel %vm1565, 1, 0
        %v1822 = vsel %vm1566, 1, 0
        %v1823 = vsel %vm1567, 1, 0
        %v1824 = vsel %vm1568, 1, 0
        %v1825 = vsel %vm1569, 1, 0
        %v1826 = vsel %vm1570, 1, 0
        %v1827 = vsel %vm1571, 1, 0
        %v1828 = vsel %vm1572, 1, 0
        %v1829 = vsel %vm1573, 1, 0
        %v1830 = vsel %vm1574, 1, 0
        %v1831 = vsel %vm1575, 1, 0
        %v1832 = vsel %vm1576, 1, 0
        %v1833 = vsel %vm1577, 1, 0
        %v1834 = vsel %vm1578, 1, 0
        %v1835 = vsel %vm1579, 1, 0
        %v1836 = vsel %vm1580, 1, 0
        %v1837 = vsel %vm1581, 1, 0
        %v1838 = vsel %vm1582, 1, 0
        %v1839 = vsel %vm1583, 1, 0
        %v1840 = vsel %vm1584, 1, 0
        %v1841 = vsel %vm1585, 1, 0
        %v1842 = vsel %vm1586, 1, 0
        %v1843 = vsel %vm1587, 1, 0
        %v1844 = vsel %vm1588, 1, 0
        %v1845 = vsel %vm1589, 1, 0
        %v1846 = vsel %vm1590, 1, 0
        %v1847 = vsel %vm1591, 1, 0
        %v1848 = vsel %vm1592, 1, 0
        %v1849 = vsel %vm1593, 1, 0
        %v1850 = vsel %vm1594, 1, 0
        %v1851 = vsel %vm1595, 1, 0
        %v1852 = vsel %vm1596, 1, 0
        %v1853 = vsel %vm1597, 1, 0
        %v1854 = vsel %vm1598, 1, 0
        %v1855 = vsel %vm1599, 1, 0
        %v1856 = vsel %vm1600, 1, 0
        %v1857 = vsel %vm1601, 1, 0
        %v1858 = vsel %vm1602, 1, 0
        %v1859 = vsel %vm1603, 1, 0
        %v1860 = vsel %vm1604, 1, 0
        %v1861 = vsel %vm1605, 1, 0
        %v1862 = vsel %vm1606, 1, 0
        %v1863 = vsel %vm1607, 1, 0
        %v1864 = vsel %vm1608, 1, 0
        %v1865 = vsel %vm1609, 1, 0
        %v1866 = vsel %vm1610, 1, 0
        %v1867 = vsel %vm1611, 1, 0
        %v1868 = vsel %vm1612, 1, 0
        %v1869 = vsel %vm1613, 1, 0
        %v1870 = vsel %vm1614, 1, 0
        %v1871 = vsel %vm1615, 1, 0
        %v1872 = vsel %vm1616, 1, 0
        %v1873 = vsel %vm1617, 1, 0
        %v1874 = vsel %vm1618, 1, 0
        %v1875 = vsel %vm1619, 1, 0
        %v1876 = vsel %vm1620, 1, 0
        %v1877 = vsel %vm1621, 1, 0
        %v1878 = vsel %vm1622, 1, 0
        %v1879 = vsel %vm1623, 1, 0
        %v1880 = vsel %vm1624, 1, 0
        %v1881 = vsel %vm1625, 1, 0
        %v1882 = vsel %vm1626, 1, 0
        %v1883 = vsel %vm1627, 1, 0
        %v1884 = vsel %vm1628, 1, 0
        %v1885 = vsel %vm1629, 1, 0
        %v1886 = vsel %vm1630, 1, 0
        %v1887 = vsel %vm1631, 1, 0
        %v1888 = vsel %vm1632, 1, 0
        %v1889 = vsel %vm1633, 1, 0
        %v1890 = vsel %vm1634, 1, 0
        %v1891 = vsel %vm1635, 1, 0
        %v1892 = vsel %vm1636, 1, 0
        %v1893 = vsel %vm1637, 1, 0
        %v1894 = vsel %vm1638, 1, 0
        %v1895 = vsel %vm1639, 1, 0
        %v1896 = vsel %vm1640, 1, 0
        %v1897 = vsel %vm1641, 1, 0
        %v1898 = vsel %vm1642, 1, 0
        %v1899 = vsel %vm1643, 1, 0
        %v1900 = vsel %vm1644, 1, 0
        %v1901 = vsel %vm1645, 1, 0
        %v1902 = vsel %vm1646, 1, 0
        %v1903 = vsel %vm1647, 1, 0
        %v1904 = vsel %vm1648, 1, 0
        %v1905 = vsel %vm1649, 1, 0
        %v1906 = vsel %vm1650, 1, 0
        %v1907 = vsel %vm1651, 1, 0
        %v1908 = vsel %vm1652, 1, 0
        %v1909 = vsel %vm1653, 1, 0
        %v1910 = vsel %vm1654, 1, 0
        %v1911 = vsel %vm1655, 1, 0
        %v1912 = vsel %vm1656, 1, 0
        %v1913 = vsel %vm1657, 1, 0
        %v1914 = vsel %vm1658, 1, 0
        %v1915 = vsel %vm1659, 1, 0
        %v1916 = vsel %vm1660, 1, 0
        %v1917 = vsel %vm1661, 1, 0
        %v1918 = vsel %vm1662, 1, 0
        %v1919 = vsel %vm1663, 1, 0
        %v1920 = vsel %vm1664, 1, 0
        %v1921 = vsel %vm1665, 1, 0
        %v1922 = vsel %vm1666, 1, 0
        %v1923 = vsel %vm1667, 1, 0
        %v1924 = vsel %vm1668, 1, 0
        %v1925 = vsel %vm1669, 1, 0
        %v1926 = vsel %vm1670, 1, 0
        %v1927 = vsel %vm1671, 1, 0
        %v1928 = vsel %vm1672, 1, 0
        %v1929 = vsel %vm1673, 1, 0
        %v1930 = vsel %vm1674, 1, 0
        %v1931 = vsel %vm1675, 1, 0
        %v1932 = vsel %vm1676, 1, 0
        %v1933 = vsel %vm1677, 1, 0
        %v1934 = vsel %vm1678, 1, 0
        %v1935 = vsel %vm1679, 1, 0
        %v1936 = vsel %vm1680, 1, 0
        %v1937 = vsel %vm1681, 1, 0
        %v1938 = vsel %vm1682, 1, 0
        %v1939 = vsel %vm1683, 1, 0
        %v1940 = vsel %vm1684, 1, 0
        %v1941 = vsel %vm1685, 1, 0
        %v1942 = vsel %vm1686, 1, 0
        %v1943 = vsel %vm1687, 1, 0
        %v1944 = vsel %vm1688, 1, 0
        %v1945 = vsel %vm1689, 1, 0
        %v1946 = vsel %vm1690, 1, 0
        %v1947 = vsel %vm1691, 1, 0
        %v1948 = vsel %vm1692, 1, 0
        %v1949 = vsel %vm1693, 1, 0
        %v1950 = vsel %vm1694, 1, 0
        %v1951 = vsel %vm1695, 1, 0
        %v1952 = vsel %vm1696, 1, 0
        %v1953 = vsel %vm1697, 1, 0
        %v1954 = vsel %vm1698, 1, 0
        %v1955 = vsel %vm1699, 1, 0
        %v1956 = vsel %vm1700, 1, 0
        %v1957 = vsel %vm1701, 1, 0
        %v1958 = vsel %vm1702, 1, 0
        %v1959 = vsel %vm1703, 1, 0
        %v1960 = vsel %vm1704, 1, 0
        %v1961 = vsel %vm1705, 1, 0
        %v1962 = vsel %vm1706, 1, 0
        %v1963 = vsel %vm1707, 1, 0
        %v1964 = vsel %vm1708, 1, 0
        %v1965 = vsel %vm1709, 1, 0
        %v1966 = vsel %vm1710, 1, 0
        %v1967 = vsel %vm1711, 1, 0
        %v1968 = vsel %vm1712, 1, 0
        %v1969 = vsel %vm1713, 1, 0
        %v1970 = vsel %vm1714, 1, 0
        %v1971 = vsel %vm1715, 1, 0
        %v1972 = vsel %vm1716, 1, 0
        %v1973 = vsel %vm1717, 1, 0
        %v1974 = vsel %vm1718, 1, 0
        %v1975 = vsel %vm1719, 1, 0
        %v1976 = vsel %vm1720, 1, 0
        %v1977 = vsel %vm1721, 1, 0
        %v1978 = vsel %vm1722, 1, 0
        %v1979 = vsel %vm1723, 1, 0
        %v1980 = vsel %vm1724, 1, 0
        %v1981 = vsel %vm1725, 1, 0
        %v1982 = vsel %vm1726, 1, 0
        %v1983 = vsel %vm1727, 1, 0
        %v1984 = vsel %vm1728, 1, 0
        %v1985 = vsel %vm1729, 1, 0
        %v1986 = vsel %vm1730, 1, 0
        %v1987 = vsel %vm1731, 1, 0
        %v1988 = vsel %vm1732, 1, 0
        %v1989 = vsel %vm1733, 1, 0
        %v1990 = vsel %vm1734, 1, 0
        %v1991 = vsel %vm1735, 1, 0
        %v1992 = vsel %vm1736, 1, 0
        %v1993 = vsel %vm1737, 1, 0
        %v1994 = vsel %vm1738, 1, 0
        %v1995 = vsel %vm1739, 1, 0
        %v1996 = vsel %vm1740, 1, 0
        %v1997 = vsel %vm1741, 1, 0
        %v1998 = vsel %vm1742, 1, 0
        %v1999 = vsel %vm1743, 1, 0
        %v2000 = vsel %vm1744, 1, 0
        %v2001 = vsel %vm1745, 1, 0
        %v2002 = vsel %vm1746, 1, 0
        %v2003 = vsel %vm1747, 1, 0
        %v2004 = vsel %vm1748, 1, 0
        %v2005 = vsel %vm1749, 1, 0
        %v2006 = vsel %vm1750, 1, 0
        %v2007 = vsel %vm1751, 1, 0
        %v2008 = vsel %vm1752, 1, 0
        %v2009 = vsel %vm1753, 1, 0
        %v2010 = vsel %vm1754, 1, 0
        %v2011 = vsel %vm1755, 1, 0
        %v2012 = vsel %vm1756, 1, 0
        %v2013 = vsel %vm1757, 1, 0
        %v2014 = vsel %vm1758, 1, 0
        %v2015 = vsel %vm1759, 1, 0
        %v2016 = vsel %vm1760, 1, 0
        %v2017 = vsel %vm1761, 1, 0
        %v2018 = vsel %vm1762, 1, 0
        %v2019 = vsel %vm1763, 1, 0
        %v2020 = vsel %vm1764, 1, 0
        %v2021 = vsel %vm1765, 1, 0
        %v2022 = vsel %vm1766, 1, 0
        %v2023 = vsel %vm1767, 1, 0
        %v2024 = vsel %vm1768, 1, 0
        %v2025 = vsel %vm1769, 1, 0
        %v2026 = vsel %vm1770, 1, 0
        %v2027 = vsel %vm1771, 1, 0
        %v2028 = vsel %vm1772, 1, 0
        %v2029 = vcvt.s32.f32 %v1773
        %v2030 = vcvt.s32.f32 %v1774
        %v2031 = vcvt.s32.f32 %v1775
        %v2032 = vcvt.s32.f32 %v1776
        %v2033 = vcvt.s32.f32 %v1777
        %v2034 = vcvt.s32.f32 %v1778
        %v2035 = vcvt.s32.f32 %v1779
        %v2036 = vcvt.s32.f32 %v1780
        %v2037 = vcvt.s32.f32 %v1781
        %v2038 = vcvt.s32.f32 %v1782
        %v2039 = vcvt.s32.f32 %v1783
        %v2040 = vcvt.s32.f32 %v1784
        %v2041 = vcvt.s32.f32 %v1785
        %v2042 = vcvt.s32.f32 %v1786
        %v2043 = vcvt.s32.f32 %v1787
        %v2044 = vcvt.s32.f32 %v1788
        %v2045 = vcvt.s32.f32 %v1789
        %v2046 = vcvt.s32.f32 %v1790
        %v2047 = vcvt.s32.f32 %v1791
        %v2048 = vcvt.s32.f32 %v1792
        %v2049 = vcvt.s32.f32 %v1793
        %v2050 = vcvt.s32.f32 %v1794
        %v2051 = vcvt.s32.f32 %v1795
        %v2052 = vcvt.s32.f32 %v1796
        %v2053 = vcvt.s32.f32 %v1797
        %v2054 = vcvt.s32.f32 %v1798
        %v2055 = vcvt.s32.f32 %v1799
        %v2056 = vcvt.s32.f32 %v1800
        %v2057 = vcvt.s32.f32 %v1801
        %v2058 = vcvt.s32.f32 %v1802
        %v2059 = vcvt.s32.f32 %v1803
        %v2060 = vcvt.s32.f32 %v1804
        %v2061 = vcvt.s32.f32 %v1805
        %v2062 = vcvt.s32.f32 %v1806
        %v2063 = vcvt.s32.f32 %v1807
        %v2064 = vcvt.s32.f32 %v1808
        %v2065 = vcvt.s32.f32 %v1809
        %v2066 = vcvt.s32.f32 %v1810
        %v2067 = vcvt.s32.f32 %v1811
        %v2068 = vcvt.s32.f32 %v1812
        %v2069 = vcvt.s32.f32 %v1813
        %v2070 = vcvt.s32.f32 %v1814
        %v2071 = vcvt.s32.f32 %v1815
        %v2072 = vcvt.s32.f32 %v1816
        %v2073 = vcvt.s32.f32 %v1817
        %v2074 = vcvt.s32.f32 %v1818
        %v2075 = vcvt.s32.f32 %v1819
        %v2076 = vcvt.s32.f32 %v1820
        %v2077 = vcvt.s32.f32 %v1821
        %v2078 = vcvt.s32.f32 %v1822
        %v2079 = vcvt.s32.f32 %v1823
        %v2080 = vcvt.s32.f32 %v1824
        %v2081 = vcvt.s32.f32 %v1825
        %v2082 = vcvt.s32.f32 %v1826
        %v2083 = vcvt.s32.f32 %v1827
        %v2084 = vcvt.s32.f32 %v1828
        %v2085 = vcvt.s32.f32 %v1829
        %v2086 = vcvt.s32.f32 %v1830
        %v2087 = vcvt.s32.f32 %v1831
        %v2088 = vcvt.s32.f32 %v1832
        %v2089 = vcvt.s32.f32 %v1833
        %v2090 = vcvt.s32.f32 %v1834
        %v2091 = vcvt.s32.f32 %v1835
        %v2092 = vcvt.s32.f32 %v1836
        %v2093 = vcvt.s32.f32 %v1837
        %v2094 = vcvt.s32.f32 %v1838
        %v2095 = vcvt.s32.f32 %v1839
        %v2096 = vcvt.s32.f32 %v1840
        %v2097 = vcvt.s32.f32 %v1841
        %v2098 = vcvt.s32.f32 %v1842
        %v2099 = vcvt.s32.f32 %v1843
        %v2100 = vcvt.s32.f32 %v1844
        %v2101 = vcvt.s32.f32 %v1845
        %v2102 = vcvt.s32.f32 %v1846
        %v2103 = vcvt.s32.f32 %v1847
        %v2104 = vcvt.s32.f32 %v1848
        %v2105 = vcvt.s32.f32 %v1849
        %v2106 = vcvt.s32.f32 %v1850
        %v2107 = vcvt.s32.f32 %v1851
        %v2108 = vcvt.s32.f32 %v1852
        %v2109 = vcvt.s32.f32 %v1853
        %v2110 = vcvt.s32.f32 %v1854
        %v2111 = vcvt.s32.f32 %v1855
        %v2112 = vcvt.s32.f32 %v1856
        %v2113 = vcvt.s32.f32 %v1857
        %v2114 = vcvt.s32.f32 %v1858
        %v2115 = vcvt.s32.f32 %v1859
        %v2116 = vcvt.s32.f32 %v1860
        %v2117 = vcvt.s32.f32 %v1861
        %v2118 = vcvt.s32.f32 %v1862
        %v2119 = vcvt.s32.f32 %v1863
        %v2120 = vcvt.s32.f32 %v1864
        %v2121 = vcvt.s32.f32 %v1865
        %v2122 = vcvt.s32.f32 %v1866
        %v2123 = vcvt.s32.f32 %v1867
        %v2124 = vcvt.s32.f32 %v1868
        %v2125 = vcvt.s32.f32 %v1869
        %v2126 = vcvt.s32.f32 %v1870
        %v2127 = vcvt.s32.f32 %v1871
        %v2128 = vcvt.s32.f32 %v1872
        %v2129 = vcvt.s32.f32 %v1873
        %v2130 = vcvt.s32.f32 %v1874
        %v2131 = vcvt.s32.f32 %v1875
        %v2132 = vcvt.s32.f32 %v1876
        %v2133 = vcvt.s32.f32 %v1877
        %v2134 = vcvt.s32.f32 %v1878
        %v2135 = vcvt.s32.f32 %v1879
        %v2136 = vcvt.s32.f32 %v1880
        %v2137 = vcvt.s32.f32 %v1881
        %v2138 = vcvt.s32.f32 %v1882
        %v2139 = vcvt.s32.f32 %v1883
        %v2140 = vcvt.s32.f32 %v1884
        %v2141 = vcvt.s32.f32 %v1885
        %v2142 = vcvt.s32.f32 %v1886
        %v2143 = vcvt.s32.f32 %v1887
        %v2144 = vcvt.s32.f32 %v1888
        %v2145 = vcvt.s32.f32 %v1889
        %v2146 = vcvt.s32.f32 %v1890
        %v2147 = vcvt.s32.f32 %v1891
        %v2148 = vcvt.s32.f32 %v1892
        %v2149 = vcvt.s32.f32 %v1893
        %v2150 = vcvt.s32.f32 %v1894
        %v2151 = vcvt.s32.f32 %v1895
        %v2152 = vcvt.s32.f32 %v1896
        %v2153 = vcvt.s32.f32 %v1897
        %v2154 = vcvt.s32.f32 %v1898
        %v2155 = vcvt.s32.f32 %v1899
        %v2156 = vcvt.s32.f32 %v1900
        %v2157 = vcvt.s32.f32 %v1901
        %v2158 = vcvt.s32.f32 %v1902
        %v2159 = vcvt.s32.f32 %v1903
        %v2160 = vcvt.s32.f32 %v1904
        %v2161 = vcvt.s32.f32 %v1905
        %v2162 = vcvt.s32.f32 %v1906
        %v2163 = vcvt.s32.f32 %v1907
        %v2164 = vcvt.s32.f32 %v1908
        %v2165 = vcvt.s32.f32 %v1909
        %v2166 = vcvt.s32.f32 %v1910
        %v2167 = vcvt.s32.f32 %v1911
        %v2168 = vcvt.s32.f32 %v1912
        %v2169 = vcvt.s32.f32 %v1913
        %v2170 = vcvt.s32.f32 %v1914
        %v2171 = vcvt.s32.f32 %v1915
        %v2172 = vcvt.s32.f32 %v1916
        %v2173 = vcvt.s32.f32 %v1917
        %v2174 = vcvt.s32.f32 %v1918
        %v2175 = vcvt.s32.f32 %v1919
        %v2176 = vcvt.s32.f32 %v1920
        %v2177 = vcvt.s32.f32 %v1921
        %v2178 = vcvt.s32.f32 %v1922
        %v2179 = vcvt.s32.f32 %v1923
        %v2180 = vcvt.s32.f32 %v1924
        %v2181 = vcvt.s32.f32 %v1925
        %v2182 = vcvt.s32.f32 %v1926
        %v2183 = vcvt.s32.f32 %v1927
        %v2184 = vcvt.s32.f32 %v1928
        %v2185 = vcvt.s32.f32 %v1929
        %v2186 = vcvt.s32.f32 %v1930
        %v2187 = vcvt.s32.f32 %v1931
        %v2188 = vcvt.s32.f32 %v1932
        %v2189 = vcvt.s32.f32 %v1933
        %v2190 = vcvt.s32.f32 %v1934
        %v2191 = vcvt.s32.f32 %v1935
        %v2192 = vcvt.s32.f32 %v1936
        %v2193 = vcvt.s32.f32 %v1937
        %v2194 = vcvt.s32.f32 %v1938
        %v2195 = vcvt.s32.f32 %v1939
        %v2196 = vcvt.s32.f32 %v1940
        %v2197 = vcvt.s32.f32 %v1941
        %v2198 = vcvt.s32.f32 %v1942
        %v2199 = vcvt.s32.f32 %v1943
        %v2200 = vcvt.s32.f32 %v1944
        %v2201 = vcvt.s32.f32 %v1945
        %v2202 = vcvt.s32.f32 %v1946
        %v2203 = vcvt.s32.f32 %v1947
        %v2204 = vcvt.s32.f32 %v1948
        %v2205 = vcvt.s32.f32 %v1949
        %v2206 = vcvt.s32.f32 %v1950
        %v2207 = vcvt.s32.f32 %v1951
        %v2208 = vcvt.s32.f32 %v1952
        %v2209 = vcvt.s32.f32 %v1953
        %v2210 = vcvt.s32.f32 %v1954
        %v2211 = vcvt.s32.f32 %v1955
        %v2212 = vcvt.s32.f32 %v1956
        %v2213 = vcvt.s32.f32 %v1957
        %v2214 = vcvt.s32.f32 %v1958
        %v2215 = vcvt.s32.f32 %v1959
        %v2216 = vcvt.s32.f32 %v1960
        %v2217 = vcvt.s32.f32 %v1961
        %v2218 = vcvt.s32.f32 %v1962
        %v2219 = vcvt.s32.f32 %v1963
        %v2220 = vcvt.s32.f32 %v1964
        %v2221 = vcvt.s32.f32 %v1965
        %v2222 = vcvt.s32.f32 %v1966
        %v2223 = vcvt.s32.f32 %v1967
        %v2224 = vcvt.s32.f32 %v1968
        %v2225 = vcvt.s32.f32 %v1969
        %v2226 = vcvt.s32.f32 %v1970
        %v2227 = vcvt.s32.f32 %v1971
        %v2228 = vcvt.s32.f32 %v1972
        %v2229 = vcvt.s32.f32 %v1973
        %v2230 = vcvt.s32.f32 %v1974
        %v2231 = vcvt.s32.f32 %v1975
        %v2232 = vcvt.s32.f32 %v1976
        %v2233 = vcvt.s32.f32 %v1977
        %v2234 = vcvt.s32.f32 %v1978
        %v2235 = vcvt.s32.f32 %v1979
        %v2236 = vcvt.s32.f32 %v1980
        %v2237 = vcvt.s32.f32 %v1981
        %v2238 = vcvt.s32.f32 %v1982
        %v2239 = vcvt.s32.f32 %v1983
        %v2240 = vcvt.s32.f32 %v1984
        %v2241 = vcvt.s32.f32 %v1985
        %v2242 = vcvt.s32.f32 %v1986
        %v2243 = vcvt.s32.f32 %v1987
        %v2244 = vcvt.s32.f32 %v1988
        %v2245 = vcvt.s32.f32 %v1989
        %v2246 = vcvt.s32.f32 %v1990
        %v2247 = vcvt.s32.f32 %v1991
        %v2248 = vcvt.s32.f32 %v1992
        %v2249 = vcvt.s32.f32 %v1993
        %v2250 = vcvt.s32.f32 %v1994
        %v2251 = vcvt.s32.f32 %v1995
        %v2252 = vcvt.s32.f32 %v1996
        %v2253 = vcvt.s32.f32 %v1997
        %v2254 = vcvt.s32.f32 %v1998
        %v2255 = vcvt.s32.f32 %v1999
        %v2256 = vcvt.s32.f32 %v2000
        %v2257 = vcvt.s32.f32 %v2001
        %v2258 = vcvt.s32.f32 %v2002
        %v2259 = vcvt.s32.f32 %v2003
        %v2260 = vcvt.s32.f32 %v2004
        %v2261 = vcvt.s32.f32 %v2005
        %v2262 = vcvt.s32.f32 %v2006
        %v2263 = vcvt.s32.f32 %v2007
        %v2264 = vcvt.s32.f32 %v2008
        %v2265 = vcvt.s32.f32 %v2009
        %v2266 = vcvt.s32.f32 %v2010
        %v2267 = vcvt.s32.f32 %v2011
        %v2268 = vcvt.s32.f32 %v2012
        %v2269 = vcvt.s32.f32 %v2013
        %v2270 = vcvt.s32.f32 %v2014
        %v2271 = vcvt.s32.f32 %v2015
        %v2272 = vcvt.s32.f32 %v2016
        %v2273 = vcvt.s32.f32 %v2017
        %v2274 = vcvt.s32.f32 %v2018
        %v2275 = vcvt.s32.f32 %v2019
        %v2276 = vcvt.s32.f32 %v2020
        %v2277 = vcvt.s32.f32 %v2021
        %v2278 = vcvt.s32.f32 %v2022
        %v2279 = vcvt.s32.f32 %v2023
        %v2280 = vcvt.s32.f32 %v2024
        %v2281 = vcvt.s32.f32 %v2025
        %v2282 = vcvt.s32.f32 %v2026
        %v2283 = vcvt.s32.f32 %v2027
        %v2284 = vcvt.s32.f32 %v2028
        %v2285 = vld [vmem:[%s2] sm:$0xff]
        %v2286 = vld [vmem:[%s2 + $0x8] sm:$0xff]
        %v2287 = vld [vmem:[%s2 + $0x10] sm:$0xff]
        %v2288 = vld [vmem:[%s2 + $0x18] sm:$0xff]
        %v2289 = vld [vmem:[%s2 + $0x20] sm:$0xff]
        %v2290 = vld [vmem:[%s2 + $0x28] sm:$0xff]
        %v2291 = vld [vmem:[%s2 + $0x30] sm:$0xff]
        %v2292 = vld [vmem:[%s2 + $0x38] sm:$0xff]
        %v2293 = vld [vmem:[%s2 + $0x40] sm:$0xff]
        %v2294 = vld [vmem:[%s2 + $0x48] sm:$0xff]
        %v2295 = vld [vmem:[%s2 + $0x50] sm:$0xff]
        %v2296 = vld [vmem:[%s2 + $0x58] sm:$0xff]
        %v2297 = vld [vmem:[%s2 + $0x60] sm:$0xff]
        %v2298 = vld [vmem:[%s2 + $0x68] sm:$0xff]
        %v2299 = vld [vmem:[%s2 + $0x70] sm:$0xff]
        %v2300 = vld [vmem:[%s2 + $0x78] sm:$0xff]
        %v2301 = vld [vmem:[%s2 + $0x80] sm:$0xff]
        %v2302 = vld [vmem:[%s2 + $0x88] sm:$0xff]
        %v2303 = vld [vmem:[%s2 + $0x90] sm:$0xff]
        %v2304 = vld [vmem:[%s2 + $0x98] sm:$0xff]
        %v2305 = vld [vmem:[%s2 + $0xa0] sm:$0xff]
        %v2306 = vld [vmem:[%s2 + $0xa8] sm:$0xff]
        %v2307 = vld [vmem:[%s2 + $0xb0] sm:$0xff]
        %v2308 = vld [vmem:[%s2 + $0xb8] sm:$0xff]
        %v2309 = vld [vmem:[%s2 + $0xc0] sm:$0x1]
        %v2310 = vld [vmem:[%s2 + $0xc8] sm:$0x1]
        %v2311 = vld [vmem:[%s2 + $0xd0] sm:$0x1]
        %v2312 = vld [vmem:[%s2 + $0xd8] sm:$0x1]
        %2313 = vmatprep.subr.mxu0 %v2030
        %2314 = vmatpush1.msra.mxu0 %v2029
        %2315 = vmatprep.subr.mxu0 %v2034
        %2316 = vmatpush1.msra.mxu0 %v2033
        %2317 = vmatprep.subr.mxu0 %v2038
        %2318 = vmatpush1.msra.mxu0 %v2037
        %2319 = vmatprep.subr.mxu0 %v2042
        %2320 = vmatpush1.msra.mxu0 %v2041
        %2321 = vmatprep.subr.mxu0 %v2046
        %2322 = vmatpush1.msra.mxu0 %v2045
        %2323 = vmatprep.subr.mxu0 %v2050
        %2324 = vmatpush1.msra.mxu0 %v2049
        %2325 = vmatprep.subr.mxu0 %v2054
        %2326 = vmatpush1.msra.mxu0 %v2053
        %2327 = vmatprep.subr.mxu0 %v2058
        %2328 = vmatpush1.msra.mxu0 %v2057
        %2329 = vmatprep.subr.mxu0 %v2062
        %2330 = vmatpush1.msra.mxu0 %v2061
        %2331 = vmatprep.subr.mxu0 %v2066
        %2332 = vmatpush1.msra.mxu0 %v2065
        %2333 = vmatprep.subr.mxu0 %v2070
        %2334 = vmatpush1.msra.mxu0 %v2069
        %2335 = vmatprep.subr.mxu0 %v2074
        %2336 = vmatpush1.msra.mxu0 %v2073
        %2337 = vmatprep.subr.mxu0 %v2078
        %2338 = vmatpush1.msra.mxu0 %v2077
        %2339 = vmatprep.subr.mxu0 %v2082
        %2340 = vmatpush1.msra.mxu0 %v2081
        %2341 = vmatprep.subr.mxu0 %v2086
        %2342 = vmatpush1.msra.mxu0 %v2085
        %2343 = vmatprep.subr.mxu0 %v2090
        %2344 = vmatpush1.msra.mxu0 %v2089
        %2345 = vmatprep.subr.mxu0 %v2094
        %2346 = vmatpush1.msra.mxu0 %v2093
        %2347 = vmatprep.subr.mxu0 %v2098
        %2348 = vmatpush1.msra.mxu0 %v2097
        %2349 = vmatprep.subr.mxu0 %v2102
        %2350 = vmatpush1.msra.mxu0 %v2101
        %2351 = vmatprep.subr.mxu0 %v2106
        %2352 = vmatpush1.msra.mxu0 %v2105
        %2353 = vmatprep.subr.mxu0 %v2110
        %2354 = vmatpush1.msra.mxu0 %v2109
        %2355 = vmatprep.subr.mxu0 %v2114
        %2356 = vmatpush1.msra.mxu0 %v2113
        %2357 = vmatprep.subr.mxu0 %v2118
        %2358 = vmatpush1.msra.mxu0 %v2117
        %2359 = vmatprep.subr.mxu0 %v2122
        %2360 = vmatpush1.msra.mxu0 %v2121
        %2361 = vmatprep.subr.mxu0 %v2126
        %2362 = vmatpush1.msra.mxu0 %v2125
        %2363 = vmatprep.subr.mxu0 %v2130
        %2364 = vmatpush1.msra.mxu0 %v2129
        %2365 = vmatprep.subr.mxu0 %v2134
        %2366 = vmatpush1.msra.mxu0 %v2133
        %2367 = vmatprep.subr.mxu0 %v2138
        %2368 = vmatpush1.msra.mxu0 %v2137
        %2369 = vmatprep.subr.mxu0 %v2142
        %2370 = vmatpush1.msra.mxu0 %v2141
        %2371 = vmatprep.subr.mxu0 %v2146
        %2372 = vmatpush1.msra.mxu0 %v2145
        %2373 = vmatprep.subr.mxu0 %v2150
        %2374 = vmatpush1.msra.mxu0 %v2149
        %2375 = vmatprep.subr.mxu0 %v2154
        %2376 = vmatpush1.msra.mxu0 %v2153
        %2377 = vmatprep.mubr.f32.mxu0 %v2286
        %2378 = vmatmul.mubr.f32.gmra.mrb[0].mxu0 %v2285
        %v2379 = vpop.f32.mrb[0].mxu0
        %v2380 = vadd.f32 0.0, %v2379
        %v2381 = vpop.f32.mrb[0].mxu0
        %v2382 = vadd.f32 0.0, %v2381
        %2383 = vmatprep.mubr.f32.mxu0 %v2290
        %2384 = vmatmul.mubr.f32.gmra.mrb[0].mxu0 %v2289
        %v2385 = vpop.f32.mrb[0].mxu0
        %v2386 = vadd.f32 0.0, %v2385
        %v2387 = vpop.f32.mrb[0].mxu0
        %v2388 = vadd.f32 0.0, %v2387
        %2389 = vmatprep.mubr.f32.mxu0 %v2294
        %2390 = vmatmul.mubr.f32.gmra.mrb[0].mxu0 %v2293
        %v2391 = vpop.f32.mrb[0].mxu0
        %v2392 = vadd.f32 0.0, %v2391
        %v2393 = vpop.f32.mrb[0].mxu0
        %v2394 = vadd.f32 0.0, %v2393
        %2395 = vmatprep.mubr.f32.mxu0 %v2298
        %2396 = vmatmul.mubr.f32.gmra.mrb[0].mxu0 %v2297
        %v2397 = vpop.f32.mrb[0].mxu0
        %v2398 = vadd.f32 0.0, %v2397
        %v2399 = vpop.f32.mrb[0].mxu0
        %v2400 = vadd.f32 0.0, %v2399
        %2401 = vmatprep.mubr.f32.mxu0 %v2302
        %2402 = vmatmul.mubr.f32.gmra.mrb[0].mxu0 %v2301
        %v2403 = vpop.f32.mrb[0].mxu0
        %v2404 = vadd.f32 0.0, %v2403
        %v2405 = vpop.f32.mrb[0].mxu0
        %v2406 = vadd.f32 0.0, %v2405
        %2407 = vmatprep.mubr.f32.mxu0 %v2306
        %2408 = vmatmul.mubr.f32.gmra.mrb[0].mxu0 %v2305
        %v2409 = vpop.f32.mrb[0].mxu0
        %v2410 = vadd.f32 0.0, %v2409
        %v2411 = vpop.f32.mrb[0].mxu0
        %v2412 = vadd.f32 0.0, %v2411
        %2413 = vmatprep.mubr.f32.mxu0 %v2310
        %2414 = vmatmul.mubr.f32.gmra.mrb[0].mxu0 %v2309
        %v2415 = vpop.f32.mrb[0].mxu0
        %v2416 = vadd.f32 0.0, %v2415
        %v2417 = vpop.f32.mrb[0].mxu0
        %v2418 = vadd.f32 0.0, %v2417
        %2419 = vdwg.mxu0
        %2420 = vmatprep.subr.mxu0 %v2158
        %2421 = vmatpush1.msra.mxu0 %v2157
        %2422 = vmatprep.subr.mxu0 %v2162
        %2423 = vmatpush1.msra.mxu0 %v2161
        %2424 = vmatprep.subr.mxu0 %v2166
        %2425 = vmatpush1.msra.mxu0 %v2165
        %2426 = vmatprep.subr.mxu0 %v2170
        %2427 = vmatpush1.msra.mxu0 %v2169
        %2428 = vmatprep.subr.mxu0 %v2174
        %2429 = vmatpush1.msra.mxu0 %v2173
        %2430 = vmatprep.subr.mxu0 %v2178
        %2431 = vmatpush1.msra.mxu0 %v2177
        %2432 = vmatprep.subr.mxu0 %v2182
        %2433 = vmatpush1.msra.mxu0 %v2181
        %2434 = vmatprep.subr.mxu0 %v2186
        %2435 = vmatpush1.msra.mxu0 %v2185
        %2436 = vmatprep.subr.mxu0 %v2190
        %2437 = vmatpush1.msra.mxu0 %v2189
        %2438 = vmatprep.subr.mxu0 %v2194
        %2439 = vmatpush1.msra.mxu0 %v2193
        %2440 = vmatprep.subr.mxu0 %v2198
        %2441 = vmatpush1.msra.mxu0 %v2197
        %2442 = vmatprep.subr.mxu0 %v2202
        %2443 = vmatpush1.msra.mxu0 %v2201
        %2444 = vmatprep.subr.mxu0 %v2206
        %2445 = vmatpush1.msra.mxu0 %v2205
        %2446 = vmatprep.subr.mxu0 %v2210
        %2447 = vmatpush1.msra.mxu0 %v2209
        %2448 = vmatprep.subr.mxu0 %v2214
        %2449 = vmatpush1.msra.mxu0 %v2213
        %2450 = vmatprep.subr.mxu0 %v2218
        %2451 = vmatpush1.msra.mxu0 %v2217
        %2452 = vmatprep.subr.mxu0 %v2222
        %2453 = vmatpush1.msra.mxu0 %v2221
        %2454 = vmatprep.subr.mxu0 %v2226
        %2455 = vmatpush1.msra.mxu0 %v2225
        %2456 = vmatprep.subr.mxu0 %v2230
        %2457 = vmatpush1.msra.mxu0 %v2229
        %2458 = vmatprep.subr.mxu0 %v2234
        %2459 = vmatpush1.msra.mxu0 %v2233
        %2460 = vmatprep.subr.mxu0 %v2238
        %2461 = vmatpush1.msra.mxu0 %v2237
        %2462 = vmatprep.subr.mxu0 %v2242
        %2463 = vmatpush1.msra.mxu0 %v2241
        %2464 = vmatprep.subr.mxu0 %v2246
        %2465 = vmatpush1.msra.mxu0 %v2245
        %2466 = vmatprep.subr.mxu0 %v2250
        %2467 = vmatpush1.msra.mxu0 %v2249
        %2468 = vmatprep.subr.mxu0 %v2254
        %2469 = vmatpush1.msra.mxu0 %v2253
        %2470 = vmatprep.subr.mxu0 %v2258
        %2471 = vmatpush1.msra.mxu0 %v2257
        %2472 = vmatprep.subr.mxu0 %v2262
        %2473 = vmatpush1.msra.mxu0 %v2261
        %2474 = vmatprep.subr.mxu0 %v2266
        %2475 = vmatpush1.msra.mxu0 %v2265
        %2476 = vmatprep.subr.mxu0 %v2270
        %2477 = vmatpush1.msra.mxu0 %v2269
        %2478 = vmatprep.subr.mxu0 %v2274
        %2479 = vmatpush1.msra.mxu0 %v2273
        %2480 = vmatprep.subr.mxu0 %v2278
        %2481 = vmatpush1.msra.mxu0 %v2277
        %2482 = vmatprep.subr.mxu0 %v2282
        %2483 = vmatpush1.msra.mxu0 %v2281
        %2484 = vmatprep.mubr.f32.mxu0 %v2288
        %2485 = vmatmul.mubr.f32.gmra.mrb[0].mxu0 %v2287
        %v2486 = vpop.f32.mrb[0].mxu0
        %v2487 = vadd.f32 %v2380, %v2486
        %v2488 = vpop.f32.mrb[0].mxu0
        %v2489 = vadd.f32 %v2382, %v2488
        %2490 = vmatprep.mubr.f32.mxu0 %v2292
        %2491 = vmatmul.mubr.f32.gmra.mrb[0].mxu0 %v2291
        %v2492 = vpop.f32.mrb[0].mxu0
        %v2493 = vadd.f32 %v2386, %v2492
        %v2494 = vpop.f32.mrb[0].mxu0
        %v2495 = vadd.f32 %v2388, %v2494
        %2496 = vmatprep.mubr.f32.mxu0 %v2296
        %2497 = vmatmul.mubr.f32.gmra.mrb[0].mxu0 %v2295
        %v2498 = vpop.f32.mrb[0].mxu0
        %v2499 = vadd.f32 %v2392, %v2498
        %v2500 = vpop.f32.mrb[0].mxu0
        %v2501 = vadd.f32 %v2394, %v2500
        %2502 = vmatprep.mubr.f32.mxu0 %v2300
        %2503 = vmatmul.mubr.f32.gmra.mrb[0].mxu0 %v2299
        %v2504 = vpop.f32.mrb[0].mxu0
        %v2505 = vadd.f32 %v2398, %v2504
        %v2506 = vpop.f32.mrb[0].mxu0
        %v2507 = vadd.f32 %v2400, %v2506
        %2508 = vmatprep.mubr.f32.mxu0 %v2304
        %2509 = vmatmul.mubr.f32.gmra.mrb[0].mxu0 %v2303
        %v2510 = vpop.f32.mrb[0].mxu0
        %v2511 = vadd.f32 %v2404, %v2510
        %v2512 = vpop.f32.mrb[0].mxu0
        %v2513 = vadd.f32 %v2406, %v2512
        %2514 = vmatprep.mubr.f32.mxu0 %v2308
        %2515 = vmatmul.mubr.f32.gmra.mrb[0].mxu0 %v2307
        %v2516 = vpop.f32.mrb[0].mxu0
        %v2517 = vadd.f32 %v2410, %v2516
        %v2518 = vpop.f32.mrb[0].mxu0
        %v2519 = vadd.f32 %v2412, %v2518
        %2520 = vmatprep.mubr.f32.mxu0 %v2312
        %2521 = vmatmul.mubr.f32.gmra.mrb[0].mxu0 %v2311
        %v2522 = vpop.f32.mrb[0].mxu0
        %v2523 = vadd.f32 %v2416, %v2522
        %v2524 = vpop.f32.mrb[0].mxu0
        %v2525 = vadd.f32 %v2418, %v2524
        %2526 = vdwg.mxu0
        %2527 = vmatprep.subr.mxu0 %v2032
        %2528 = vmatpush1.msra.mxu0 %v2031
        %2529 = vmatprep.subr.mxu0 %v2036
        %2530 = vmatpush1.msra.mxu0 %v2035
        %2531 = vmatprep.subr.mxu0 %v2040
        %2532 = vmatpush1.msra.mxu0 %v2039
        %2533 = vmatprep.subr.mxu0 %v2044
        %2534 = vmatpush1.msra.mxu0 %v2043
        %2535 = vmatprep.subr.mxu0 %v2048
        %2536 = vmatpush1.msra.mxu0 %v2047
        %2537 = vmatprep.subr.mxu0 %v2052
        %2538 = vmatpush1.msra.mxu0 %v2051
        %2539 = vmatprep.subr.mxu0 %v2056
        %2540 = vmatpush1.msra.mxu0 %v2055
        %2541 = vmatprep.subr.mxu0 %v2060
        %2542 = vmatpush1.msra.mxu0 %v2059
        %2543 = vmatprep.subr.mxu0 %v2064
        %2544 = vmatpush1.msra.mxu0 %v2063
        %2545 = vmatprep.subr.mxu0 %v2068
        %2546 = vmatpush1.msra.mxu0 %v2067
        %2547 = vmatprep.subr.mxu0 %v2072
        %2548 = vmatpush1.msra.mxu0 %v2071
        %2549 = vmatprep.subr.mxu0 %v2076
        %2550 = vmatpush1.msra.mxu0 %v2075
        %2551 = vmatprep.subr.mxu0 %v2080
        %2552 = vmatpush1.msra.mxu0 %v2079
        %2553 = vmatprep.subr.mxu0 %v2084
        %2554 = vmatpush1.msra.mxu0 %v2083
        %2555 = vmatprep.subr.mxu0 %v2088
        %2556 = vmatpush1.msra.mxu0 %v2087
        %2557 = vmatprep.subr.mxu0 %v2092
        %2558 = vmatpush1.msra.mxu0 %v2091
        %2559 = vmatprep.subr.mxu0 %v2096
        %2560 = vmatpush1.msra.mxu0 %v2095
        %2561 = vmatprep.subr.mxu0 %v2100
        %2562 = vmatpush1.msra.mxu0 %v2099
        %2563 = vmatprep.subr.mxu0 %v2104
        %2564 = vmatpush1.msra.mxu0 %v2103
        %2565 = vmatprep.subr.mxu0 %v2108
        %2566 = vmatpush1.msra.mxu0 %v2107
        %2567 = vmatprep.subr.mxu0 %v2112
        %2568 = vmatpush1.msra.mxu0 %v2111
        %2569 = vmatprep.subr.mxu0 %v2116
        %2570 = vmatpush1.msra.mxu0 %v2115
        %2571 = vmatprep.subr.mxu0 %v2120
        %2572 = vmatpush1.msra.mxu0 %v2119
        %2573 = vmatprep.subr.mxu0 %v2124
        %2574 = vmatpush1.msra.mxu0 %v2123
        %2575 = vmatprep.subr.mxu0 %v2128
        %2576 = vmatpush1.msra.mxu0 %v2127
        %2577 = vmatprep.subr.mxu0 %v2132
        %2578 = vmatpush1.msra.mxu0 %v2131
        %2579 = vmatprep.subr.mxu0 %v2136
        %2580 = vmatpush1.msra.mxu0 %v2135
        %2581 = vmatprep.subr.mxu0 %v2140
        %2582 = vmatpush1.msra.mxu0 %v2139
        %2583 = vmatprep.subr.mxu0 %v2144
        %2584 = vmatpush1.msra.mxu0 %v2143
        %2585 = vmatprep.subr.mxu0 %v2148
        %2586 = vmatpush1.msra.mxu0 %v2147
        %2587 = vmatprep.subr.mxu0 %v2152
        %2588 = vmatpush1.msra.mxu0 %v2151
        %2589 = vmatprep.subr.mxu0 %v2156
        %2590 = vmatpush1.msra.mxu0 %v2155
        %2591 = vmatprep.mubr.f32.mxu0 %v2286
        %2592 = vmatmul.mubr.f32.gmra.mrb[0].mxu0 %v2285
        %v2593 = vpop.f32.mrb[0].mxu0
        %v2594 = vadd.f32 0.0, %v2593
        %v2595 = vpop.f32.mrb[0].mxu0
        %v2596 = vadd.f32 0.0, %v2595
        %2597 = vmatprep.mubr.f32.mxu0 %v2290
        %2598 = vmatmul.mubr.f32.gmra.mrb[0].mxu0 %v2289
        %v2599 = vpop.f32.mrb[0].mxu0
        %v2600 = vadd.f32 0.0, %v2599
        %v2601 = vpop.f32.mrb[0].mxu0
        %v2602 = vadd.f32 0.0, %v2601
        %2603 = vmatprep.mubr.f32.mxu0 %v2294
        %2604 = vmatmul.mubr.f32.gmra.mrb[0].mxu0 %v2293
        %v2605 = vpop.f32.mrb[0].mxu0
        %v2606 = vadd.f32 0.0, %v2605
        %v2607 = vpop.f32.mrb[0].mxu0
        %v2608 = vadd.f32 0.0, %v2607
        %2609 = vmatprep.mubr.f32.mxu0 %v2298
        %2610 = vmatmul.mubr.f32.gmra.mrb[0].mxu0 %v2297
        %v2611 = vpop.f32.mrb[0].mxu0
        %v2612 = vadd.f32 0.0, %v2611
        %v2613 = vpop.f32.mrb[0].mxu0
        %v2614 = vadd.f32 0.0, %v2613
        %2615 = vmatprep.mubr.f32.mxu0 %v2302
        %2616 = vmatmul.mubr.f32.gmra.mrb[0].mxu0 %v2301
        %v2617 = vpop.f32.mrb[0].mxu0
        %v2618 = vadd.f32 0.0, %v2617
        %v2619 = vpop.f32.mrb[0].mxu0
        %v2620 = vadd.f32 0.0, %v2619
        %2621 = vmatprep.mubr.f32.mxu0 %v2306
        %2622 = vmatmul.mubr.f32.gmra.mrb[0].mxu0 %v2305
        %v2623 = vpop.f32.mrb[0].mxu0
        %v2624 = vadd.f32 0.0, %v2623
        %v2625 = vpop.f32.mrb[0].mxu0
        %v2626 = vadd.f32 0.0, %v2625
        %2627 = vmatprep.mubr.f32.mxu0 %v2310
        %2628 = vmatmul.mubr.f32.gmra.mrb[0].mxu0 %v2309
        %v2629 = vpop.f32.mrb[0].mxu0
        %v2630 = vadd.f32 0.0, %v2629
        %v2631 = vpop.f32.mrb[0].mxu0
        %v2632 = vadd.f32 0.0, %v2631
        %2633 = vdwg.mxu0
        %2634 = vmatprep.subr.mxu0 %v2160
        %2635 = vmatpush1.msra.mxu0 %v2159
        %2636 = vmatprep.subr.mxu0 %v2164
        %2637 = vmatpush1.msra.mxu0 %v2163
        %2638 = vmatprep.subr.mxu0 %v2168
        %2639 = vmatpush1.msra.mxu0 %v2167
        %2640 = vmatprep.subr.mxu0 %v2172
        %2641 = vmatpush1.msra.mxu0 %v2171
        %2642 = vmatprep.subr.mxu0 %v2176
        %2643 = vmatpush1.msra.mxu0 %v2175
        %2644 = vmatprep.subr.mxu0 %v2180
        %2645 = vmatpush1.msra.mxu0 %v2179
        %2646 = vmatprep.subr.mxu0 %v2184
        %2647 = vmatpush1.msra.mxu0 %v2183
        %2648 = vmatprep.subr.mxu0 %v2188
        %2649 = vmatpush1.msra.mxu0 %v2187
        %2650 = vmatprep.subr.mxu0 %v2192
        %2651 = vmatpush1.msra.mxu0 %v2191
        %2652 = vmatprep.subr.mxu0 %v2196
        %2653 = vmatpush1.msra.mxu0 %v2195
        %2654 = vmatprep.subr.mxu0 %v2200
        %2655 = vmatpush1.msra.mxu0 %v2199
        %2656 = vmatprep.subr.mxu0 %v2204
        %2657 = vmatpush1.msra.mxu0 %v2203
        %2658 = vmatprep.subr.mxu0 %v2208
        %2659 = vmatpush1.msra.mxu0 %v2207
        %2660 = vmatprep.subr.mxu0 %v2212
        %2661 = vmatpush1.msra.mxu0 %v2211
        %2662 = vmatprep.subr.mxu0 %v2216
        %2663 = vmatpush1.msra.mxu0 %v2215
        %2664 = vmatprep.subr.mxu0 %v2220
        %2665 = vmatpush1.msra.mxu0 %v2219
        %2666 = vmatprep.subr.mxu0 %v2224
        %2667 = vmatpush1.msra.mxu0 %v2223
        %2668 = vmatprep.subr.mxu0 %v2228
        %2669 = vmatpush1.msra.mxu0 %v2227
        %2670 = vmatprep.subr.mxu0 %v2232
        %2671 = vmatpush1.msra.mxu0 %v2231
        %2672 = vmatprep.subr.mxu0 %v2236
        %2673 = vmatpush1.msra.mxu0 %v2235
        %2674 = vmatprep.subr.mxu0 %v2240
        %2675 = vmatpush1.msra.mxu0 %v2239
        %2676 = vmatprep.subr.mxu0 %v2244
        %2677 = vmatpush1.msra.mxu0 %v2243
        %2678 = vmatprep.subr.mxu0 %v2248
        %2679 = vmatpush1.msra.mxu0 %v2247
        %2680 = vmatprep.subr.mxu0 %v2252
        %2681 = vmatpush1.msra.mxu0 %v2251
        %2682 = vmatprep.subr.mxu0 %v2256
        %2683 = vmatpush1.msra.mxu0 %v2255
        %2684 = vmatprep.subr.mxu0 %v2260
        %2685 = vmatpush1.msra.mxu0 %v2259
        %2686 = vmatprep.subr.mxu0 %v2264
        %2687 = vmatpush1.msra.mxu0 %v2263
        %2688 = vmatprep.subr.mxu0 %v2268
        %2689 = vmatpush1.msra.mxu0 %v2267
        %2690 = vmatprep.subr.mxu0 %v2272
        %2691 = vmatpush1.msra.mxu0 %v2271
        %2692 = vmatprep.subr.mxu0 %v2276
        %2693 = vmatpush1.msra.mxu0 %v2275
        %2694 = vmatprep.subr.mxu0 %v2280
        %2695 = vmatpush1.msra.mxu0 %v2279
        %2696 = vmatprep.subr.mxu0 %v2284
        %2697 = vmatpush1.msra.mxu0 %v2283
        %2698 = vmatprep.mubr.f32.mxu0 %v2288
        %2699 = vmatmul.mubr.f32.gmra.mrb[0].mxu0 %v2287
        %v2700 = vpop.f32.mrb[0].mxu0
        %v2701 = vadd.f32 %v2594, %v2700
        %v2702 = vpop.f32.mrb[0].mxu0
        %v2703 = vadd.f32 %v2596, %v2702
        %2704 = vmatprep.mubr.f32.mxu0 %v2292
        %2705 = vmatmul.mubr.f32.gmra.mrb[0].mxu0 %v2291
        %v2706 = vpop.f32.mrb[0].mxu0
        %v2707 = vadd.f32 %v2600, %v2706
        %v2708 = vpop.f32.mrb[0].mxu0
        %v2709 = vadd.f32 %v2602, %v2708
        %2710 = vmatprep.mubr.f32.mxu0 %v2296
        %2711 = vmatmul.mubr.f32.gmra.mrb[0].mxu0 %v2295
        %v2712 = vpop.f32.mrb[0].mxu0
        %v2713 = vadd.f32 %v2606, %v2712
        %v2714 = vpop.f32.mrb[0].mxu0
        %v2715 = vadd.f32 %v2608, %v2714
        %2716 = vmatprep.mubr.f32.mxu0 %v2300
        %2717 = vmatmul.mubr.f32.gmra.mrb[0].mxu0 %v2299
        %v2718 = vpop.f32.mrb[0].mxu0
        %v2719 = vadd.f32 %v2612, %v2718
        %v2720 = vpop.f32.mrb[0].mxu0
        %v2721 = vadd.f32 %v2614, %v2720
        %2722 = vmatprep.mubr.f32.mxu0 %v2304
        %2723 = vmatmul.mubr.f32.gmra.mrb[0].mxu0 %v2303
        %v2724 = vpop.f32.mrb[0].mxu0
        %v2725 = vadd.f32 %v2618, %v2724
        %v2726 = vpop.f32.mrb[0].mxu0
        %v2727 = vadd.f32 %v2620, %v2726
        %2728 = vmatprep.mubr.f32.mxu0 %v2308
        %2729 = vmatmul.mubr.f32.gmra.mrb[0].mxu0 %v2307
        %v2730 = vpop.f32.mrb[0].mxu0
        %v2731 = vadd.f32 %v2624, %v2730
        %v2732 = vpop.f32.mrb[0].mxu0
        %v2733 = vadd.f32 %v2626, %v2732
        %2734 = vmatprep.mubr.f32.mxu0 %v2312
        %2735 = vmatmul.mubr.f32.gmra.mrb[0].mxu0 %v2311
        %v2736 = vpop.f32.mrb[0].mxu0
        %v2737 = vadd.f32 %v2630, %v2736
        %v2738 = vpop.f32.mrb[0].mxu0
        %v2739 = vadd.f32 %v2632, %v2738
        %2740 = vdwg.mxu0
        %v2741 = vmul.f32 %v2511, %v2511
        %v2742 = vmul.f32 %v2513, %v2513
        %v2743 = vmul.f32 %v2725, %v2725
        %v2744 = vmul.f32 %v2727, %v2727
        %v2745 = vmul.f32 %v2517, %v2517
        %v2746 = vmul.f32 %v2519, %v2519
        %v2747 = vmul.f32 %v2731, %v2731
        %v2748 = vmul.f32 %v2733, %v2733
        %v2749 = vadd.f32 %v2741, %v2745
        %v2750 = vrot.slane %v2749, 4
        %v2751 = vadd.f32 %v2749, %v2750
        %v2752 = vrot.slane %v2751, 2
        %v2753 = vadd.f32 %v2751, %v2752
        %v2754 = vrot.slane %v2753, 1
        %v2755 = vadd.f32 %v2753, %v2754
        %v2756 = vadd.f32 %v2742, %v2746
        %v2757 = vrot.slane %v2756, 4
        %v2758 = vadd.f32 %v2756, %v2757
        %v2759 = vrot.slane %v2758, 2
        %v2760 = vadd.f32 %v2758, %v2759
        %v2761 = vrot.slane %v2760, 1
        %v2762 = vadd.f32 %v2760, %v2761
        %v2763 = vadd.f32 %v2743, %v2747
        %v2764 = vrot.slane %v2763, 4
        %v2765 = vadd.f32 %v2763, %v2764
        %v2766 = vrot.slane %v2765, 2
        %v2767 = vadd.f32 %v2765, %v2766
        %v2768 = vrot.slane %v2767, 1
        %v2769 = vadd.f32 %v2767, %v2768
        %v2770 = vadd.f32 %v2744, %v2748
        %v2771 = vrot.slane %v2770, 4
        %v2772 = vadd.f32 %v2770, %v2771
        %v2773 = vrot.slane %v2772, 2
        %v2774 = vadd.f32 %v2772, %v2773
        %v2775 = vrot.slane %v2774, 1
        %v2776 = vadd.f32 %v2774, %v2775
        %v2777 = vmul.f32 %v2755, 0.5
        %v2778 = vmul.f32 %v2762, 0.5
        %v2779 = vmul.f32 %v2769, 0.5
        %v2780 = vmul.f32 %v2776, 0.5
        %v2781 = vadd.f32 %v2777, %v2523
        %v2782 = vadd.f32 %v2778, %v2525
        %v2783 = vadd.f32 %v2779, %v2737
        %v2784 = vadd.f32 %v2780, %v2739
        %v2785 = vld [vmem:[%s3] sm:$0xff]
        %v2786 = vld [vmem:[%s3 + $0x8] sm:$0xff]
        %v2787 = vld [vmem:[%s3 + $0x10] sm:$0xff]
        %v2788 = vld [vmem:[%s3 + $0x18] sm:$0xff]
        %2790 = vset.pattern.permute.xlu0 0
        %2791 = vperm.xlu0 %2790, %v2785
        %v2792 = vpop.permute.xlu0 %2791
        %2795 = vset.pattern.permute.xlu0 0
        %2796 = vperm.xlu0 %2795, %v2786
        %v2797 = vpop.permute.xlu0 %2796
        %2800 = vset.pattern.permute.xlu0 0
        %2801 = vperm.xlu0 %2800, %v2787
        %v2802 = vpop.permute.xlu0 %2801
        %2805 = vset.pattern.permute.xlu0 0
        %2806 = vperm.xlu0 %2805, %v2788
        %v2807 = vpop.permute.xlu0 %2806
        %v2809 = vadd.f32 %v2487, %v2792
        %v2810 = vadd.f32 %v2489, %v2792
        %v2811 = vadd.f32 %v2701, %v2792
        %v2812 = vadd.f32 %v2703, %v2792
        %v2813 = vadd.f32 %v2493, %v2797
        %v2814 = vadd.f32 %v2495, %v2797
        %v2815 = vadd.f32 %v2707, %v2797
        %v2816 = vadd.f32 %v2709, %v2797
        %v2817 = vadd.f32 %v2499, %v2802
        %v2818 = vadd.f32 %v2501, %v2802
        %v2819 = vadd.f32 %v2713, %v2802
        %v2820 = vadd.f32 %v2715, %v2802
        %v2821 = vadd.f32 %v2505, %v2807
        %v2822 = vadd.f32 %v2507, %v2807
        %v2823 = vadd.f32 %v2719, %v2807
        %v2824 = vadd.f32 %v2721, %v2807
        %v2825 = vmax.f32 %v2809, 0.0
        %v2826 = vmax.f32 %v2810, 0.0
        %v2827 = vmax.f32 %v2811, 0.0
        %v2828 = vmax.f32 %v2812, 0.0
        %v2829 = vmax.f32 %v2813, 0.0
        %v2830 = vmax.f32 %v2814, 0.0
        %v2831 = vmax.f32 %v2815, 0.0
        %v2832 = vmax.f32 %v2816, 0.0
        %v2833 = vmax.f32 %v2817, 0.0
        %v2834 = vmax.f32 %v2818, 0.0
        %v2835 = vmax.f32 %v2819, 0.0
        %v2836 = vmax.f32 %v2820, 0.0
        %v2837 = vmax.f32 %v2821, 0.0
        %v2838 = vmax.f32 %v2822, 0.0
        %v2839 = vmax.f32 %v2823, 0.0
        %v2840 = vmax.f32 %v2824, 0.0
        %v2841 = vld [vmem:[%s4] sm:$0xff]
        %v2842 = vld [vmem:[%s4 + $0x8] sm:$0xff]
        %v2843 = vld [vmem:[%s4 + $0x10] sm:$0xff]
        %v2844 = vld [vmem:[%s4 + $0x18] sm:$0xff]
        %v2845 = vld [vmem:[%s5] sm:$0xff]
        %v2846 = vld [vmem:[%s5 + $0x8] sm:$0xff]
        %v2847 = vld [vmem:[%s5 + $0x10] sm:$0xff]
        %v2848 = vld [vmem:[%s5 + $0x18] sm:$0xff]
        %2850 = vset.pattern.permute.xlu0 0
        %2851 = vperm.xlu0 %2850, %v2845
        %v2852 = vpop.permute.xlu0 %2851
        %2855 = vset.pattern.permute.xlu0 0
        %2856 = vperm.xlu0 %2855, %v2846
        %v2857 = vpop.permute.xlu0 %2856
        %2860 = vset.pattern.permute.xlu0 0
        %2861 = vperm.xlu0 %2860, %v2847
        %v2862 = vpop.permute.xlu0 %2861
        %2865 = vset.pattern.permute.xlu0 0
        %2866 = vperm.xlu0 %2865, %v2848
        %v2867 = vpop.permute.xlu0 %2866
        %vm2869 = vcmask 261120
        %v2871 = vsel %vm2869, %v2841, 0
        %v2874 = vsel %vm2869, %v2842, 0
        %v2877 = vsel %vm2869, %v2843, 0
        %v2880 = vsel %vm2869, %v2844, 0
        %2882 = vmatprep.subr.mxu0 %v2826
        %2883 = vmatpush1.msra.mxu0 %v2825
        %2884 = vmatprep.subr.mxu0 %v2830
        %2885 = vmatpush1.msra.mxu0 %v2829
        %2886 = vmatprep.subr.mxu0 %v2834
        %2887 = vmatpush1.msra.mxu0 %v2833
        %2888 = vmatprep.subr.mxu0 %v2838
        %2889 = vmatpush1.msra.mxu0 %v2837
        %2890 = vmatprep.subr.mxu0 0.0
        %2891 = vmatpush1.msra.mxu0 0.0
        %2892 = vmatprep.subr.mxu0 0.0
        %2893 = vmatpush1.msra.mxu0 0.0
        %2894 = vmatprep.subr.mxu0 0.0
        %2895 = vmatpush1.msra.mxu0 0.0
        %2896 = vmatprep.subr.mxu0 0.0
        %2897 = vmatpush1.msra.mxu0 0.0
        %2898 = vmatprep.subr.mxu0 0.0
        %2899 = vmatpush1.msra.mxu0 0.0
        %2900 = vmatprep.subr.mxu0 0.0
        %2901 = vmatpush1.msra.mxu0 0.0
        %2902 = vmatprep.subr.mxu0 0.0
        %2903 = vmatpush1.msra.mxu0 0.0
        %2904 = vmatprep.subr.mxu0 0.0
        %2905 = vmatpush1.msra.mxu0 0.0
        %2906 = vmatprep.subr.mxu0 0.0
        %2907 = vmatpush1.msra.mxu0 0.0
        %2908 = vmatprep.subr.mxu0 0.0
        %2909 = vmatpush1.msra.mxu0 0.0
        %2910 = vmatprep.subr.mxu0 0.0
        %2911 = vmatpush1.msra.mxu0 0.0
        %2912 = vmatprep.subr.mxu0 0.0
        %2913 = vmatpush1.msra.mxu0 0.0
        %2914 = vmatprep.subr.mxu0 0.0
        %2915 = vmatpush1.msra.mxu0 0.0
        %2916 = vmatprep.subr.mxu0 0.0
        %2917 = vmatpush1.msra.mxu0 0.0
        %2918 = vmatprep.subr.mxu0 0.0
        %2919 = vmatpush1.msra.mxu0 0.0
        %2920 = vmatprep.subr.mxu0 0.0
        %2921 = vmatpush1.msra.mxu0 0.0
        %2922 = vmatprep.subr.mxu0 0.0
        %2923 = vmatpush1.msra.mxu0 0.0
        %2924 = vmatprep.subr.mxu0 0.0
        %2925 = vmatpush1.msra.mxu0 0.0
        %2926 = vmatprep.subr.mxu0 0.0
        %2927 = vmatpush1.msra.mxu0 0.0
        %2928 = vmatprep.subr.mxu0 0.0
        %2929 = vmatpush1.msra.mxu0 0.0
        %2930 = vmatprep.subr.mxu0 0.0
        %2931 = vmatpush1.msra.mxu0 0.0
        %2932 = vmatprep.subr.mxu0 0.0
        %2933 = vmatpush1.msra.mxu0 0.0
        %2934 = vmatprep.subr.mxu0 0.0
        %2935 = vmatpush1.msra.mxu0 0.0
        %2936 = vmatprep.subr.mxu0 0.0
        %2937 = vmatpush1.msra.mxu0 0.0
        %2938 = vmatprep.subr.mxu0 0.0
        %2939 = vmatpush1.msra.mxu0 0.0
        %2940 = vmatprep.subr.mxu0 0.0
        %2941 = vmatpush1.msra.mxu0 0.0
        %2942 = vmatprep.subr.mxu0 0.0
        %2943 = vmatpush1.msra.mxu0 0.0
        %2944 = vmatprep.subr.mxu0 0.0
        %2945 = vmatpush1.msra.mxu0 0.0
        %2946 = vmatprep.mubr.f32.mxu0 0.0
        %2947 = vmatmul.mubr.f32.gmra.mrb[0].mxu0 %v2871
        %v2948 = vpop.f32.mrb[0].mxu0
        %v2949 = vadd.f32 %v2852, %v2948
        %v2950 = vpop.f32.mrb[0].mxu0
        %v2951 = vadd.f32 %v2852, %v2950
        %2952 = vmatprep.mubr.f32.mxu0 0.0
        %2953 = vmatmul.mubr.f32.gmra.mrb[0].mxu0 %v2874
        %v2954 = vpop.f32.mrb[0].mxu0
        %v2955 = vadd.f32 %v2857, %v2954
        %v2956 = vpop.f32.mrb[0].mxu0
        %v2957 = vadd.f32 %v2857, %v2956
        %2958 = vmatprep.mubr.f32.mxu0 0.0
        %2959 = vmatmul.mubr.f32.gmra.mrb[0].mxu0 %v2877
        %v2960 = vpop.f32.mrb[0].mxu0
        %v2961 = vadd.f32 %v2862, %v2960
        %v2962 = vpop.f32.mrb[0].mxu0
        %v2963 = vadd.f32 %v2862, %v2962
        %2964 = vmatprep.mubr.f32.mxu0 0.0
        %2965 = vmatmul.mubr.f32.gmra.mrb[0].mxu0 %v2880
        %v2966 = vpop.f32.mrb[0].mxu0
        %v2967 = vadd.f32 %v2867, %v2966
        %v2968 = vpop.f32.mrb[0].mxu0
        %v2969 = vadd.f32 %v2867, %v2968
        %2970 = vdwg.mxu0
        %2971 = vmatprep.subr.mxu0 %v2828
        %2972 = vmatpush1.msra.mxu0 %v2827
        %2973 = vmatprep.subr.mxu0 %v2832
        %2974 = vmatpush1.msra.mxu0 %v2831
        %2975 = vmatprep.subr.mxu0 %v2836
        %2976 = vmatpush1.msra.mxu0 %v2835
        %2977 = vmatprep.subr.mxu0 %v2840
        %2978 = vmatpush1.msra.mxu0 %v2839
        %2979 = vmatprep.subr.mxu0 0.0
        %2980 = vmatpush1.msra.mxu0 0.0
        %2981 = vmatprep.subr.mxu0 0.0
        %2982 = vmatpush1.msra.mxu0 0.0
        %2983 = vmatprep.subr.mxu0 0.0
        %2984 = vmatpush1.msra.mxu0 0.0
        %2985 = vmatprep.subr.mxu0 0.0
        %2986 = vmatpush1.msra.mxu0 0.0
        %2987 = vmatprep.subr.mxu0 0.0
        %2988 = vmatpush1.msra.mxu0 0.0
        %2989 = vmatprep.subr.mxu0 0.0
        %2990 = vmatpush1.msra.mxu0 0.0
        %2991 = vmatprep.subr.mxu0 0.0
        %2992 = vmatpush1.msra.mxu0 0.0
        %2993 = vmatprep.subr.mxu0 0.0
        %2994 = vmatpush1.msra.mxu0 0.0
        %2995 = vmatprep.subr.mxu0 0.0
        %2996 = vmatpush1.msra.mxu0 0.0
        %2997 = vmatprep.subr.mxu0 0.0
        %2998 = vmatpush1.msra.mxu0 0.0
        %2999 = vmatprep.subr.mxu0 0.0
        %3000 = vmatpush1.msra.mxu0 0.0
        %3001 = vmatprep.subr.mxu0 0.0
        %3002 = vmatpush1.msra.mxu0 0.0
        %3003 = vmatprep.subr.mxu0 0.0
        %3004 = vmatpush1.msra.mxu0 0.0
        %3005 = vmatprep.subr.mxu0 0.0
        %3006 = vmatpush1.msra.mxu0 0.0
        %3007 = vmatprep.subr.mxu0 0.0
        %3008 = vmatpush1.msra.mxu0 0.0
        %3009 = vmatprep.subr.mxu0 0.0
        %3010 = vmatpush1.msra.mxu0 0.0
        %3011 = vmatprep.subr.mxu0 0.0
        %3012 = vmatpush1.msra.mxu0 0.0
        %3013 = vmatprep.subr.mxu0 0.0
        %3014 = vmatpush1.msra.mxu0 0.0
        %3015 = vmatprep.subr.mxu0 0.0
        %3016 = vmatpush1.msra.mxu0 0.0
        %3017 = vmatprep.subr.mxu0 0.0
        %3018 = vmatpush1.msra.mxu0 0.0
        %3019 = vmatprep.subr.mxu0 0.0
        %3020 = vmatpush1.msra.mxu0 0.0
        %3021 = vmatprep.subr.mxu0 0.0
        %3022 = vmatpush1.msra.mxu0 0.0
        %3023 = vmatprep.subr.mxu0 0.0
        %3024 = vmatpush1.msra.mxu0 0.0
        %3025 = vmatprep.subr.mxu0 0.0
        %3026 = vmatpush1.msra.mxu0 0.0
        %3027 = vmatprep.subr.mxu0 0.0
        %3028 = vmatpush1.msra.mxu0 0.0
        %3029 = vmatprep.subr.mxu0 0.0
        %3030 = vmatpush1.msra.mxu0 0.0
        %3031 = vmatprep.subr.mxu0 0.0
        %3032 = vmatpush1.msra.mxu0 0.0
        %3033 = vmatprep.subr.mxu0 0.0
        %3034 = vmatpush1.msra.mxu0 0.0
        %3035 = vmatprep.mubr.f32.mxu0 0.0
        %3036 = vmatmul.mubr.f32.gmra.mrb[0].mxu0 %v2871
        %v3037 = vpop.f32.mrb[0].mxu0
        %v3038 = vadd.f32 %v2852, %v3037
        %v3039 = vpop.f32.mrb[0].mxu0
        %v3040 = vadd.f32 %v2852, %v3039
        %3041 = vmatprep.mubr.f32.mxu0 0.0
        %3042 = vmatmul.mubr.f32.gmra.mrb[0].mxu0 %v2874
        %v3043 = vpop.f32.mrb[0].mxu0
        %v3044 = vadd.f32 %v2857, %v3043
        %v3045 = vpop.f32.mrb[0].mxu0
        %v3046 = vadd.f32 %v2857, %v3045
        %3047 = vmatprep.mubr.f32.mxu0 0.0
        %3048 = vmatmul.mubr.f32.gmra.mrb[0].mxu0 %v2877
        %v3049 = vpop.f32.mrb[0].mxu0
        %v3050 = vadd.f32 %v2862, %v3049
        %v3051 = vpop.f32.mrb[0].mxu0
        %v3052 = vadd.f32 %v2862, %v3051
        %3053 = vmatprep.mubr.f32.mxu0 0.0
        %3054 = vmatmul.mubr.f32.gmra.mrb[0].mxu0 %v2880
        %v3055 = vpop.f32.mrb[0].mxu0
        %v3056 = vadd.f32 %v2867, %v3055
        %v3057 = vpop.f32.mrb[0].mxu0
        %v3058 = vadd.f32 %v2867, %v3057
        %3059 = vdwg.mxu0
        %v3060 = vmax.f32 %v2949, 0.0
        %v3061 = vmax.f32 %v2951, 0.0
        %v3062 = vmax.f32 %v3038, 0.0
        %v3063 = vmax.f32 %v3040, 0.0
        %v3064 = vmax.f32 %v2955, 0.0
        %v3065 = vmax.f32 %v2957, 0.0
        %v3066 = vmax.f32 %v3044, 0.0
        %v3067 = vmax.f32 %v3046, 0.0
        %v3068 = vmax.f32 %v2961, 0.0
        %v3069 = vmax.f32 %v2963, 0.0
        %v3070 = vmax.f32 %v3050, 0.0
        %v3071 = vmax.f32 %v3052, 0.0
        %v3072 = vmax.f32 %v2967, 0.0
        %v3073 = vmax.f32 %v2969, 0.0
        %v3074 = vmax.f32 %v3056, 0.0
        %v3075 = vmax.f32 %v3058, 0.0
        %v3076 = vld [vmem:[%s6] sm:$0xff]
        %v3077 = vld [vmem:[%s6 + $0x8] sm:$0xff]
        %v3078 = vld [vmem:[%s6 + $0x10] sm:$0xff]
        %v3079 = vld [vmem:[%s6 + $0x18] sm:$0xff]
        %3081 = vset.pattern.permute.xlu0 0
        %3082 = vperm.xlu0 %3081, %v3076
        %v3083 = vpop.permute.xlu0 %3082
        %3086 = vset.pattern.permute.xlu0 0
        %3087 = vperm.xlu0 %3086, %v3077
        %v3088 = vpop.permute.xlu0 %3087
        %3091 = vset.pattern.permute.xlu0 0
        %3092 = vperm.xlu0 %3091, %v3078
        %v3093 = vpop.permute.xlu0 %3092
        %3096 = vset.pattern.permute.xlu0 0
        %3097 = vperm.xlu0 %3096, %v3079
        %v3098 = vpop.permute.xlu0 %3097
        %v3100 = vmul.f32 %v3060, %v3083
        %v3101 = vmul.f32 %v3061, %v3083
        %v3102 = vmul.f32 %v3062, %v3083
        %v3103 = vmul.f32 %v3063, %v3083
        %v3104 = vmul.f32 %v3064, %v3088
        %v3105 = vmul.f32 %v3065, %v3088
        %v3106 = vmul.f32 %v3066, %v3088
        %v3107 = vmul.f32 %v3067, %v3088
        %v3108 = vmul.f32 %v3068, %v3093
        %v3109 = vmul.f32 %v3069, %v3093
        %v3110 = vmul.f32 %v3070, %v3093
        %v3111 = vmul.f32 %v3071, %v3093
        %v3112 = vmul.f32 %v3072, %v3098
        %v3113 = vmul.f32 %v3073, %v3098
        %v3114 = vmul.f32 %v3074, %v3098
        %v3115 = vmul.f32 %v3075, %v3098
        %v3116 = vadd.f32 %v3100, %v3104
        %v3117 = vadd.f32 %v3116, %v3108
        %v3118 = vadd.f32 %v3117, %v3112
        %v3119 = vrot.slane %v3118, 4
        %v3120 = vadd.f32 %v3118, %v3119
        %v3121 = vrot.slane %v3120, 2
        %v3122 = vadd.f32 %v3120, %v3121
        %v3123 = vrot.slane %v3122, 1
        %v3124 = vadd.f32 %v3122, %v3123
        %v3125 = vadd.f32 %v3101, %v3105
        %v3126 = vadd.f32 %v3125, %v3109
        %v3127 = vadd.f32 %v3126, %v3113
        %v3128 = vrot.slane %v3127, 4
        %v3129 = vadd.f32 %v3127, %v3128
        %v3130 = vrot.slane %v3129, 2
        %v3131 = vadd.f32 %v3129, %v3130
        %v3132 = vrot.slane %v3131, 1
        %v3133 = vadd.f32 %v3131, %v3132
        %v3134 = vadd.f32 %v3102, %v3106
        %v3135 = vadd.f32 %v3134, %v3110
        %v3136 = vadd.f32 %v3135, %v3114
        %v3137 = vrot.slane %v3136, 4
        %v3138 = vadd.f32 %v3136, %v3137
        %v3139 = vrot.slane %v3138, 2
        %v3140 = vadd.f32 %v3138, %v3139
        %v3141 = vrot.slane %v3140, 1
        %v3142 = vadd.f32 %v3140, %v3141
        %v3143 = vadd.f32 %v3103, %v3107
        %v3144 = vadd.f32 %v3143, %v3111
        %v3145 = vadd.f32 %v3144, %v3115
        %v3146 = vrot.slane %v3145, 4
        %v3147 = vadd.f32 %v3145, %v3146
        %v3148 = vrot.slane %v3147, 2
        %v3149 = vadd.f32 %v3147, %v3148
        %v3150 = vrot.slane %v3149, 1
        %v3151 = vadd.f32 %v3149, %v3150
        %v3152 = vadd.f32 %v2781, %v3124
        %v3153 = vadd.f32 %v2782, %v3133
        %v3154 = vadd.f32 %v2783, %v3142
        %v3155 = vadd.f32 %v2784, %v3151
        %s3156 = sld [smem:[#allocation2]]
        %v3157 = vstv %s3156
        %v3158 = vadd.f32 %v3152, %v3157
        %v3159 = vadd.f32 %v3153, %v3157
        %v3160 = vadd.f32 %v3154, %v3157
        %v3161 = vadd.f32 %v3155, %v3157
        %v3166 = vcombine.low %v3158, %v3159
        %v3167 = vcombine.low %v3160, %v3161
        %v3169 = vunpack.c.l.s4 1966171168
        %v3170 = vunpack.c.0.s8 %v3169
        %v3171 = vlaneseq
        %v3172 = vshrl.u32 %v3171, 7
        %v3173 = vsub.s32 %v3170, %v3172
        %v3174 = vrot.slane %v3166, %v3173
        %v3176 = vunpack.c.l.s4 1966171168
        %v3177 = vunpack.c.0.s8 %v3176
        %v3178 = vlaneseq
        %v3179 = vshrl.u32 %v3178, 7
        %v3180 = vsub.s32 %v3177, %v3179
        %v3181 = vrot.slane %v3167, %v3180
        %v3182 = vcombine.low %v3174, %v3181
        %v3184 = vunpack.c.l.s4 1966171168
        %v3185 = vunpack.c.0.s8 %v3184
        %v3186 = vlaneseq
        %v3187 = vshrl.u32 %v3186, 7
        %v3188 = vsub.s32 %v3185, %v3187
        %v3189 = vrot.slane %v3182, %v3188
        %v3191 = vlaneseq
        %vm3192 = vcmp.ge.s32.totalorder %v3191, 0
        %vm3193 = vcmp.lt.s32.totalorder %v3191, 512
        %vm3194 = vmand %vm3192, %vm3193
        %3195 = vst.msk [vmem:[%s338] sm:$0xf] %vm3194, %v3189
        %s3196 = sand.u32 %s204, 1
        %s3197 = scalar_lea.sflag [#allocation5], %s3196
        %s3198 = sand.u32 %s204, 1
        %s3199 = smul.addr %s3198, 4
        %s3200 = scalar_lea.vmem [#allocation4], %s3199
        // Predicated region
        $region76: #{deepfm_forward.1} parent=70 // pred_check
          %p3201 = pneg %p214
        $region77: #{deepfm_forward.1} parent=70 // pred_check_branch
          %3203 = sbr.rel (%p3201) target = $region79
        $region78: #{deepfm_forward.1} parent=70 // pred_region
          %s3204 = smul.u32 4, %s23
          %s3206 = ssub.s32 64, 64
          %3207 = vsyncadd %s3197, %s3206
          %s3208 = smul.addr %s3204, 16
          %s3209 = scalar_lea.hbm %s8, %s3208
          %s3211 = sshll.u32 %s3200, 4
          %s3212 = int_to_ptr.vmem [resolvable:$true] %s3211
          %3214 = dma.vmem_to_hbm [thread:$0]  %s3212, 64, %s3209, %s3197
        $region79: #{deepfm_forward.1} parent=70 // pred_fallthru
          _
      $region71: #{deepfm_forward.1} parent=5 // pred_fallthru
        _
      %p3215 = scmp.le.s32.totalorder 2, %s18
      // Predicated region
      $region80: #{deepfm_forward.1} parent=5 // pred_check
        %p3216 = pneg %p3215
      $region81: #{deepfm_forward.1} parent=5 // pred_check_branch
        %3218 = sbr.rel (%p3216) target = $region83
      $region82: #{deepfm_forward.1} parent=5 // pred_region
        %s3219 = ssub.s32 %s18, 2
        // Predicated region
        $region84: #{deepfm_forward.1} parent=82 // pred_check
          %p3220 = pneg %p220
        $region85: #{deepfm_forward.1} parent=82 // pred_check_branch
          %3222 = sbr.rel (%p3220) target = $region87
        $region86: #{deepfm_forward.1} parent=82 // pred_region
          %s3223 = sand.u32 %s205, 1
          %s3224 = scalar_lea.sflag [#allocation5], %s3223
          %s3225 = sand.u32 %s205, 1
          %s3226 = smul.addr %s3225, 4
          %s3227 = scalar_lea.vmem [#allocation4], %s3226
          %3228 = dma.done %s3224, 64
        $region87: #{deepfm_forward.1} parent=82 // pred_fallthru
          _
      $region83: #{deepfm_forward.1} parent=5 // pred_fallthru
        _
    $region6: #{deepfm_forward.1} parent=1 // loop_footer
      %s22 = sadd.s32 1, %s18
    $region7: #{deepfm_forward.1} parent=1 // loop_footer_branch
      %17 = sbr.rel target = $region3
    $region8: #{deepfm_forward.1} parent=1 // loop_exit
      _
    %3229 = vsyncpa [#allocation5], 1
    %s3230 = scalar_lea.sflag [#allocation5], 1
    %3231 = vsyncpa %s3230, 1

</llo_original>
